<compile_context>
chip_gen: v7x
topology: tpu7x:2x2x1
jax: 0.10.0
libtpu: 0.0.40
codegen_flags: <defaults>
</compile_context>

<pallas_src>
import functools
import math

import jax
import jax.numpy as jnp
from jax.experimental import pallas as pl
from jax.experimental.pallas import tpu as pltpu

EPS = 1e-6          # LayerNormalization eps (assumed; class body not given)
NEG_INF = -1e9
VMEM_LIMIT = 32 * 1024 * 1024   # explicit scoped-VMEM cap, safe on v5e/v6e/v7x


def _pick_tile(dim: int, pref: int) -> int:
    """Tile = pref if it divides dim, else the full dim (full dims always satisfy
    the (8,128) BlockSpec rule)."""
    if dim <= pref:
        return dim
    return pref if dim % pref == 0 else dim


def _layernorm_f32(x, g, b):
    mean = jnp.mean(x, axis=-1, keepdims=True)
    var = jnp.mean(jnp.square(x - mean), axis=-1, keepdims=True)
    return (x - mean) * jax.lax.rsqrt(var + EPS) * g + b


# ----------------------------- Pallas kernels ------------------------------ #

def _ln_linear_kernel(x_ref, g_ref, b_ref, w_ref, bias_ref, o_ref):
    # LayerNorm (f32) fused into the matmul that consumes it (bf16 MXU, f32 acc).
    xn = _layernorm_f32(x_ref[...].astype(jnp.float32), g_ref[...], b_ref[...])
    y = jnp.dot(xn.astype(jnp.bfloat16), w_ref[...],
                preferred_element_type=jnp.float32) + bias_ref[...]
    o_ref[...] = y.astype(o_ref.dtype)


def _linear_kernel(x_ref, w_ref, bias_ref, o_ref):
    y = jnp.dot(x_ref[...].astype(jnp.bfloat16), w_ref[...],
                preferred_element_type=jnp.float32) + bias_ref[...]
    o_ref[...] = y.astype(o_ref.dtype)


def _linear_add_kernel(x_ref, w_ref, bias_ref, r_ref, o_ref, acc_ref):
    # Tiled matmul with K-reduction grid axis + VMEM f32 accumulator; residual add
    # fused at finalize, output aliased onto the residual buffer.
    @pl.when(pl.program_id(2) == 0)
    def _():
        acc_ref[...] = jnp.zeros_like(acc_ref)

    acc_ref[...] += jnp.dot(x_ref[...].astype(jnp.bfloat16), w_ref[...],
                            preferred_element_type=jnp.float32)

    @pl.when(pl.program_id(2) == pl.num_programs(2) - 1)
    def _():
        o_ref[...] = (acc_ref[...] + bias_ref[...]
                      + r_ref[...].astype(jnp.float32)).astype(o_ref.dtype)


def _ffn_kernel(x_ref, g_ref, b_ref, w1_ref, b1_ref, w2_ref, b2_ref,
                o_ref, xn_ref, acc_ref):
    # Fully fused LN3 + W1 -> ReLU -> W2 + residual.  Grid axis 1 tiles d_ff and is
    # the reduction axis of the second matmul (accumulated in VMEM f32 scratch).
    @pl.when(pl.program_id(1) == 0)
    def _():
        xn = _layernorm_f32(x_ref[...].astype(jnp.float32), g_ref[...], b_ref[...])
        xn_ref[...] = xn.astype(jnp.bfloat16)
        acc_ref[...] = jnp.zeros_like(acc_ref)

    h = jnp.dot(xn_ref[...], w1_ref[...], preferred_element_type=jnp.float32) + b1_ref[...]
    h = jnp.maximum(h, 0.0).astype(jnp.bfloat16)
    acc_ref[...] += jnp.dot(h, w2_ref[...], preferred_element_type=jnp.float32)

    @pl.when(pl.program_id(1) == pl.num_programs(1) - 1)
    def _():
        o_ref[...] = (acc_ref[...] + b2_ref[...]
                      + x_ref[...].astype(jnp.float32)).astype(o_ref.dtype)


def _layernorm_kernel(x_ref, g_ref, b_ref, o_ref):
    o_ref[...] = _layernorm_f32(x_ref[...].astype(jnp.float32),
                                g_ref[...], b_ref[...]).astype(o_ref.dtype)


def _attn_core(q, k, v, bias, o_ref, num_heads):
    # q: (Sq, D) bf16, k/v: (Sk, D) bf16, bias: (Sq, Sk) f32 additive (0 / -1e9).
    Sq, D = q.shape
    Dh = D // num_heads
    scale = 1.0 / math.sqrt(Dh)
    q = (q.astype(jnp.float32) * scale).astype(jnp.bfloat16)   # fold 1/sqrt(dk) into q
    for h in range(num_heads):                                  # static unrolled head loop
        sl = slice(h * Dh, (h + 1) * Dh)
        s = jax.lax.dot_general(q[:, sl], k[:, sl], (((1,), (1,)), ((), ())),
                                preferred_element_type=jnp.float32)      # (Sq, Sk)
        s = s + bias
        s = s - jnp.max(s, axis=-1, keepdims=True)
        p = jnp.exp(s)
        inv = pl.reciprocal(jnp.sum(p, axis=-1, keepdims=True), approx=True)
        p = (p * inv).astype(jnp.bfloat16)
        ctx = jnp.dot(p, v[:, sl], preferred_element_type=jnp.float32)   # (Sq, Dh)
        o_ref[:, sl] = ctx.astype(o_ref.dtype)


def _self_attn_kernel(qkv_ref, bias_ref, o_ref, *, num_heads):
    qkv = qkv_ref[...]                      # (Sq, 3D) bf16 — single fused QKV slab
    D = qkv.shape[-1] // 3
    _attn_core(qkv[:, :D], qkv[:, D:2 * D], qkv[:, 2 * D:], bias_ref[...], o_ref, num_heads)


def _cross_attn_kernel(q_ref, kv_ref, bias_ref, o_ref, *, num_heads):
    kv = kv_ref[...]                        # (Sk, 2D) bf16
    D = q_ref.shape[-1]
    _attn_core(q_ref[...], kv[:, :D], kv[:, D:], bias_ref[...], o_ref, num_heads)


# ----------------------------- Pallas wrappers ------------------------------ #

def pallas_ln_linear(x2d, gamma, beta, w, b):
    M, D = x2d.shape
    N = w.shape[1]
    tm, tn = _pick_tile(M, 256), _pick_tile(N, 256)
    return pl.pallas_call(
        _ln_linear_kernel,
        out_shape=jax.ShapeDtypeStruct((M, N), jnp.bfloat16),
        grid=(M // tm, N // tn),
        in_specs=[
            pl.BlockSpec((tm, D), lambda i, j: (i, 0)),
            pl.BlockSpec((1, D), lambda i, j: (0, 0)),
            pl.BlockSpec((1, D), lambda i, j: (0, 0)),
            pl.BlockSpec((D, tn), lambda i, j: (0, j)),
            pl.BlockSpec((1, tn), lambda i, j: (0, j)),
        ],
        out_specs=pl.BlockSpec((tm, tn), lambda i, j: (i, j)),
        compiler_params=pltpu.CompilerParams(
            dimension_semantics=("parallel", "parallel"),
            vmem_limit_bytes=VMEM_LIMIT),
    )(x2d, gamma.reshape(1, D), beta.reshape(1, D), w, b.reshape(1, N))


def pallas_linear(x2d, w, b):
    M, D = x2d.shape
    N = w.shape[1]
    tm, tn = _pick_tile(M, 256), _pick_tile(N, 256)
    return pl.pallas_call(
        _linear_kernel,
        out_shape=jax.ShapeDtypeStruct((M, N), jnp.bfloat16),
        grid=(M // tm, N // tn),
        in_specs=[
            pl.BlockSpec((tm, D), lambda i, j: (i, 0)),
            pl.BlockSpec((D, tn), lambda i, j: (0, j)),
            pl.BlockSpec((1, tn), lambda i, j: (0, j)),
        ],
        out_specs=pl.BlockSpec((tm, tn), lambda i, j: (i, j)),
        compiler_params=pltpu.CompilerParams(
            dimension_semantics=("parallel", "parallel"),
            vmem_limit_bytes=VMEM_LIMIT),
    )(x2d, w, b.reshape(1, N))


def pallas_linear_add(x2d, w, b, residual):
    M, K = x2d.shape
    N = w.shape[1]
    tm, tn, tk = _pick_tile(M, 256), _pick_tile(N, 256), _pick_tile(K, 512)
    return pl.pallas_call(
        _linear_add_kernel,
        out_shape=jax.ShapeDtypeStruct((M, N), residual.dtype),
        grid=(M // tm, N // tn, K // tk),
        in_specs=[
            pl.BlockSpec((tm, tk), lambda i, j, k: (i, k)),
            pl.BlockSpec((tk, tn), lambda i, j, k: (k, j)),
            pl.BlockSpec((1, tn), lambda i, j, k: (0, j)),
            pl.BlockSpec((tm, tn), lambda i, j, k: (i, j)),
        ],
        out_specs=pl.BlockSpec((tm, tn), lambda i, j, k: (i, j)),
        scratch_shapes=[pltpu.VMEM((tm, tn), jnp.float32)],
        input_output_aliases={3: 0},      # residual buffer reused for the output
        compiler_params=pltpu.CompilerParams(
            dimension_semantics=("parallel", "parallel", "arbitrary"),
            vmem_limit_bytes=VMEM_LIMIT),
    )(x2d, w, b.reshape(1, N), residual)


def pallas_ffn(x2d, gamma, beta, w1, b1, w2, b2):
    M, D = x2d.shape
    F = w1.shape[1]
    tm, tf = _pick_tile(M, 256), _pick_tile(F, 512)
    return pl.pallas_call(
        _ffn_kernel,
        out_shape=jax.ShapeDtypeStruct((M, D), x2d.dtype),
        grid=(M // tm, F // tf),
        in_specs=[
            pl.BlockSpec((tm, D), lambda i, f: (i, 0)),
            pl.BlockSpec((1, D), lambda i, f: (0, 0)),
            pl.BlockSpec((1, D), lambda i, f: (0, 0)),
            pl.BlockSpec((D, tf), lambda i, f: (0, f)),
            pl.BlockSpec((1, tf), lambda i, f: (0, f)),
            pl.BlockSpec((tf, D), lambda i, f: (f, 0)),
            pl.BlockSpec((1, D), lambda i, f: (0, 0)),
        ],
        out_specs=pl.BlockSpec((tm, D), lambda i, f: (i, 0)),
        scratch_shapes=[pltpu.VMEM((tm, D), jnp.bfloat16),
                        pltpu.VMEM((tm, D), jnp.float32)],
        input_output_aliases={0: 0},      # x is also the residual; reuse its buffer
        compiler_params=pltpu.CompilerParams(
            dimension_semantics=("parallel", "arbitrary"),
            vmem_limit_bytes=VMEM_LIMIT),
    )(x2d, gamma.reshape(1, D), beta.reshape(1, D), w1, b1.reshape(1, F), w2, b2.reshape(1, D))


def pallas_layernorm(x2d, gamma, beta):
    M, D = x2d.shape
    tm = _pick_tile(M, 512)
    return pl.pallas_call(
        _layernorm_kernel,
        out_shape=jax.ShapeDtypeStruct((M, D), x2d.dtype),
        grid=(M // tm,),
        in_specs=[pl.BlockSpec((tm, D), lambda i: (i, 0)),
                  pl.BlockSpec((1, D), lambda i: (0, 0)),
                  pl.BlockSpec((1, D), lambda i: (0, 0))],
        out_specs=pl.BlockSpec((tm, D), lambda i: (i, 0)),
        compiler_params=pltpu.CompilerParams(
            dimension_semantics=("parallel",), vmem_limit_bytes=VMEM_LIMIT),
    )(x2d, gamma.reshape(1, D), beta.reshape(1, D))


def pallas_self_attention(qkv, bias, num_heads):
    # qkv: (B, Sq, 3D) bf16, bias: (B, Sq, Sq) f32 additive -> (B, Sq, D) bf16
    # TODO(synk): for very long sequences tile queries / use flash-style online softmax.
    B, Sq, threeD = qkv.shape
    D = threeD // 3
    return pl.pallas_call(
        functools.partial(_self_attn_kernel, num_heads=num_heads),
        out_shape=jax.ShapeDtypeStruct((B, Sq, D), jnp.bfloat16),
        grid=(B,),
        in_specs=[pl.BlockSpec((None, Sq, threeD), lambda b: (b, 0, 0)),
                  pl.BlockSpec((None, Sq, Sq), lambda b: (b, 0, 0))],
        out_specs=pl.BlockSpec((None, Sq, D), lambda b: (b, 0, 0)),
        compiler_params=pltpu.CompilerParams(
            dimension_semantics=("parallel",), vmem_limit_bytes=VMEM_LIMIT),
    )(qkv, bias)


def pallas_cross_attention(q, kv, bias, num_heads):
    # q: (B, Sq, D) bf16, kv: (B, Sk, 2D) bf16, bias: (B, Sq, Sk) f32 -> (B, Sq, D) bf16
    B, Sq, D = q.shape
    Sk = kv.shape[1]
    return pl.pallas_call(
        functools.partial(_cross_attn_kernel, num_heads=num_heads),
        out_shape=jax.ShapeDtypeStruct((B, Sq, D), jnp.bfloat16),
        grid=(B,),
        in_specs=[pl.BlockSpec((None, Sq, D), lambda b: (b, 0, 0)),
                  pl.BlockSpec((None, Sk, 2 * D), lambda b: (b, 0, 0)),
                  pl.BlockSpec((None, Sq, Sk), lambda b: (b, 0, 0))],
        out_specs=pl.BlockSpec((None, Sq, D), lambda b: (b, 0, 0)),
        compiler_params=pltpu.CompilerParams(
            dimension_semantics=("parallel",), vmem_limit_bytes=VMEM_LIMIT),
    )(q, kv, bias)


# --------------------------- Decoder forward pass --------------------------- #

def decoder_block(x, enc, bias_src, bias_tgt, lp, num_heads):
    B, S, D = x.shape
    Se = enc.shape[1]
    x2 = x.reshape(B * S, D)

    # --- self attention: LN1 fused with single QKV projection ---
    sa = lp["self_attn"]
    qkv = pallas_ln_linear(x2, lp["ln1_g"], lp["ln1_b"], sa["wqkv"], sa["bqkv"])
    ctx = pallas_self_attention(qkv.reshape(B, S, 3 * D), bias_tgt, num_heads)
    x2 = pallas_linear_add(ctx.reshape(B * S, D), sa["wo"], sa["bo"], x2)

    # --- cross attention: LN2 fused with Q projection; K/V projected from enc ---
    ca = lp["cross_attn"]
    q = pallas_ln_linear(x2, lp["ln2_g"], lp["ln2_b"], ca["wq"], ca["bq"])
    kv = pallas_linear(enc.reshape(B * Se, D), ca["wkv"], ca["bkv"])
    ctx = pallas_cross_attention(q.reshape(B, S, D), kv.reshape(B, Se, 2 * D),
                                 bias_src, num_heads)
    x2 = pallas_linear_add(ctx.reshape(B * S, D), ca["wo"], ca["bo"], x2)

    # --- fully fused LN3 + FFN + residual ---
    x2 = pallas_ffn(x2, lp["ln3_g"], lp["ln3_b"],
                    lp["ff_w1"], lp["ff_b1"], lp["ff_w2"], lp["ff_b2"])
    return x2.reshape(B, S, D)


def decoder_forward(x, encoder_output, src_mask, tgt_mask, params, *, num_heads):
    # additive attention biases computed once (shared by all layers and heads)
    bias_tgt = jnp.where(tgt_mask[:, 0] > 0, 0.0, NEG_INF).astype(jnp.float32)
    bias_src = jnp.where(src_mask[:, 0] > 0, 0.0, NEG_INF).astype(jnp.float32)
    for lp in params["layers"]:
        x = decoder_block(x, encoder_output, bias_src, bias_tgt, lp, num_heads)
    B, S, D = x.shape
    return pallas_layernorm(x.reshape(B * S, D),
                            params["norm_g"], params["norm_b"]).reshape(B, S, D)


# ------------------------------- Parameters --------------------------------- #

def _dense(key, fan_in, fan_out):
    kw, kb = jax.random.split(key)
    lim = 1.0 / math.sqrt(fan_in)
    w = jax.random.uniform(kw, (fan_in, fan_out), jnp.float32, -lim, lim)
    b = jax.random.uniform(kb, (fan_out,), jnp.float32, -lim, lim)
    return w.astype(jnp.bfloat16), b        # weights stored bf16, biases f32


def init_params(key, n_layers, d_model, d_ff):
    layers = []
    for lk in jax.random.split(key, n_layers):
        ks = jax.random.split(lk, 10)
        wq, bq = _dense(ks[0], d_model, d_model)
        wk, bk = _dense(ks[1], d_model, d_model)
        wv, bv = _dense(ks[2], d_model, d_model)
        wo, bo = _dense(ks[3], d_model, d_model)
        self_attn = dict(wqkv=jnp.concatenate([wq, wk, wv], axis=1),
                         bqkv=jnp.concatenate([bq, bk, bv]), wo=wo, bo=bo)
        wq2, bq2 = _dense(ks[4], d_model, d_model)
        wk2, bk2 = _dense(ks[5], d_model, d_model)
        wv2, bv2 = _dense(ks[6], d_model, d_model)
        wo2, bo2 = _dense(ks[7], d_model, d_model)
        cross_attn = dict(wq=wq2, bq=bq2,
                          wkv=jnp.concatenate([wk2, wv2], axis=1),
                          bkv=jnp.concatenate([bk2, bv2]), wo=wo2, bo=bo2)
        ff_w1, ff_b1 = _dense(ks[8], d_model, d_ff)
        ff_w2, ff_b2 = _dense(ks[9], d_ff, d_model)
        ones = jnp.ones((d_model,), jnp.float32)
        zeros = jnp.zeros((d_model,), jnp.float32)
        layers.append(dict(
            ln1_g=ones, ln1_b=zeros, ln2_g=ones, ln2_b=zeros, ln3_g=ones, ln3_b=zeros,
            self_attn=self_attn, cross_attn=cross_attn,
            ff_w1=ff_w1, ff_b1=ff_b1, ff_w2=ff_w2, ff_b2=ff_b2))
    return dict(layers=layers,
                norm_g=jnp.ones((d_model,), jnp.float32),
                norm_b=jnp.zeros((d_model,), jnp.float32))


# --------------------------- plain-JAX reference ---------------------------- #

def _ref_layernorm(x, g, b):
    mean = jnp.mean(x, -1, keepdims=True)
    var = jnp.mean((x - mean) ** 2, -1, keepdims=True)
    return (x - mean) * jax.lax.rsqrt(var + EPS) * g + b


def _ref_attention(q, k, v, mask, H):
    B, Sq, D = q.shape
    Sk = k.shape[1]
    Dh = D // H
    qh = q.reshape(B, Sq, H, Dh).transpose(0, 2, 1, 3)
    kh = k.reshape(B, Sk, H, Dh).transpose(0, 2, 1, 3)
    vh = v.reshape(B, Sk, H, Dh).transpose(0, 2, 1, 3)
    s = jnp.einsum("bhqd,bhkd->bhqk", qh, kh) / math.sqrt(Dh)
    s = jnp.where(mask > 0, s, NEG_INF)
    a = jax.nn.softmax(s, axis=-1)
    o = jnp.einsum("bhqk,bhkd->bhqd", a, vh)
    return o.transpose(0, 2, 1, 3).reshape(B, Sq, D)


def _ref_forward(x, enc, src_mask, tgt_mask, params, H):
    f32 = lambda w: w.astype(jnp.float32)
    B, S, D = x.shape
    Se = enc.shape[1]
    for lp in params["layers"]:
        sa, ca = lp["self_attn"], lp["cross_attn"]
        xn = _ref_layernorm(x, lp["ln1_g"], lp["ln1_b"])
        qkv = xn.reshape(-1, D) @ f32(sa["wqkv"]) + sa["bqkv"]
        q, k, v = (t.reshape(B, S, D) for t in (qkv[:, :D], qkv[:, D:2 * D], qkv[:, 2 * D:]))
        ctx = _ref_attention(q, k, v, tgt_mask, H)
        x = x + (ctx.reshape(-1, D) @ f32(sa["wo"]) + sa["bo"]).reshape(B, S, D)

        xn = _ref_layernorm(x, lp["ln2_g"], lp["ln2_b"])
        q = (xn.reshape(-1, D) @ f32(ca["wq"]) + ca["bq"]).reshape(B, S, D)
        kv = enc.reshape(-1, D) @ f32(ca["wkv"]) + ca["bkv"]
        k, v = kv[:, :D].reshape(B, Se, D), kv[:, D:].reshape(B, Se, D)
        ctx = _ref_attention(q, k, v, src_mask, H)
        x = x + (ctx.reshape(-1, D) @ f32(ca["wo"]) + ca["bo"]).reshape(B, S, D)

        xn = _ref_layernorm(x, lp["ln3_g"], lp["ln3_b"])
        h = jnp.maximum(xn.reshape(-1, D) @ f32(lp["ff_w1"]) + lp["ff_b1"], 0.0)
        x = x + (h @ f32(lp["ff_w2"]) + lp["ff_b2"]).reshape(B, S, D)
    return _ref_layernorm(x, params["norm_g"], params["norm_b"])


# ---------------------------------- main ------------------------------------ #

if __name__ == "__main__":
    B, S_dec, S_enc = 2, 8, 8
    d_model, d_ff, n_heads, n_layers = 32, 64, 4, 2

    root = jax.random.PRNGKey(0)
    k_x, k_enc, k_p = jax.random.split(root, 3)

    x = jax.random.normal(k_x, (B, S_dec, d_model), jnp.float32)
    encoder_output = jax.random.normal(k_enc, (B, S_enc, d_model), jnp.float32)

    tgt_mask = jnp.broadcast_to(
        jnp.tril(jnp.ones((S_dec, S_dec), jnp.float32))[None, None], (B, 1, S_dec, S_dec))
    src_mask = jnp.ones((B, 1, S_dec, S_enc), jnp.float32)

    params = init_params(k_p, n_layers, d_model, d_ff)

    fwd = jax.jit(decoder_forward, static_argnames=("num_heads",))
    out = jax.block_until_ready(
        fwd(x, encoder_output, src_mask, tgt_mask, params, num_heads=n_heads))

    ref = _ref_forward(x, encoder_output, src_mask, tgt_mask, params, n_heads)
    assert out.shape == (B, S_dec, d_model)
    err = float(jnp.max(jnp.abs(out - ref)))
    # bf16 MXU inputs + approx reciprocal -> slightly looser tolerance vs f32 reference.
    assert jnp.allclose(out, ref, rtol=5e-2, atol=5e-2), err

    # TODO(synk): dropout inside DecoderBlock is treated as identity (eval mode).
    print("KERNEL_OK")
</pallas_src>

<mosaic_0001>
module attributes {stable_mosaic.version = 11 : i64} {
  func.func @_ln_linear_kernel(%arg0: i32, %arg1: i32, %arg2: memref<16x32xf32, #tpu.memory_space<vmem>>, %arg3: memref<1x32xf32, #tpu.memory_space<vmem>>, %arg4: memref<1x32xf32, #tpu.memory_space<vmem>>, %arg5: memref<32x96xbf16, #tpu.memory_space<vmem>>, %arg6: memref<1x96xf32, #tpu.memory_space<vmem>>, %arg7: memref<16x96xbf16, #tpu.memory_space<vmem>>) attributes {dimension_semantics = [#tpu.dimension_semantics<parallel>, #tpu.dimension_semantics<parallel>], iteration_bounds = array<i64: 1, 1>, scalar_prefetch = 0 : i64, scratch_operands = 0 : i64, tpu.core_type = #tpu.core_type<tc>, window_params = [{transform_indices = @transform_0, window_bounds = array<i64: 16, 32>}, {pipeline_mode = #tpu.pipeline_mode<synchronous>, transform_indices = @transform_1, window_bounds = array<i64: 1, 32>}, {pipeline_mode = #tpu.pipeline_mode<synchronous>, transform_indices = @transform_2, window_bounds = array<i64: 1, 32>}, {transform_indices = @transform_3, window_bounds = array<i64: 32, 96>}, {transform_indices = @transform_4, window_bounds = array<i64: 1, 96>}, {transform_indices = @transform_5, window_bounds = array<i64: 16, 96>}]} {
    %c0 = arith.constant 0 : index
    %c0_0 = arith.constant 0 : index
    %0 = vector.load %arg2[%c0, %c0_0] : memref<16x32xf32, #tpu.memory_space<vmem>>, vector<16x32xf32>
    %c0_1 = arith.constant 0 : index
    %c0_2 = arith.constant 0 : index
    %1 = vector.load %arg3[%c0_1, %c0_2] : memref<1x32xf32, #tpu.memory_space<vmem>>, vector<1x32xf32>
    %c0_3 = arith.constant 0 : index
    %c0_4 = arith.constant 0 : index
    %2 = vector.load %arg4[%c0_3, %c0_4] : memref<1x32xf32, #tpu.memory_space<vmem>>, vector<1x32xf32>
    %cst = arith.constant dense<0.000000e+00> : vector<16xf32>
    %3 = vector.multi_reduction <add>, %0, %cst [1] : vector<16x32xf32> to vector<16xf32>
    %4 = vector.shape_cast %3 : vector<16xf32> to vector<16x1xf32>
    %cst_5 = arith.constant 3.200000e+01 : f32
    %5 = vector.broadcast %cst_5 : f32 to vector<16x1xf32>
    %6 = arith.divf %4, %5 : vector<16x1xf32>
    %7 = vector.broadcast %6 : vector<16x1xf32> to vector<16x32xf32>
    %8 = arith.subf %0, %7 : vector<16x32xf32>
    %9 = arith.mulf %8, %8 : vector<16x32xf32>
    %cst_6 = arith.constant dense<0.000000e+00> : vector<16xf32>
    %10 = vector.multi_reduction <add>, %9, %cst_6 [1] : vector<16x32xf32> to vector<16xf32>
    %11 = vector.shape_cast %10 : vector<16xf32> to vector<16x1xf32>
    %cst_7 = arith.constant 3.200000e+01 : f32
    %12 = vector.broadcast %cst_7 : f32 to vector<16x1xf32>
    %13 = arith.divf %11, %12 : vector<16x1xf32>
    %14 = vector.broadcast %6 : vector<16x1xf32> to vector<16x32xf32>
    %15 = arith.subf %0, %14 : vector<16x32xf32>
    %cst_8 = arith.constant 9.99999997E-7 : f32
    %16 = vector.broadcast %cst_8 : f32 to vector<16x1xf32>
    %17 = arith.addf %13, %16 : vector<16x1xf32>
    %18 = math.rsqrt %17 : vector<16x1xf32>
    %19 = vector.broadcast %18 : vector<16x1xf32> to vector<16x32xf32>
    %20 = arith.mulf %15, %19 : vector<16x32xf32>
    %21 = vector.broadcast %1 : vector<1x32xf32> to vector<16x32xf32>
    %22 = arith.mulf %20, %21 : vector<16x32xf32>
    %23 = vector.broadcast %2 : vector<1x32xf32> to vector<16x32xf32>
    %24 = arith.addf %22, %23 : vector<16x32xf32>
    %25 = arith.truncf %24 : vector<16x32xf32> to vector<16x32xbf16>
    %c0_9 = arith.constant 0 : index
    %c0_10 = arith.constant 0 : index
    %26 = vector.load %arg5[%c0_9, %c0_10] : memref<32x96xbf16, #tpu.memory_space<vmem>>, vector<32x96xbf16>
    %cst_11 = arith.constant dense<0.000000e+00> : vector<16x96xf32>
    %27 = tpu.matmul %25, %26, %cst_11 {dimension_numbers = #tpu.dot_dimension_numbers<[1], [0], [0], [1], [0, 0, 1, 1], [], []>} : vector<16x32xbf16>, vector<32x96xbf16>, vector<16x96xf32> -> vector<16x96xf32>
    %c0_12 = arith.constant 0 : index
    %c0_13 = arith.constant 0 : index
    %28 = vector.load %arg6[%c0_12, %c0_13] : memref<1x96xf32, #tpu.memory_space<vmem>>, vector<1x96xf32>
    %29 = vector.broadcast %28 : vector<1x96xf32> to vector<16x96xf32>
    %30 = arith.addf %27, %29 : vector<16x96xf32>
    %31 = arith.truncf %30 : vector<16x96xf32> to vector<16x96xbf16>
    %c0_14 = arith.constant 0 : index
    %c0_15 = arith.constant 0 : index
    %32 = vector.load %arg7[%c0_14, %c0_15] : memref<16x96xbf16, #tpu.memory_space<vmem>>, vector<16x96xbf16>
    tpu.vector_store %arg7[%c0_14, %c0_15], %31 {strides = array<i32>} : memref<16x96xbf16, #tpu.memory_space<vmem>>, vector<16x96xbf16>,
    return
  }
  func.func @transform_0(%arg0: i32, %arg1: i32) -> (i32, i32) {
    %c0_i32 = arith.constant 0 : i32
    %c0_i32_0 = arith.constant 0 : i32
    return %arg0, %c0_i32 : i32, i32
  }
  func.func @transform_1(%arg0: i32, %arg1: i32) -> (i32, i32) {
    %c0_i32 = arith.constant 0 : i32
    %c0_i32_0 = arith.constant 0 : i32
    %c0_i32_1 = arith.constant 0 : i32
    return %c0_i32, %c0_i32_0 : i32, i32
  }
  func.func @transform_2(%arg0: i32, %arg1: i32) -> (i32, i32) {
    %c0_i32 = arith.constant 0 : i32
    %c0_i32_0 = arith.constant 0 : i32
    %c0_i32_1 = arith.constant 0 : i32
    return %c0_i32, %c0_i32_0 : i32, i32
  }
  func.func @transform_3(%arg0: i32, %arg1: i32) -> (i32, i32) {
    %c0_i32 = arith.constant 0 : i32
    %c0_i32_0 = arith.constant 0 : i32
    return %c0_i32, %arg1 : i32, i32
  }
  func.func @transform_4(%arg0: i32, %arg1: i32) -> (i32, i32) {
    %c0_i32 = arith.constant 0 : i32
    %c0_i32_0 = arith.constant 0 : i32
    return %c0_i32, %arg1 : i32, i32
  }
  func.func @transform_5(%arg0: i32, %arg1: i32) -> (i32, i32) {
    %c0_i32 = arith.constant 0 : i32
    return %arg0, %arg1 : i32, i32
  }
}

module attributes {stable_mosaic.version = 11 : i64} {
  func.func @_self_attn_kernel(%arg0: i32, %arg1: memref<1x8x96xbf16, #tpu.memory_space<vmem>>, %arg2: memref<1x8x8xf32, #tpu.memory_space<vmem>>, %arg3: memref<1x8x32xbf16, #tpu.memory_space<vmem>>) attributes {dimension_semantics = [#tpu.dimension_semantics<parallel>], iteration_bounds = array<i64: 2>, scalar_prefetch = 0 : i64, scratch_operands = 0 : i64, tpu.core_type = #tpu.core_type<tc>, window_params = [{transform_indices = @transform_0, window_bounds = array<i64: 1, 8, 96>}, {transform_indices = @transform_1, window_bounds = array<i64: 1, 8, 8>}, {transform_indices = @transform_2, window_bounds = array<i64: 1, 8, 32>}]} {
    %c0 = arith.constant 0 : index
    %c0_0 = arith.constant 0 : index
    %c0_1 = arith.constant 0 : index
    %0 = vector.load %arg1[%c0, %c0_0, %c0_1] : memref<1x8x96xbf16, #tpu.memory_space<vmem>>, vector<1x8x96xbf16>
    %1 = vector.shape_cast %0 : vector<1x8x96xbf16> to vector<8x96xbf16>
    %2 = vector.extract_strided_slice %1 {offsets = [0, 0], sizes = [8, 32], strides = [1, 1]} : vector<8x96xbf16> to vector<8x32xbf16>
    %3 = vector.extract_strided_slice %1 {offsets = [0, 32], sizes = [8, 32], strides = [1, 1]} : vector<8x96xbf16> to vector<8x32xbf16>
    %4 = vector.extract_strided_slice %1 {offsets = [0, 64], sizes = [8, 32], strides = [1, 1]} : vector<8x96xbf16> to vector<8x32xbf16>
    %c0_2 = arith.constant 0 : index
    %c0_3 = arith.constant 0 : index
    %c0_4 = arith.constant 0 : index
    %5 = vector.load %arg2[%c0_2, %c0_3, %c0_4] : memref<1x8x8xf32, #tpu.memory_space<vmem>>, vector<1x8x8xf32>
    %6 = vector.shape_cast %5 : vector<1x8x8xf32> to vector<8x8xf32>
    %7 = arith.extf %2 : vector<8x32xbf16> to vector<8x32xf32>
    %cst = arith.constant 0.353553385 : f32
    %8 = vector.broadcast %cst : f32 to vector<8x32xf32>
    %9 = arith.mulf %7, %8 : vector<8x32xf32>
    %10 = arith.truncf %9 : vector<8x32xf32> to vector<8x32xbf16>
    %11 = vector.extract_strided_slice %10 {offsets = [0, 0], sizes = [8, 8], strides = [1, 1]} : vector<8x32xbf16> to vector<8x8xbf16>
    %12 = vector.extract_strided_slice %3 {offsets = [0, 0], sizes = [8, 8], strides = [1, 1]} : vector<8x32xbf16> to vector<8x8xbf16>
    %cst_5 = arith.constant dense<0.000000e+00> : vector<8x8xf32>
    %13 = tpu.matmul %11, %12, %cst_5 {dimension_numbers = #tpu.dot_dimension_numbers<[1], [1], [0], [0], [0, 0, 1, 0], [], []>} : vector<8x8xbf16>, vector<8x8xbf16>, vector<8x8xf32> -> vector<8x8xf32>
    %14 = arith.addf %13, %6 : vector<8x8xf32>
    %cst_6 = arith.constant dense<0xFF800000> : vector<8xf32>
    %15 = vector.multi_reduction <maximumf>, %14, %cst_6 [1] : vector<8x8xf32> to vector<8xf32>
    %16 = vector.shape_cast %15 : vector<8xf32> to vector<8x1xf32>
    %17 = vector.broadcast %16 : vector<8x1xf32> to vector<8x8xf32>
    %18 = arith.subf %14, %17 : vector<8x8xf32>
    %19 = math.exp %18 : vector<8x8xf32>
    %cst_7 = arith.constant dense<0.000000e+00> : vector<8xf32>
    %20 = vector.multi_reduction <add>, %19, %cst_7 [1] : vector<8x8xf32> to vector<8xf32>
    %21 = vector.shape_cast %20 : vector<8xf32> to vector<8x1xf32>
    %22 = tpu.reciprocal %21 {approx = true} : vector<8x1xf32> -> vector<8x1xf32>
    %23 = vector.broadcast %22 : vector<8x1xf32> to vector<8x8xf32>
    %24 = arith.mulf %19, %23 : vector<8x8xf32>
    %25 = arith.truncf %24 : vector<8x8xf32> to vector<8x8xbf16>
    %26 = vector.extract_strided_slice %4 {offsets = [0, 0], sizes = [8, 8], strides = [1, 1]} : vector<8x32xbf16> to vector<8x8xbf16>
    %cst_8 = arith.constant dense<0.000000e+00> : vector<8x8xf32>
    %27 = tpu.matmul %25, %26, %cst_8 {dimension_numbers = #tpu.dot_dimension_numbers<[1], [0], [0], [1], [0, 0, 1, 1], [], []>} : vector<8x8xbf16>, vector<8x8xbf16>, vector<8x8xf32> -> vector<8x8xf32>
    %28 = arith.truncf %27 : vector<8x8xf32> to vector<8x8xbf16>
    %c0_9 = arith.constant 0 : index
    %c0_10 = arith.constant 0 : index
    %c0_11 = arith.constant 0 : index
    %29 = vector.load %arg3[%c0_9, %c0_10, %c0_11] : memref<1x8x32xbf16, #tpu.memory_space<vmem>>, vector<1x8x8xbf16>
    %30 = vector.shape_cast %29 : vector<1x8x8xbf16> to vector<8x8xbf16>
    %31 = vector.shape_cast %28 : vector<8x8xbf16> to vector<1x8x8xbf16>
    tpu.vector_store %arg3[%c0_9, %c0_10, %c0_11], %31 {strides = array<i32>} : memref<1x8x32xbf16, #tpu.memory_space<vmem>>, vector<1x8x8xbf16>,
    %32 = vector.extract_strided_slice %10 {offsets = [0, 8], sizes = [8, 8], strides = [1, 1]} : vector<8x32xbf16> to vector<8x8xbf16>
    %33 = vector.extract_strided_slice %3 {offsets = [0, 8], sizes = [8, 8], strides = [1, 1]} : vector<8x32xbf16> to vector<8x8xbf16>
    %cst_12 = arith.constant dense<0.000000e+00> : vector<8x8xf32>
    %34 = tpu.matmul %32, %33, %cst_12 {dimension_numbers = #tpu.dot_dimension_numbers<[1], [1], [0], [0], [0, 0, 1, 0], [], []>} : vector<8x8xbf16>, vector<8x8xbf16>, vector<8x8xf32> -> vector<8x8xf32>
    %35 = arith.addf %34, %6 : vector<8x8xf32>
    %cst_13 = arith.constant dense<0xFF800000> : vector<8xf32>
    %36 = vector.multi_reduction <maximumf>, %35, %cst_13 [1] : vector<8x8xf32> to vector<8xf32>
    %37 = vector.shape_cast %36 : vector<8xf32> to vector<8x1xf32>
    %38 = vector.broadcast %37 : vector<8x1xf32> to vector<8x8xf32>
    %39 = arith.subf %35, %38 : vector<8x8xf32>
    %40 = math.exp %39 : vector<8x8xf32>
    %cst_14 = arith.constant dense<0.000000e+00> : vector<8xf32>
    %41 = vector.multi_reduction <add>, %40, %cst_14 [1] : vector<8x8xf32> to vector<8xf32>
    %42 = vector.shape_cast %41 : vector<8xf32> to vector<8x1xf32>
    %43 = tpu.reciprocal %42 {approx = true} : vector<8x1xf32> -> vector<8x1xf32>
    %44 = vector.broadcast %43 : vector<8x1xf32> to vector<8x8xf32>
    %45 = arith.mulf %40, %44 : vector<8x8xf32>
    %46 = arith.truncf %45 : vector<8x8xf32> to vector<8x8xbf16>
    %47 = vector.extract_strided_slice %4 {offsets = [0, 8], sizes = [8, 8], strides = [1, 1]} : vector<8x32xbf16> to vector<8x8xbf16>
    %cst_15 = arith.constant dense<0.000000e+00> : vector<8x8xf32>
    %48 = tpu.matmul %46, %47, %cst_15 {dimension_numbers = #tpu.dot_dimension_numbers<[1], [0], [0], [1], [0, 0, 1, 1], [], []>} : vector<8x8xbf16>, vector<8x8xbf16>, vector<8x8xf32> -> vector<8x8xf32>
    %49 = arith.truncf %48 : vector<8x8xf32> to vector<8x8xbf16>
    %c0_16 = arith.constant 0 : index
    %c0_17 = arith.constant 0 : index
    %c8 = arith.constant 8 : index
    %50 = vector.load %arg3[%c0_16, %c0_17, %c8] : memref<1x8x32xbf16, #tpu.memory_space<vmem>>, vector<1x8x8xbf16>
    %51 = vector.shape_cast %50 : vector<1x8x8xbf16> to vector<8x8xbf16>
    %52 = vector.shape_cast %49 : vector<8x8xbf16> to vector<1x8x8xbf16>
    tpu.vector_store %arg3[%c0_16, %c0_17, %c8], %52 {strides = array<i32>} : memref<1x8x32xbf16, #tpu.memory_space<vmem>>, vector<1x8x8xbf16>,
    %53 = vector.extract_strided_slice %10 {offsets = [0, 16], sizes = [8, 8], strides = [1, 1]} : vector<8x32xbf16> to vector<8x8xbf16>
    %54 = vector.extract_strided_slice %3 {offsets = [0, 16], sizes = [8, 8], strides = [1, 1]} : vector<8x32xbf16> to vector<8x8xbf16>
    %cst_18 = arith.constant dense<0.000000e+00> : vector<8x8xf32>
    %55 = tpu.matmul %53, %54, %cst_18 {dimension_numbers = #tpu.dot_dimension_numbers<[1], [1], [0], [0], [0, 0, 1, 0], [], []>} : vector<8x8xbf16>, vector<8x8xbf16>, vector<8x8xf32> -> vector<8x8xf32>
    %56 = arith.addf %55, %6 : vector<8x8xf32>
    %cst_19 = arith.constant dense<0xFF800000> : vector<8xf32>
    %57 = vector.multi_reduction <maximumf>, %56, %cst_19 [1] : vector<8x8xf32> to vector<8xf32>
    %58 = vector.shape_cast %57 : vector<8xf32> to vector<8x1xf32>
    %59 = vector.broadcast %58 : vector<8x1xf32> to vector<8x8xf32>
    %60 = arith.subf %56, %59 : vector<8x8xf32>
    %61 = math.exp %60 : vector<8x8xf32>
    %cst_20 = arith.constant dense<0.000000e+00> : vector<8xf32>
    %62 = vector.multi_reduction <add>, %61, %cst_20 [1] : vector<8x8xf32> to vector<8xf32>
    %63 = vector.shape_cast %62 : vector<8xf32> to vector<8x1xf32>
    %64 = tpu.reciprocal %63 {approx = true} : vector<8x1xf32> -> vector<8x1xf32>
    %65 = vector.broadcast %64 : vector<8x1xf32> to vector<8x8xf32>
    %66 = arith.mulf %61, %65 : vector<8x8xf32>
    %67 = arith.truncf %66 : vector<8x8xf32> to vector<8x8xbf16>
    %68 = vector.extract_strided_slice %4 {offsets = [0, 16], sizes = [8, 8], strides = [1, 1]} : vector<8x32xbf16> to vector<8x8xbf16>
    %cst_21 = arith.constant dense<0.000000e+00> : vector<8x8xf32>
    %69 = tpu.matmul %67, %68, %cst_21 {dimension_numbers = #tpu.dot_dimension_numbers<[1], [0], [0], [1], [0, 0, 1, 1], [], []>} : vector<8x8xbf16>, vector<8x8xbf16>, vector<8x8xf32> -> vector<8x8xf32>
    %70 = arith.truncf %69 : vector<8x8xf32> to vector<8x8xbf16>
    %c0_22 = arith.constant 0 : index
    %c0_23 = arith.constant 0 : index
    %c16 = arith.constant 16 : index
    %71 = vector.load %arg3[%c0_22, %c0_23, %c16] : memref<1x8x32xbf16, #tpu.memory_space<vmem>>, vector<1x8x8xbf16>
    %72 = vector.shape_cast %71 : vector<1x8x8xbf16> to vector<8x8xbf16>
    %73 = vector.shape_cast %70 : vector<8x8xbf16> to vector<1x8x8xbf16>
    tpu.vector_store %arg3[%c0_22, %c0_23, %c16], %73 {strides = array<i32>} : memref<1x8x32xbf16, #tpu.memory_space<vmem>>, vector<1x8x8xbf16>,
    %74 = vector.extract_strided_slice %10 {offsets = [0, 24], sizes = [8, 8], strides = [1, 1]} : vector<8x32xbf16> to vector<8x8xbf16>
    %75 = vector.extract_strided_slice %3 {offsets = [0, 24], sizes = [8, 8], strides = [1, 1]} : vector<8x32xbf16> to vector<8x8xbf16>
    %cst_24 = arith.constant dense<0.000000e+00> : vector<8x8xf32>
    %76 = tpu.matmul %74, %75, %cst_24 {dimension_numbers = #tpu.dot_dimension_numbers<[1], [1], [0], [0], [0, 0, 1, 0], [], []>} : vector<8x8xbf16>, vector<8x8xbf16>, vector<8x8xf32> -> vector<8x8xf32>
    %77 = arith.addf %76, %6 : vector<8x8xf32>
    %cst_25 = arith.constant dense<0xFF800000> : vector<8xf32>
    %78 = vector.multi_reduction <maximumf>, %77, %cst_25 [1] : vector<8x8xf32> to vector<8xf32>
    %79 = vector.shape_cast %78 : vector<8xf32> to vector<8x1xf32>
    %80 = vector.broadcast %79 : vector<8x1xf32> to vector<8x8xf32>
    %81 = arith.subf %77, %80 : vector<8x8xf32>
    %82 = math.exp %81 : vector<8x8xf32>
    %cst_26 = arith.constant dense<0.000000e+00> : vector<8xf32>
    %83 = vector.multi_reduction <add>, %82, %cst_26 [1] : vector<8x8xf32> to vector<8xf32>
    %84 = vector.shape_cast %83 : vector<8xf32> to vector<8x1xf32>
    %85 = tpu.reciprocal %84 {approx = true} : vector<8x1xf32> -> vector<8x1xf32>
    %86 = vector.broadcast %85 : vector<8x1xf32> to vector<8x8xf32>
    %87 = arith.mulf %82, %86 : vector<8x8xf32>
    %88 = arith.truncf %87 : vector<8x8xf32> to vector<8x8xbf16>
    %89 = vector.extract_strided_slice %4 {offsets = [0, 24], sizes = [8, 8], strides = [1, 1]} : vector<8x32xbf16> to vector<8x8xbf16>
    %cst_27 = arith.constant dense<0.000000e+00> : vector<8x8xf32>
    %90 = tpu.matmul %88, %89, %cst_27 {dimension_numbers = #tpu.dot_dimension_numbers<[1], [0], [0], [1], [0, 0, 1, 1], [], []>} : vector<8x8xbf16>, vector<8x8xbf16>, vector<8x8xf32> -> vector<8x8xf32>
    %91 = arith.truncf %90 : vector<8x8xf32> to vector<8x8xbf16>
    %c0_28 = arith.constant 0 : index
    %c0_29 = arith.constant 0 : index
    %c24 = arith.constant 24 : index
    %92 = vector.load %arg3[%c0_28, %c0_29, %c24] : memref<1x8x32xbf16, #tpu.memory_space<vmem>>, vector<1x8x8xbf16>
    %93 = vector.shape_cast %92 : vector<1x8x8xbf16> to vector<8x8xbf16>
    %94 = vector.shape_cast %91 : vector<8x8xbf16> to vector<1x8x8xbf16>
    tpu.vector_store %arg3[%c0_28, %c0_29, %c24], %94 {strides = array<i32>} : memref<1x8x32xbf16, #tpu.memory_space<vmem>>, vector<1x8x8xbf16>,
    return
  }
  func.func @transform_0(%arg0: i32) -> (i32, i32, i32) {
    %c0_i32 = arith.constant 0 : i32
    %c0_i32_0 = arith.constant 0 : i32
    %c0_i32_1 = arith.constant 0 : i32
    return %arg0, %c0_i32, %c0_i32_0 : i32, i32, i32
  }
  func.func @transform_1(%arg0: i32) -> (i32, i32, i32) {
    %c0_i32 = arith.constant 0 : i32
    %c0_i32_0 = arith.constant 0 : i32
    %c0_i32_1 = arith.constant 0 : i32
    return %arg0, %c0_i32, %c0_i32_0 : i32, i32, i32
  }
  func.func @transform_2(%arg0: i32) -> (i32, i32, i32) {
    %c0_i32 = arith.constant 0 : i32
    %c0_i32_0 = arith.constant 0 : i32
    %c0_i32_1 = arith.constant 0 : i32
    return %arg0, %c0_i32, %c0_i32_0 : i32, i32, i32
  }
}

module attributes {stable_mosaic.version = 11 : i64} {
  func.func @_linear_add_kernel(%arg0: i32, %arg1: i32, %arg2: i32, %arg3: memref<16x32xbf16, #tpu.memory_space<vmem>>, %arg4: memref<32x32xbf16, #tpu.memory_space<vmem>>, %arg5: memref<1x32xf32, #tpu.memory_space<vmem>>, %arg6: memref<16x32xf32, #tpu.memory_space<vmem>>, %arg7: memref<16x32xf32, #tpu.memory_space<vmem>>, %arg8: memref<16x32xf32, #tpu.memory_space<vmem>>) attributes {dimension_semantics = [#tpu.dimension_semantics<parallel>, #tpu.dimension_semantics<parallel>, #tpu.dimension_semantics<arbitrary>], iteration_bounds = array<i64: 1, 1, 1>, scalar_prefetch = 0 : i64, scratch_operands = 1 : i64, tpu.core_type = #tpu.core_type<tc>, window_params = [{transform_indices = @transform_0, window_bounds = array<i64: 16, 32>}, {transform_indices = @transform_1, window_bounds = array<i64: 32, 32>}, {transform_indices = @transform_2, window_bounds = array<i64: 1, 32>}, {transform_indices = @transform_3, window_bounds = array<i64: 16, 32>}, {transform_indices = @transform_4, window_bounds = array<i64: 16, 32>}]} {
    %c0_i32 = arith.constant 0 : i32
    %0 = arith.cmpi eq, %arg2, %c0_i32 : i32
    %1 = arith.extui %0 : i1 to i32
    %c0_i32_0 = arith.constant 0 : i32
    %2 = arith.cmpi ne, %1, %c0_i32_0 : i32
    scf.if %2 {
      %cst_10 = arith.constant 0.000000e+00 : f32
      %12 = vector.broadcast %cst_10 : f32 to vector<16x32xf32>
      %c0_11 = arith.constant 0 : index
      %c0_12 = arith.constant 0 : index
      %13 = vector.load %arg8[%c0_11, %c0_12] : memref<16x32xf32, #tpu.memory_space<vmem>>, vector<16x32xf32>
      tpu.vector_store %arg8[%c0_11, %c0_12], %12 {strides = array<i32>} : memref<16x32xf32, #tpu.memory_space<vmem>>, vector<16x32xf32>,
    } else {
    }
    %c0 = arith.constant 0 : index
    %c0_1 = arith.constant 0 : index
    %3 = vector.load %arg8[%c0, %c0_1] : memref<16x32xf32, #tpu.memory_space<vmem>>, vector<16x32xf32>
    %c0_2 = arith.constant 0 : index
    %c0_3 = arith.constant 0 : index
    %4 = vector.load %arg3[%c0_2, %c0_3] : memref<16x32xbf16, #tpu.memory_space<vmem>>, vector<16x32xbf16>
    %c0_4 = arith.constant 0 : index
    %c0_5 = arith.constant 0 : index
    %5 = vector.load %arg4[%c0_4, %c0_5] : memref<32x32xbf16, #tpu.memory_space<vmem>>, vector<32x32xbf16>
    %cst = arith.constant dense<0.000000e+00> : vector<16x32xf32>
    %6 = tpu.matmul %4, %5, %cst {dimension_numbers = #tpu.dot_dimension_numbers<[1], [0], [0], [1], [0, 0, 1, 1], [], []>} : vector<16x32xbf16>, vector<32x32xbf16>, vector<16x32xf32> -> vector<16x32xf32>
    %7 = arith.addf %3, %6 : vector<16x32xf32>
    %c0_6 = arith.constant 0 : index
    %c0_7 = arith.constant 0 : index
    %8 = vector.load %arg8[%c0_6, %c0_7] : memref<16x32xf32, #tpu.memory_space<vmem>>, vector<16x32xf32>
    tpu.vector_store %arg8[%c0_6, %c0_7], %7 {strides = array<i32>} : memref<16x32xf32, #tpu.memory_space<vmem>>, vector<16x32xf32>,
    %c0_i32_8 = arith.constant 0 : i32
    %9 = arith.cmpi eq, %arg2, %c0_i32_8 : i32
    %10 = arith.extui %9 : i1 to i32
    %c0_i32_9 = arith.constant 0 : i32
    %11 = arith.cmpi ne, %10, %c0_i32_9 : i32
    scf.if %11 {
      %c0_10 = arith.constant 0 : index
      %c0_11 = arith.constant 0 : index
      %12 = vector.load %arg8[%c0_10, %c0_11] : memref<16x32xf32, #tpu.memory_space<vmem>>, vector<16x32xf32>
      %c0_12 = arith.constant 0 : index
      %c0_13 = arith.constant 0 : index
      %13 = vector.load %arg5[%c0_12, %c0_13] : memref<1x32xf32, #tpu.memory_space<vmem>>, vector<1x32xf32>
      %14 = vector.broadcast %13 : vector<1x32xf32> to vector<16x32xf32>
      %15 = arith.addf %12, %14 : vector<16x32xf32>
      %c0_14 = arith.constant 0 : index
      %c0_15 = arith.constant 0 : index
      %16 = vector.load %arg6[%c0_14, %c0_15] : memref<16x32xf32, #tpu.memory_space<vmem>>, vector<16x32xf32>
      %17 = arith.addf %15, %16 : vector<16x32xf32>
      %c0_16 = arith.constant 0 : index
      %c0_17 = arith.constant 0 : index
      %18 = vector.load %arg7[%c0_16, %c0_17] : memref<16x32xf32, #tpu.memory_space<vmem>>, vector<16x32xf32>
      tpu.vector_store %arg7[%c0_16, %c0_17], %17 {strides = array<i32>} : memref<16x32xf32, #tpu.memory_space<vmem>>, vector<16x32xf32>,
    } else {
    }
    return
  }
  func.func @transform_0(%arg0: i32, %arg1: i32, %arg2: i32) -> (i32, i32) {
    %c0_i32 = arith.constant 0 : i32
    return %arg0, %arg2 : i32, i32
  }
  func.func @transform_1(%arg0: i32, %arg1: i32, %arg2: i32) -> (i32, i32) {
    %c0_i32 = arith.constant 0 : i32
    return %arg2, %arg1 : i32, i32
  }
  func.func @transform_2(%arg0: i32, %arg1: i32, %arg2: i32) -> (i32, i32) {
    %c0_i32 = arith.constant 0 : i32
    %c0_i32_0 = arith.constant 0 : i32
    return %c0_i32, %arg1 : i32, i32
  }
  func.func @transform_3(%arg0: i32, %arg1: i32, %arg2: i32) -> (i32, i32) {
    %c0_i32 = arith.constant 0 : i32
    return %arg0, %arg1 : i32, i32
  }
  func.func @transform_4(%arg0: i32, %arg1: i32, %arg2: i32) -> (i32, i32) {
    %c0_i32 = arith.constant 0 : i32
    return %arg0, %arg1 : i32, i32
  }
}

module attributes {stable_mosaic.version = 11 : i64} {
  func.func @_ln_linear_kernel(%arg0: i32, %arg1: i32, %arg2: memref<16x32xf32, #tpu.memory_space<vmem>>, %arg3: memref<1x32xf32, #tpu.memory_space<vmem>>, %arg4: memref<1x32xf32, #tpu.memory_space<vmem>>, %arg5: memref<32x32xbf16, #tpu.memory_space<vmem>>, %arg6: memref<1x32xf32, #tpu.memory_space<vmem>>, %arg7: memref<16x32xbf16, #tpu.memory_space<vmem>>) attributes {dimension_semantics = [#tpu.dimension_semantics<parallel>, #tpu.dimension_semantics<parallel>], iteration_bounds = array<i64: 1, 1>, scalar_prefetch = 0 : i64, scratch_operands = 0 : i64, tpu.core_type = #tpu.core_type<tc>, window_params = [{transform_indices = @transform_0, window_bounds = array<i64: 16, 32>}, {pipeline_mode = #tpu.pipeline_mode<synchronous>, transform_indices = @transform_1, window_bounds = array<i64: 1, 32>}, {pipeline_mode = #tpu.pipeline_mode<synchronous>, transform_indices = @transform_2, window_bounds = array<i64: 1, 32>}, {transform_indices = @transform_3, window_bounds = array<i64: 32, 32>}, {transform_indices = @transform_4, window_bounds = array<i64: 1, 32>}, {transform_indices = @transform_5, window_bounds = array<i64: 16, 32>}]} {
    %c0 = arith.constant 0 : index
    %c0_0 = arith.constant 0 : index
    %0 = vector.load %arg2[%c0, %c0_0] : memref<16x32xf32, #tpu.memory_space<vmem>>, vector<16x32xf32>
    %c0_1 = arith.constant 0 : index
    %c0_2 = arith.constant 0 : index
    %1 = vector.load %arg3[%c0_1, %c0_2] : memref<1x32xf32, #tpu.memory_space<vmem>>, vector<1x32xf32>
    %c0_3 = arith.constant 0 : index
    %c0_4 = arith.constant 0 : index
    %2 = vector.load %arg4[%c0_3, %c0_4] : memref<1x32xf32, #tpu.memory_space<vmem>>, vector<1x32xf32>
    %cst = arith.constant dense<0.000000e+00> : vector<16xf32>
    %3 = vector.multi_reduction <add>, %0, %cst [1] : vector<16x32xf32> to vector<16xf32>
    %4 = vector.shape_cast %3 : vector<16xf32> to vector<16x1xf32>
    %cst_5 = arith.constant 3.200000e+01 : f32
    %5 = vector.broadcast %cst_5 : f32 to vector<16x1xf32>
    %6 = arith.divf %4, %5 : vector<16x1xf32>
    %7 = vector.broadcast %6 : vector<16x1xf32> to vector<16x32xf32>
    %8 = arith.subf %0, %7 : vector<16x32xf32>
    %9 = arith.mulf %8, %8 : vector<16x32xf32>
    %cst_6 = arith.constant dense<0.000000e+00> : vector<16xf32>
    %10 = vector.multi_reduction <add>, %9, %cst_6 [1] : vector<16x32xf32> to vector<16xf32>
    %11 = vector.shape_cast %10 : vector<16xf32> to vector<16x1xf32>
    %cst_7 = arith.constant 3.200000e+01 : f32
    %12 = vector.broadcast %cst_7 : f32 to vector<16x1xf32>
    %13 = arith.divf %11, %12 : vector<16x1xf32>
    %14 = vector.broadcast %6 : vector<16x1xf32> to vector<16x32xf32>
    %15 = arith.subf %0, %14 : vector<16x32xf32>
    %cst_8 = arith.constant 9.99999997E-7 : f32
    %16 = vector.broadcast %cst_8 : f32 to vector<16x1xf32>
    %17 = arith.addf %13, %16 : vector<16x1xf32>
    %18 = math.rsqrt %17 : vector<16x1xf32>
    %19 = vector.broadcast %18 : vector<16x1xf32> to vector<16x32xf32>
    %20 = arith.mulf %15, %19 : vector<16x32xf32>
    %21 = vector.broadcast %1 : vector<1x32xf32> to vector<16x32xf32>
    %22 = arith.mulf %20, %21 : vector<16x32xf32>
    %23 = vector.broadcast %2 : vector<1x32xf32> to vector<16x32xf32>
    %24 = arith.addf %22, %23 : vector<16x32xf32>
    %25 = arith.truncf %24 : vector<16x32xf32> to vector<16x32xbf16>
    %c0_9 = arith.constant 0 : index
    %c0_10 = arith.constant 0 : index
    %26 = vector.load %arg5[%c0_9, %c0_10] : memref<32x32xbf16, #tpu.memory_space<vmem>>, vector<32x32xbf16>
    %cst_11 = arith.constant dense<0.000000e+00> : vector<16x32xf32>
    %27 = tpu.matmul %25, %26, %cst_11 {dimension_numbers = #tpu.dot_dimension_numbers<[1], [0], [0], [1], [0, 0, 1, 1], [], []>} : vector<16x32xbf16>, vector<32x32xbf16>, vector<16x32xf32> -> vector<16x32xf32>
    %c0_12 = arith.constant 0 : index
    %c0_13 = arith.constant 0 : index
    %28 = vector.load %arg6[%c0_12, %c0_13] : memref<1x32xf32, #tpu.memory_space<vmem>>, vector<1x32xf32>
    %29 = vector.broadcast %28 : vector<1x32xf32> to vector<16x32xf32>
    %30 = arith.addf %27, %29 : vector<16x32xf32>
    %31 = arith.truncf %30 : vector<16x32xf32> to vector<16x32xbf16>
    %c0_14 = arith.constant 0 : index
    %c0_15 = arith.constant 0 : index
    %32 = vector.load %arg7[%c0_14, %c0_15] : memref<16x32xbf16, #tpu.memory_space<vmem>>, vector<16x32xbf16>
    tpu.vector_store %arg7[%c0_14, %c0_15], %31 {strides = array<i32>} : memref<16x32xbf16, #tpu.memory_space<vmem>>, vector<16x32xbf16>,
    return
  }
  func.func @transform_0(%arg0: i32, %arg1: i32) -> (i32, i32) {
    %c0_i32 = arith.constant 0 : i32
    %c0_i32_0 = arith.constant 0 : i32
    return %arg0, %c0_i32 : i32, i32
  }
  func.func @transform_1(%arg0: i32, %arg1: i32) -> (i32, i32) {
    %c0_i32 = arith.constant 0 : i32
    %c0_i32_0 = arith.constant 0 : i32
    %c0_i32_1 = arith.constant 0 : i32
    return %c0_i32, %c0_i32_0 : i32, i32
  }
  func.func @transform_2(%arg0: i32, %arg1: i32) -> (i32, i32) {
    %c0_i32 = arith.constant 0 : i32
    %c0_i32_0 = arith.constant 0 : i32
    %c0_i32_1 = arith.constant 0 : i32
    return %c0_i32, %c0_i32_0 : i32, i32
  }
  func.func @transform_3(%arg0: i32, %arg1: i32) -> (i32, i32) {
    %c0_i32 = arith.constant 0 : i32
    %c0_i32_0 = arith.constant 0 : i32
    return %c0_i32, %arg1 : i32, i32
  }
  func.func @transform_4(%arg0: i32, %arg1: i32) -> (i32, i32) {
    %c0_i32 = arith.constant 0 : i32
    %c0_i32_0 = arith.constant 0 : i32
    return %c0_i32, %arg1 : i32, i32
  }
  func.func @transform_5(%arg0: i32, %arg1: i32) -> (i32, i32) {
    %c0_i32 = arith.constant 0 : i32
    return %arg0, %arg1 : i32, i32
  }
}

module attributes {stable_mosaic.version = 11 : i64} {
  func.func @_linear_kernel(%arg0: i32, %arg1: i32, %arg2: memref<16x32xf32, #tpu.memory_space<vmem>>, %arg3: memref<32x64xbf16, #tpu.memory_space<vmem>>, %arg4: memref<1x64xf32, #tpu.memory_space<vmem>>, %arg5: memref<16x64xbf16, #tpu.memory_space<vmem>>) attributes {dimension_semantics = [#tpu.dimension_semantics<parallel>, #tpu.dimension_semantics<parallel>], iteration_bounds = array<i64: 1, 1>, scalar_prefetch = 0 : i64, scratch_operands = 0 : i64, tpu.core_type = #tpu.core_type<tc>, window_params = [{transform_indices = @transform_0, window_bounds = array<i64: 16, 32>}, {transform_indices = @transform_1, window_bounds = array<i64: 32, 64>}, {transform_indices = @transform_2, window_bounds = array<i64: 1, 64>}, {transform_indices = @transform_3, window_bounds = array<i64: 16, 64>}]} {
    %c0 = arith.constant 0 : index
    %c0_0 = arith.constant 0 : index
    %0 = vector.load %arg2[%c0, %c0_0] : memref<16x32xf32, #tpu.memory_space<vmem>>, vector<16x32xf32>
    %1 = arith.truncf %0 : vector<16x32xf32> to vector<16x32xbf16>
    %c0_1 = arith.constant 0 : index
    %c0_2 = arith.constant 0 : index
    %2 = vector.load %arg3[%c0_1, %c0_2] : memref<32x64xbf16, #tpu.memory_space<vmem>>, vector<32x64xbf16>
    %cst = arith.constant dense<0.000000e+00> : vector<16x64xf32>
    %3 = tpu.matmul %1, %2, %cst {dimension_numbers = #tpu.dot_dimension_numbers<[1], [0], [0], [1], [0, 0, 1, 1], [], []>} : vector<16x32xbf16>, vector<32x64xbf16>, vector<16x64xf32> -> vector<16x64xf32>
    %c0_3 = arith.constant 0 : index
    %c0_4 = arith.constant 0 : index
    %4 = vector.load %arg4[%c0_3, %c0_4] : memref<1x64xf32, #tpu.memory_space<vmem>>, vector<1x64xf32>
    %5 = vector.broadcast %4 : vector<1x64xf32> to vector<16x64xf32>
    %6 = arith.addf %3, %5 : vector<16x64xf32>
    %7 = arith.truncf %6 : vector<16x64xf32> to vector<16x64xbf16>
    %c0_5 = arith.constant 0 : index
    %c0_6 = arith.constant 0 : index
    %8 = vector.load %arg5[%c0_5, %c0_6] : memref<16x64xbf16, #tpu.memory_space<vmem>>, vector<16x64xbf16>
    tpu.vector_store %arg5[%c0_5, %c0_6], %7 {strides = array<i32>} : memref<16x64xbf16, #tpu.memory_space<vmem>>, vector<16x64xbf16>,
    return
  }
  func.func @transform_0(%arg0: i32, %arg1: i32) -> (i32, i32) {
    %c0_i32 = arith.constant 0 : i32
    %c0_i32_0 = arith.constant 0 : i32
    return %arg0, %c0_i32 : i32, i32
  }
  func.func @transform_1(%arg0: i32, %arg1: i32) -> (i32, i32) {
    %c0_i32 = arith.constant 0 : i32
    %c0_i32_0 = arith.constant 0 : i32
    return %c0_i32, %arg1 : i32, i32
  }
  func.func @transform_2(%arg0: i32, %arg1: i32) -> (i32, i32) {
    %c0_i32 = arith.constant 0 : i32
    %c0_i32_0 = arith.constant 0 : i32
    return %c0_i32, %arg1 : i32, i32
  }
  func.func @transform_3(%arg0: i32, %arg1: i32) -> (i32, i32) {
    %c0_i32 = arith.constant 0 : i32
    return %arg0, %arg1 : i32, i32
  }
}

module attributes {stable_mosaic.version = 11 : i64} {
  func.func @_cross_attn_kernel(%arg0: i32, %arg1: memref<1x8x32xbf16, #tpu.memory_space<vmem>>, %arg2: memref<1x8x64xbf16, #tpu.memory_space<vmem>>, %arg3: memref<1x8x8xf32, #tpu.memory_space<vmem>>, %arg4: memref<1x8x32xbf16, #tpu.memory_space<vmem>>) attributes {dimension_semantics = [#tpu.dimension_semantics<parallel>], iteration_bounds = array<i64: 2>, scalar_prefetch = 0 : i64, scratch_operands = 0 : i64, tpu.core_type = #tpu.core_type<tc>, window_params = [{transform_indices = @transform_0, window_bounds = array<i64: 1, 8, 32>}, {transform_indices = @transform_1, window_bounds = array<i64: 1, 8, 64>}, {transform_indices = @transform_2, window_bounds = array<i64: 1, 8, 8>}, {transform_indices = @transform_3, window_bounds = array<i64: 1, 8, 32>}]} {
    %c0 = arith.constant 0 : index
    %c0_0 = arith.constant 0 : index
    %c0_1 = arith.constant 0 : index
    %0 = vector.load %arg2[%c0, %c0_0, %c0_1] : memref<1x8x64xbf16, #tpu.memory_space<vmem>>, vector<1x8x64xbf16>
    %1 = vector.shape_cast %0 : vector<1x8x64xbf16> to vector<8x64xbf16>
    %c0_2 = arith.constant 0 : index
    %c0_3 = arith.constant 0 : index
    %c0_4 = arith.constant 0 : index
    %2 = vector.load %arg1[%c0_2, %c0_3, %c0_4] : memref<1x8x32xbf16, #tpu.memory_space<vmem>>, vector<1x8x32xbf16>
    %3 = vector.shape_cast %2 : vector<1x8x32xbf16> to vector<8x32xbf16>
    %4 = vector.extract_strided_slice %1 {offsets = [0, 0], sizes = [8, 32], strides = [1, 1]} : vector<8x64xbf16> to vector<8x32xbf16>
    %5 = vector.extract_strided_slice %1 {offsets = [0, 32], sizes = [8, 32], strides = [1, 1]} : vector<8x64xbf16> to vector<8x32xbf16>
    %c0_5 = arith.constant 0 : index
    %c0_6 = arith.constant 0 : index
    %c0_7 = arith.constant 0 : index
    %6 = vector.load %arg3[%c0_5, %c0_6, %c0_7] : memref<1x8x8xf32, #tpu.memory_space<vmem>>, vector<1x8x8xf32>
    %7 = vector.shape_cast %6 : vector<1x8x8xf32> to vector<8x8xf32>
    %8 = arith.extf %3 : vector<8x32xbf16> to vector<8x32xf32>
    %cst = arith.constant 0.353553385 : f32
    %9 = vector.broadcast %cst : f32 to vector<8x32xf32>
    %10 = arith.mulf %8, %9 : vector<8x32xf32>
    %11 = arith.truncf %10 : vector<8x32xf32> to vector<8x32xbf16>
    %12 = vector.extract_strided_slice %11 {offsets = [0, 0], sizes = [8, 8], strides = [1, 1]} : vector<8x32xbf16> to vector<8x8xbf16>
    %13 = vector.extract_strided_slice %4 {offsets = [0, 0], sizes = [8, 8], strides = [1, 1]} : vector<8x32xbf16> to vector<8x8xbf16>
    %cst_8 = arith.constant dense<0.000000e+00> : vector<8x8xf32>
    %14 = tpu.matmul %12, %13, %cst_8 {dimension_numbers = #tpu.dot_dimension_numbers<[1], [1], [0], [0], [0, 0, 1, 0], [], []>} : vector<8x8xbf16>, vector<8x8xbf16>, vector<8x8xf32> -> vector<8x8xf32>
    %15 = arith.addf %14, %7 : vector<8x8xf32>
    %cst_9 = arith.constant dense<0xFF800000> : vector<8xf32>
    %16 = vector.multi_reduction <maximumf>, %15, %cst_9 [1] : vector<8x8xf32> to vector<8xf32>
    %17 = vector.shape_cast %16 : vector<8xf32> to vector<8x1xf32>
    %18 = vector.broadcast %17 : vector<8x1xf32> to vector<8x8xf32>
    %19 = arith.subf %15, %18 : vector<8x8xf32>
    %20 = math.exp %19 : vector<8x8xf32>
    %cst_10 = arith.constant dense<0.000000e+00> : vector<8xf32>
    %21 = vector.multi_reduction <add>, %20, %cst_10 [1] : vector<8x8xf32> to vector<8xf32>
    %22 = vector.shape_cast %21 : vector<8xf32> to vector<8x1xf32>
    %23 = tpu.reciprocal %22 {approx = true} : vector<8x1xf32> -> vector<8x1xf32>
    %24 = vector.broadcast %23 : vector<8x1xf32> to vector<8x8xf32>
    %25 = arith.mulf %20, %24 : vector<8x8xf32>
    %26 = arith.truncf %25 : vector<8x8xf32> to vector<8x8xbf16>
    %27 = vector.extract_strided_slice %5 {offsets = [0, 0], sizes = [8, 8], strides = [1, 1]} : vector<8x32xbf16> to vector<8x8xbf16>
    %cst_11 = arith.constant dense<0.000000e+00> : vector<8x8xf32>
    %28 = tpu.matmul %26, %27, %cst_11 {dimension_numbers = #tpu.dot_dimension_numbers<[1], [0], [0], [1], [0, 0, 1, 1], [], []>} : vector<8x8xbf16>, vector<8x8xbf16>, vector<8x8xf32> -> vector<8x8xf32>
    %29 = arith.truncf %28 : vector<8x8xf32> to vector<8x8xbf16>
    %c0_12 = arith.constant 0 : index
    %c0_13 = arith.constant 0 : index
    %c0_14 = arith.constant 0 : index
    %30 = vector.load %arg4[%c0_12, %c0_13, %c0_14] : memref<1x8x32xbf16, #tpu.memory_space<vmem>>, vector<1x8x8xbf16>
    %31 = vector.shape_cast %30 : vector<1x8x8xbf16> to vector<8x8xbf16>
    %32 = vector.shape_cast %29 : vector<8x8xbf16> to vector<1x8x8xbf16>
    tpu.vector_store %arg4[%c0_12, %c0_13, %c0_14], %32 {strides = array<i32>} : memref<1x8x32xbf16, #tpu.memory_space<vmem>>, vector<1x8x8xbf16>,
    %33 = vector.extract_strided_slice %11 {offsets = [0, 8], sizes = [8, 8], strides = [1, 1]} : vector<8x32xbf16> to vector<8x8xbf16>
    %34 = vector.extract_strided_slice %4 {offsets = [0, 8], sizes = [8, 8], strides = [1, 1]} : vector<8x32xbf16> to vector<8x8xbf16>
    %cst_15 = arith.constant dense<0.000000e+00> : vector<8x8xf32>
    %35 = tpu.matmul %33, %34, %cst_15 {dimension_numbers = #tpu.dot_dimension_numbers<[1], [1], [0], [0], [0, 0, 1, 0], [], []>} : vector<8x8xbf16>, vector<8x8xbf16>, vector<8x8xf32> -> vector<8x8xf32>
    %36 = arith.addf %35, %7 : vector<8x8xf32>
    %cst_16 = arith.constant dense<0xFF800000> : vector<8xf32>
    %37 = vector.multi_reduction <maximumf>, %36, %cst_16 [1] : vector<8x8xf32> to vector<8xf32>
    %38 = vector.shape_cast %37 : vector<8xf32> to vector<8x1xf32>
    %39 = vector.broadcast %38 : vector<8x1xf32> to vector<8x8xf32>
    %40 = arith.subf %36, %39 : vector<8x8xf32>
    %41 = math.exp %40 : vector<8x8xf32>
    %cst_17 = arith.constant dense<0.000000e+00> : vector<8xf32>
    %42 = vector.multi_reduction <add>, %41, %cst_17 [1] : vector<8x8xf32> to vector<8xf32>
    %43 = vector.shape_cast %42 : vector<8xf32> to vector<8x1xf32>
    %44 = tpu.reciprocal %43 {approx = true} : vector<8x1xf32> -> vector<8x1xf32>
    %45 = vector.broadcast %44 : vector<8x1xf32> to vector<8x8xf32>
    %46 = arith.mulf %41, %45 : vector<8x8xf32>
    %47 = arith.truncf %46 : vector<8x8xf32> to vector<8x8xbf16>
    %48 = vector.extract_strided_slice %5 {offsets = [0, 8], sizes = [8, 8], strides = [1, 1]} : vector<8x32xbf16> to vector<8x8xbf16>
    %cst_18 = arith.constant dense<0.000000e+00> : vector<8x8xf32>
    %49 = tpu.matmul %47, %48, %cst_18 {dimension_numbers = #tpu.dot_dimension_numbers<[1], [0], [0], [1], [0, 0, 1, 1], [], []>} : vector<8x8xbf16>, vector<8x8xbf16>, vector<8x8xf32> -> vector<8x8xf32>
    %50 = arith.truncf %49 : vector<8x8xf32> to vector<8x8xbf16>
    %c0_19 = arith.constant 0 : index
    %c0_20 = arith.constant 0 : index
    %c8 = arith.constant 8 : index
    %51 = vector.load %arg4[%c0_19, %c0_20, %c8] : memref<1x8x32xbf16, #tpu.memory_space<vmem>>, vector<1x8x8xbf16>
    %52 = vector.shape_cast %51 : vector<1x8x8xbf16> to vector<8x8xbf16>
    %53 = vector.shape_cast %50 : vector<8x8xbf16> to vector<1x8x8xbf16>
    tpu.vector_store %arg4[%c0_19, %c0_20, %c8], %53 {strides = array<i32>} : memref<1x8x32xbf16, #tpu.memory_space<vmem>>, vector<1x8x8xbf16>,
    %54 = vector.extract_strided_slice %11 {offsets = [0, 16], sizes = [8, 8], strides = [1, 1]} : vector<8x32xbf16> to vector<8x8xbf16>
    %55 = vector.extract_strided_slice %4 {offsets = [0, 16], sizes = [8, 8], strides = [1, 1]} : vector<8x32xbf16> to vector<8x8xbf16>
    %cst_21 = arith.constant dense<0.000000e+00> : vector<8x8xf32>
    %56 = tpu.matmul %54, %55, %cst_21 {dimension_numbers = #tpu.dot_dimension_numbers<[1], [1], [0], [0], [0, 0, 1, 0], [], []>} : vector<8x8xbf16>, vector<8x8xbf16>, vector<8x8xf32> -> vector<8x8xf32>
    %57 = arith.addf %56, %7 : vector<8x8xf32>
    %cst_22 = arith.constant dense<0xFF800000> : vector<8xf32>
    %58 = vector.multi_reduction <maximumf>, %57, %cst_22 [1] : vector<8x8xf32> to vector<8xf32>
    %59 = vector.shape_cast %58 : vector<8xf32> to vector<8x1xf32>
    %60 = vector.broadcast %59 : vector<8x1xf32> to vector<8x8xf32>
    %61 = arith.subf %57, %60 : vector<8x8xf32>
    %62 = math.exp %61 : vector<8x8xf32>
    %cst_23 = arith.constant dense<0.000000e+00> : vector<8xf32>
    %63 = vector.multi_reduction <add>, %62, %cst_23 [1] : vector<8x8xf32> to vector<8xf32>
    %64 = vector.shape_cast %63 : vector<8xf32> to vector<8x1xf32>
    %65 = tpu.reciprocal %64 {approx = true} : vector<8x1xf32> -> vector<8x1xf32>
    %66 = vector.broadcast %65 : vector<8x1xf32> to vector<8x8xf32>
    %67 = arith.mulf %62, %66 : vector<8x8xf32>
    %68 = arith.truncf %67 : vector<8x8xf32> to vector<8x8xbf16>
    %69 = vector.extract_strided_slice %5 {offsets = [0, 16], sizes = [8, 8], strides = [1, 1]} : vector<8x32xbf16> to vector<8x8xbf16>
    %cst_24 = arith.constant dense<0.000000e+00> : vector<8x8xf32>
    %70 = tpu.matmul %68, %69, %cst_24 {dimension_numbers = #tpu.dot_dimension_numbers<[1], [0], [0], [1], [0, 0, 1, 1], [], []>} : vector<8x8xbf16>, vector<8x8xbf16>, vector<8x8xf32> -> vector<8x8xf32>
    %71 = arith.truncf %70 : vector<8x8xf32> to vector<8x8xbf16>
    %c0_25 = arith.constant 0 : index
    %c0_26 = arith.constant 0 : index
    %c16 = arith.constant 16 : index
    %72 = vector.load %arg4[%c0_25, %c0_26, %c16] : memref<1x8x32xbf16, #tpu.memory_space<vmem>>, vector<1x8x8xbf16>
    %73 = vector.shape_cast %72 : vector<1x8x8xbf16> to vector<8x8xbf16>
    %74 = vector.shape_cast %71 : vector<8x8xbf16> to vector<1x8x8xbf16>
    tpu.vector_store %arg4[%c0_25, %c0_26, %c16], %74 {strides = array<i32>} : memref<1x8x32xbf16, #tpu.memory_space<vmem>>, vector<1x8x8xbf16>,
    %75 = vector.extract_strided_slice %11 {offsets = [0, 24], sizes = [8, 8], strides = [1, 1]} : vector<8x32xbf16> to vector<8x8xbf16>
    %76 = vector.extract_strided_slice %4 {offsets = [0, 24], sizes = [8, 8], strides = [1, 1]} : vector<8x32xbf16> to vector<8x8xbf16>
    %cst_27 = arith.constant dense<0.000000e+00> : vector<8x8xf32>
    %77 = tpu.matmul %75, %76, %cst_27 {dimension_numbers = #tpu.dot_dimension_numbers<[1], [1], [0], [0], [0, 0, 1, 0], [], []>} : vector<8x8xbf16>, vector<8x8xbf16>, vector<8x8xf32> -> vector<8x8xf32>
    %78 = arith.addf %77, %7 : vector<8x8xf32>
    %cst_28 = arith.constant dense<0xFF800000> : vector<8xf32>
    %79 = vector.multi_reduction <maximumf>, %78, %cst_28 [1] : vector<8x8xf32> to vector<8xf32>
    %80 = vector.shape_cast %79 : vector<8xf32> to vector<8x1xf32>
    %81 = vector.broadcast %80 : vector<8x1xf32> to vector<8x8xf32>
    %82 = arith.subf %78, %81 : vector<8x8xf32>
    %83 = math.exp %82 : vector<8x8xf32>
    %cst_29 = arith.constant dense<0.000000e+00> : vector<8xf32>
    %84 = vector.multi_reduction <add>, %83, %cst_29 [1] : vector<8x8xf32> to vector<8xf32>
    %85 = vector.shape_cast %84 : vector<8xf32> to vector<8x1xf32>
    %86 = tpu.reciprocal %85 {approx = true} : vector<8x1xf32> -> vector<8x1xf32>
    %87 = vector.broadcast %86 : vector<8x1xf32> to vector<8x8xf32>
    %88 = arith.mulf %83, %87 : vector<8x8xf32>
    %89 = arith.truncf %88 : vector<8x8xf32> to vector<8x8xbf16>
    %90 = vector.extract_strided_slice %5 {offsets = [0, 24], sizes = [8, 8], strides = [1, 1]} : vector<8x32xbf16> to vector<8x8xbf16>
    %cst_30 = arith.constant dense<0.000000e+00> : vector<8x8xf32>
    %91 = tpu.matmul %89, %90, %cst_30 {dimension_numbers = #tpu.dot_dimension_numbers<[1], [0], [0], [1], [0, 0, 1, 1], [], []>} : vector<8x8xbf16>, vector<8x8xbf16>, vector<8x8xf32> -> vector<8x8xf32>
    %92 = arith.truncf %91 : vector<8x8xf32> to vector<8x8xbf16>
    %c0_31 = arith.constant 0 : index
    %c0_32 = arith.constant 0 : index
    %c24 = arith.constant 24 : index
    %93 = vector.load %arg4[%c0_31, %c0_32, %c24] : memref<1x8x32xbf16, #tpu.memory_space<vmem>>, vector<1x8x8xbf16>
    %94 = vector.shape_cast %93 : vector<1x8x8xbf16> to vector<8x8xbf16>
    %95 = vector.shape_cast %92 : vector<8x8xbf16> to vector<1x8x8xbf16>
    tpu.vector_store %arg4[%c0_31, %c0_32, %c24], %95 {strides = array<i32>} : memref<1x8x32xbf16, #tpu.memory_space<vmem>>, vector<1x8x8xbf16>,
    return
  }
  func.func @transform_0(%arg0: i32) -> (i32, i32, i32) {
    %c0_i32 = arith.constant 0 : i32
    %c0_i32_0 = arith.constant 0 : i32
    %c0_i32_1 = arith.constant 0 : i32
    return %arg0, %c0_i32, %c0_i32_0 : i32, i32, i32
  }
  func.func @transform_1(%arg0: i32) -> (i32, i32, i32) {
    %c0_i32 = arith.constant 0 : i32
    %c0_i32_0 = arith.constant 0 : i32
    %c0_i32_1 = arith.constant 0 : i32
    return %arg0, %c0_i32, %c0_i32_0 : i32, i32, i32
  }
  func.func @transform_2(%arg0: i32) -> (i32, i32, i32) {
    %c0_i32 = arith.constant 0 : i32
    %c0_i32_0 = arith.constant 0 : i32
    %c0_i32_1 = arith.constant 0 : i32
    return %arg0, %c0_i32, %c0_i32_0 : i32, i32, i32
  }
  func.func @transform_3(%arg0: i32) -> (i32, i32, i32) {
    %c0_i32 = arith.constant 0 : i32
    %c0_i32_0 = arith.constant 0 : i32
    %c0_i32_1 = arith.constant 0 : i32
    return %arg0, %c0_i32, %c0_i32_0 : i32, i32, i32
  }
}

module attributes {stable_mosaic.version = 11 : i64} {
  func.func @_ffn_kernel(%arg0: i32, %arg1: i32, %arg2: memref<16x32xf32, #tpu.memory_space<vmem>>, %arg3: memref<1x32xf32, #tpu.memory_space<vmem>>, %arg4: memref<1x32xf32, #tpu.memory_space<vmem>>, %arg5: memref<32x64xbf16, #tpu.memory_space<vmem>>, %arg6: memref<1x64xf32, #tpu.memory_space<vmem>>, %arg7: memref<64x32xbf16, #tpu.memory_space<vmem>>, %arg8: memref<1x32xf32, #tpu.memory_space<vmem>>, %arg9: memref<16x32xf32, #tpu.memory_space<vmem>>, %arg10: memref<16x32xbf16, #tpu.memory_space<vmem>>, %arg11: memref<16x32xf32, #tpu.memory_space<vmem>>) attributes {dimension_semantics = [#tpu.dimension_semantics<parallel>, #tpu.dimension_semantics<arbitrary>], iteration_bounds = array<i64: 1, 1>, scalar_prefetch = 0 : i64, scratch_operands = 2 : i64, tpu.core_type = #tpu.core_type<tc>, window_params = [{transform_indices = @transform_0, window_bounds = array<i64: 16, 32>}, {pipeline_mode = #tpu.pipeline_mode<synchronous>, transform_indices = @transform_1, window_bounds = array<i64: 1, 32>}, {pipeline_mode = #tpu.pipeline_mode<synchronous>, transform_indices = @transform_2, window_bounds = array<i64: 1, 32>}, {transform_indices = @transform_3, window_bounds = array<i64: 32, 64>}, {transform_indices = @transform_4, window_bounds = array<i64: 1, 64>}, {transform_indices = @transform_5, window_bounds = array<i64: 64, 32>}, {pipeline_mode = #tpu.pipeline_mode<synchronous>, transform_indices = @transform_6, window_bounds = array<i64: 1, 32>}, {transform_indices = @transform_7, window_bounds = array<i64: 16, 32>}]} {
    %c0_i32 = arith.constant 0 : i32
    %0 = arith.cmpi eq, %arg1, %c0_i32 : i32
    %1 = arith.extui %0 : i1 to i32
    %c0_i32_0 = arith.constant 0 : i32
    %2 = arith.cmpi ne, %1, %c0_i32_0 : i32
    scf.if %2 {
      %c0_16 = arith.constant 0 : index
      %c0_17 = arith.constant 0 : index
      %20 = vector.load %arg2[%c0_16, %c0_17] : memref<16x32xf32, #tpu.memory_space<vmem>>, vector<16x32xf32>
      %c0_18 = arith.constant 0 : index
      %c0_19 = arith.constant 0 : index
      %21 = vector.load %arg3[%c0_18, %c0_19] : memref<1x32xf32, #tpu.memory_space<vmem>>, vector<1x32xf32>
      %c0_20 = arith.constant 0 : index
      %c0_21 = arith.constant 0 : index
      %22 = vector.load %arg4[%c0_20, %c0_21] : memref<1x32xf32, #tpu.memory_space<vmem>>, vector<1x32xf32>
      %cst_22 = arith.constant dense<0.000000e+00> : vector<16xf32>
      %23 = vector.multi_reduction <add>, %20, %cst_22 [1] : vector<16x32xf32> to vector<16xf32>
      %24 = vector.shape_cast %23 : vector<16xf32> to vector<16x1xf32>
      %cst_23 = arith.constant 3.200000e+01 : f32
      %25 = vector.broadcast %cst_23 : f32 to vector<16x1xf32>
      %26 = arith.divf %24, %25 : vector<16x1xf32>
      %27 = vector.broadcast %26 : vector<16x1xf32> to vector<16x32xf32>
      %28 = arith.subf %20, %27 : vector<16x32xf32>
      %29 = arith.mulf %28, %28 : vector<16x32xf32>
      %cst_24 = arith.constant dense<0.000000e+00> : vector<16xf32>
      %30 = vector.multi_reduction <add>, %29, %cst_24 [1] : vector<16x32xf32> to vector<16xf32>
      %31 = vector.shape_cast %30 : vector<16xf32> to vector<16x1xf32>
      %cst_25 = arith.constant 3.200000e+01 : f32
      %32 = vector.broadcast %cst_25 : f32 to vector<16x1xf32>
      %33 = arith.divf %31, %32 : vector<16x1xf32>
      %34 = vector.broadcast %26 : vector<16x1xf32> to vector<16x32xf32>
      %35 = arith.subf %20, %34 : vector<16x32xf32>
      %cst_26 = arith.constant 9.99999997E-7 : f32
      %36 = vector.broadcast %cst_26 : f32 to vector<16x1xf32>
      %37 = arith.addf %33, %36 : vector<16x1xf32>
      %38 = math.rsqrt %37 : vector<16x1xf32>
      %39 = vector.broadcast %38 : vector<16x1xf32> to vector<16x32xf32>
      %40 = arith.mulf %35, %39 : vector<16x32xf32>
      %41 = vector.broadcast %21 : vector<1x32xf32> to vector<16x32xf32>
      %42 = arith.mulf %40, %41 : vector<16x32xf32>
      %43 = vector.broadcast %22 : vector<1x32xf32> to vector<16x32xf32>
      %44 = arith.addf %42, %43 : vector<16x32xf32>
      %45 = arith.truncf %44 : vector<16x32xf32> to vector<16x32xbf16>
      %c0_27 = arith.constant 0 : index
      %c0_28 = arith.constant 0 : index
      %46 = vector.load %arg10[%c0_27, %c0_28] : memref<16x32xbf16, #tpu.memory_space<vmem>>, vector<16x32xbf16>
      tpu.vector_store %arg10[%c0_27, %c0_28], %45 {strides = array<i32>} : memref<16x32xbf16, #tpu.memory_space<vmem>>, vector<16x32xbf16>,
      %cst_29 = arith.constant 0.000000e+00 : f32
      %47 = vector.broadcast %cst_29 : f32 to vector<16x32xf32>
      %c0_30 = arith.constant 0 : index
      %c0_31 = arith.constant 0 : index
      %48 = vector.load %arg11[%c0_30, %c0_31] : memref<16x32xf32, #tpu.memory_space<vmem>>, vector<16x32xf32>
      tpu.vector_store %arg11[%c0_30, %c0_31], %47 {strides = array<i32>} : memref<16x32xf32, #tpu.memory_space<vmem>>, vector<16x32xf32>,
    } else {
    }
    %c0 = arith.constant 0 : index
    %c0_1 = arith.constant 0 : index
    %3 = vector.load %arg10[%c0, %c0_1] : memref<16x32xbf16, #tpu.memory_space<vmem>>, vector<16x32xbf16>
    %c0_2 = arith.constant 0 : index
    %c0_3 = arith.constant 0 : index
    %4 = vector.load %arg5[%c0_2, %c0_3] : memref<32x64xbf16, #tpu.memory_space<vmem>>, vector<32x64xbf16>
    %cst = arith.constant dense<0.000000e+00> : vector<16x64xf32>
    %5 = tpu.matmul %3, %4, %cst {dimension_numbers = #tpu.dot_dimension_numbers<[1], [0], [0], [1], [0, 0, 1, 1], [], []>} : vector<16x32xbf16>, vector<32x64xbf16>, vector<16x64xf32> -> vector<16x64xf32>
    %c0_4 = arith.constant 0 : index
    %c0_5 = arith.constant 0 : index
    %6 = vector.load %arg6[%c0_4, %c0_5] : memref<1x64xf32, #tpu.memory_space<vmem>>, vector<1x64xf32>
    %7 = vector.broadcast %6 : vector<1x64xf32> to vector<16x64xf32>
    %8 = arith.addf %5, %7 : vector<16x64xf32>
    %cst_6 = arith.constant 0.000000e+00 : f32
    %9 = vector.broadcast %cst_6 : f32 to vector<16x64xf32>
    %10 = arith.maximumf %8, %9 : vector<16x64xf32>
    %11 = arith.truncf %10 : vector<16x64xf32> to vector<16x64xbf16>
    %c0_7 = arith.constant 0 : index
    %c0_8 = arith.constant 0 : index
    %12 = vector.load %arg11[%c0_7, %c0_8] : memref<16x32xf32, #tpu.memory_space<vmem>>, vector<16x32xf32>
    %c0_9 = arith.constant 0 : index
    %c0_10 = arith.constant 0 : index
    %13 = vector.load %arg7[%c0_9, %c0_10] : memref<64x32xbf16, #tpu.memory_space<vmem>>, vector<64x32xbf16>
    %cst_11 = arith.constant dense<0.000000e+00> : vector<16x32xf32>
    %14 = tpu.matmul %11, %13, %cst_11 {dimension_numbers = #tpu.dot_dimension_numbers<[1], [0], [0], [1], [0, 0, 1, 1], [], []>} : vector<16x64xbf16>, vector<64x32xbf16>, vector<16x32xf32> -> vector<16x32xf32>
    %15 = arith.addf %12, %14 : vector<16x32xf32>
    %c0_12 = arith.constant 0 : index
    %c0_13 = arith.constant 0 : index
    %16 = vector.load %arg11[%c0_12, %c0_13] : memref<16x32xf32, #tpu.memory_space<vmem>>, vector<16x32xf32>
    tpu.vector_store %arg11[%c0_12, %c0_13], %15 {strides = array<i32>} : memref<16x32xf32, #tpu.memory_space<vmem>>, vector<16x32xf32>,
    %c0_i32_14 = arith.constant 0 : i32
    %17 = arith.cmpi eq, %arg1, %c0_i32_14 : i32
    %18 = arith.extui %17 : i1 to i32
    %c0_i32_15 = arith.constant 0 : i32
    %19 = arith.cmpi ne, %18, %c0_i32_15 : i32
    scf.if %19 {
      %c0_16 = arith.constant 0 : index
      %c0_17 = arith.constant 0 : index
      %20 = vector.load %arg11[%c0_16, %c0_17] : memref<16x32xf32, #tpu.memory_space<vmem>>, vector<16x32xf32>
      %c0_18 = arith.constant 0 : index
      %c0_19 = arith.constant 0 : index
      %21 = vector.load %arg8[%c0_18, %c0_19] : memref<1x32xf32, #tpu.memory_space<vmem>>, vector<1x32xf32>
      %22 = vector.broadcast %21 : vector<1x32xf32> to vector<16x32xf32>
      %23 = arith.addf %20, %22 : vector<16x32xf32>
      %c0_20 = arith.constant 0 : index
      %c0_21 = arith.constant 0 : index
      %24 = vector.load %arg2[%c0_20, %c0_21] : memref<16x32xf32, #tpu.memory_space<vmem>>, vector<16x32xf32>
      %25 = arith.addf %23, %24 : vector<16x32xf32>
      %c0_22 = arith.constant 0 : index
      %c0_23 = arith.constant 0 : index
      %26 = vector.load %arg9[%c0_22, %c0_23] : memref<16x32xf32, #tpu.memory_space<vmem>>, vector<16x32xf32>
      tpu.vector_store %arg9[%c0_22, %c0_23], %25 {strides = array<i32>} : memref<16x32xf32, #tpu.memory_space<vmem>>, vector<16x32xf32>,
    } else {
    }
    return
  }
  func.func @transform_0(%arg0: i32, %arg1: i32) -> (i32, i32) {
    %c0_i32 = arith.constant 0 : i32
    %c0_i32_0 = arith.constant 0 : i32
    return %arg0, %c0_i32 : i32, i32
  }
  func.func @transform_1(%arg0: i32, %arg1: i32) -> (i32, i32) {
    %c0_i32 = arith.constant 0 : i32
    %c0_i32_0 = arith.constant 0 : i32
    %c0_i32_1 = arith.constant 0 : i32
    return %c0_i32, %c0_i32_0 : i32, i32
  }
  func.func @transform_2(%arg0: i32, %arg1: i32) -> (i32, i32) {
    %c0_i32 = arith.constant 0 : i32
    %c0_i32_0 = arith.constant 0 : i32
    %c0_i32_1 = arith.constant 0 : i32
    return %c0_i32, %c0_i32_0 : i32, i32
  }
  func.func @transform_3(%arg0: i32, %arg1: i32) -> (i32, i32) {
    %c0_i32 = arith.constant 0 : i32
    %c0_i32_0 = arith.constant 0 : i32
    return %c0_i32, %arg1 : i32, i32
  }
  func.func @transform_4(%arg0: i32, %arg1: i32) -> (i32, i32) {
    %c0_i32 = arith.constant 0 : i32
    %c0_i32_0 = arith.constant 0 : i32
    return %c0_i32, %arg1 : i32, i32
  }
  func.func @transform_5(%arg0: i32, %arg1: i32) -> (i32, i32) {
    %c0_i32 = arith.constant 0 : i32
    %c0_i32_0 = arith.constant 0 : i32
    return %arg1, %c0_i32 : i32, i32
  }
  func.func @transform_6(%arg0: i32, %arg1: i32) -> (i32, i32) {
    %c0_i32 = arith.constant 0 : i32
    %c0_i32_0 = arith.constant 0 : i32
    %c0_i32_1 = arith.constant 0 : i32
    return %c0_i32, %c0_i32_0 : i32, i32
  }
  func.func @transform_7(%arg0: i32, %arg1: i32) -> (i32, i32) {
    %c0_i32 = arith.constant 0 : i32
    %c0_i32_0 = arith.constant 0 : i32
    return %arg0, %c0_i32 : i32, i32
  }
}

module attributes {stable_mosaic.version = 11 : i64} {
  func.func @_layernorm_kernel(%arg0: i32, %arg1: memref<16x32xf32, #tpu.memory_space<vmem>>, %arg2: memref<1x32xf32, #tpu.memory_space<vmem>>, %arg3: memref<1x32xf32, #tpu.memory_space<vmem>>, %arg4: memref<16x32xf32, #tpu.memory_space<vmem>>) attributes {dimension_semantics = [#tpu.dimension_semantics<parallel>], iteration_bounds = array<i64: 1>, scalar_prefetch = 0 : i64, scratch_operands = 0 : i64, tpu.core_type = #tpu.core_type<tc>, window_params = [{transform_indices = @transform_0, window_bounds = array<i64: 16, 32>}, {pipeline_mode = #tpu.pipeline_mode<synchronous>, transform_indices = @transform_1, window_bounds = array<i64: 1, 32>}, {pipeline_mode = #tpu.pipeline_mode<synchronous>, transform_indices = @transform_2, window_bounds = array<i64: 1, 32>}, {transform_indices = @transform_3, window_bounds = array<i64: 16, 32>}]} {
    %c0 = arith.constant 0 : index
    %c0_0 = arith.constant 0 : index
    %0 = vector.load %arg1[%c0, %c0_0] : memref<16x32xf32, #tpu.memory_space<vmem>>, vector<16x32xf32>
    %c0_1 = arith.constant 0 : index
    %c0_2 = arith.constant 0 : index
    %1 = vector.load %arg2[%c0_1, %c0_2] : memref<1x32xf32, #tpu.memory_space<vmem>>, vector<1x32xf32>
    %c0_3 = arith.constant 0 : index
    %c0_4 = arith.constant 0 : index
    %2 = vector.load %arg3[%c0_3, %c0_4] : memref<1x32xf32, #tpu.memory_space<vmem>>, vector<1x32xf32>
    %cst = arith.constant dense<0.000000e+00> : vector<16xf32>
    %3 = vector.multi_reduction <add>, %0, %cst [1] : vector<16x32xf32> to vector<16xf32>
    %4 = vector.shape_cast %3 : vector<16xf32> to vector<16x1xf32>
    %cst_5 = arith.constant 3.200000e+01 : f32
    %5 = vector.broadcast %cst_5 : f32 to vector<16x1xf32>
    %6 = arith.divf %4, %5 : vector<16x1xf32>
    %7 = vector.broadcast %6 : vector<16x1xf32> to vector<16x32xf32>
    %8 = arith.subf %0, %7 : vector<16x32xf32>
    %9 = arith.mulf %8, %8 : vector<16x32xf32>
    %cst_6 = arith.constant dense<0.000000e+00> : vector<16xf32>
    %10 = vector.multi_reduction <add>, %9, %cst_6 [1] : vector<16x32xf32> to vector<16xf32>
    %11 = vector.shape_cast %10 : vector<16xf32> to vector<16x1xf32>
    %cst_7 = arith.constant 3.200000e+01 : f32
    %12 = vector.broadcast %cst_7 : f32 to vector<16x1xf32>
    %13 = arith.divf %11, %12 : vector<16x1xf32>
    %14 = vector.broadcast %6 : vector<16x1xf32> to vector<16x32xf32>
    %15 = arith.subf %0, %14 : vector<16x32xf32>
    %cst_8 = arith.constant 9.99999997E-7 : f32
    %16 = vector.broadcast %cst_8 : f32 to vector<16x1xf32>
    %17 = arith.addf %13, %16 : vector<16x1xf32>
    %18 = math.rsqrt %17 : vector<16x1xf32>
    %19 = vector.broadcast %18 : vector<16x1xf32> to vector<16x32xf32>
    %20 = arith.mulf %15, %19 : vector<16x32xf32>
    %21 = vector.broadcast %1 : vector<1x32xf32> to vector<16x32xf32>
    %22 = arith.mulf %20, %21 : vector<16x32xf32>
    %23 = vector.broadcast %2 : vector<1x32xf32> to vector<16x32xf32>
    %24 = arith.addf %22, %23 : vector<16x32xf32>
    %c0_9 = arith.constant 0 : index
    %c0_10 = arith.constant 0 : index
    %25 = vector.load %arg4[%c0_9, %c0_10] : memref<16x32xf32, #tpu.memory_space<vmem>>, vector<16x32xf32>
    tpu.vector_store %arg4[%c0_9, %c0_10], %24 {strides = array<i32>} : memref<16x32xf32, #tpu.memory_space<vmem>>, vector<16x32xf32>,
    return
  }
  func.func @transform_0(%arg0: i32) -> (i32, i32) {
    %c0_i32 = arith.constant 0 : i32
    %c0_i32_0 = arith.constant 0 : i32
    return %arg0, %c0_i32 : i32, i32
  }
  func.func @transform_1(%arg0: i32) -> (i32, i32) {
    %c0_i32 = arith.constant 0 : i32
    %c0_i32_0 = arith.constant 0 : i32
    %c0_i32_1 = arith.constant 0 : i32
    return %c0_i32, %c0_i32_0 : i32, i32
  }
  func.func @transform_2(%arg0: i32) -> (i32, i32) {
    %c0_i32 = arith.constant 0 : i32
    %c0_i32_0 = arith.constant 0 : i32
    %c0_i32_1 = arith.constant 0 : i32
    return %c0_i32, %c0_i32_0 : i32, i32
  }
  func.func @transform_3(%arg0: i32) -> (i32, i32) {
    %c0_i32 = arith.constant 0 : i32
    %c0_i32_0 = arith.constant 0 : i32
    return %arg0, %c0_i32 : i32, i32
  }
}

</mosaic_0001>

<llo_original>
// kernel: decoder_forward.19
$region0: #{decoder_forward.19}
  #allocation0 [shape = 'u32[]', space=smem, size = 0x4, offset = 0x4, fixed_abs, tag = 'smem constant byte address 0x4 - core index']
  #allocation1 [shape = 'u32[144,128]{1,0:T(1,128)}', space=vmem, size = 0x12000, scoped, tag = 'internal scratch']
  #allocation2 [shape = 'f32[16,32]{1,0:T(8,128)}', space=vmem, size = 0x2000, scoped, tag = 'scratch operand']
  %s0 = inlined_call_operand.vmem [shape: bf16[16,32], index: 0, kind: input, shape index: {}]
  %s1 = inlined_call_operand.vmem [shape: bf16[32,32], index: 1, kind: input, shape index: {}]
  %s2 = inlined_call_operand.vmem [shape: f32[1,32], index: 2, kind: input, shape index: {}]
  %s3 = inlined_call_operand.vmem [shape: f32[16,32], index: 3, kind: input, shape index: {}, may-alias: {3,4}]
  %s4 = inlined_call_operand.vmem [shape: f32[16,32], index: 4, kind: output, shape index: {}, may-alias: {3,4}]
  %s5 = sld [smem:[#allocation0]]
  $region34: #{decoder_forward.19} parent=0
    _
  %s7 = ssub.s32 1, %s5
  %s8 = scalar_select 0, %s7, %s5
  // Predicated region
  $region2: #{decoder_forward.19} parent=0 // pred_check
    _
  $region3: #{decoder_forward.19} parent=0 // pred_check_branch
    %10 = sbr.rel (0) target = $region5
  $region4: #{decoder_forward.19} parent=0 // pred_region
    _
  $region5: #{decoder_forward.19} parent=0 // pred_fallthru
    _
  // Predicated region
  $region6: #{decoder_forward.19} parent=0 // pred_check
    _
  $region7: #{decoder_forward.19} parent=0 // pred_check_branch
    %12 = sbr.rel (0) target = $region9
  $region8: #{decoder_forward.19} parent=0 // pred_region
    _
  $region9: #{decoder_forward.19} parent=0 // pred_fallthru
    _
  // Predicated region
  $region10: #{decoder_forward.19} parent=0 // pred_check
    _
  $region11: #{decoder_forward.19} parent=0 // pred_check_branch
    %14 = sbr.rel (0) target = $region13
  $region12: #{decoder_forward.19} parent=0 // pred_region
    _
  $region13: #{decoder_forward.19} parent=0 // pred_fallthru
    _
  // Predicated region
  $region14: #{decoder_forward.19} parent=0 // pred_check
    _
  $region15: #{decoder_forward.19} parent=0 // pred_check_branch
    %16 = sbr.rel (0) target = $region17
  $region16: #{decoder_forward.19} parent=0 // pred_region
    _
  $region17: #{decoder_forward.19} parent=0 // pred_fallthru
    _
  %p18 = scmp.eq.s32.totalorder 0, 0
  // Predicated region
  $region18: #{decoder_forward.19} parent=0 // pred_check
    %p19 = pneg %p18
  $region19: #{decoder_forward.19} parent=0 // pred_check_branch
    %21 = sbr.rel (%p19) target = $region21
  $region20: #{decoder_forward.19} parent=0 // pred_region
    %vm22 = vcmask 261120
    %23 = vst.msk [vmem:[#allocation2] sm:$0xff] %vm22, 0.0
    %24 = vst.msk [vmem:[#allocation2 + $0x8] sm:$0xff] %vm22, 0.0
  $region21: #{decoder_forward.19} parent=0 // pred_fallthru
    _
  %v25 = vld [vmem:[#allocation2] sm:$0xff]
  %v26 = vld [vmem:[#allocation2 + $0x8] sm:$0xff]
  %v27 = vld [vmem:[%s0] sm:$0xf]
  %v28 = vld [vmem:[%s0 + $0x4] sm:$0xf]
  %v29 = vld [vmem:[%s1] sm:$0xf]
  %v30 = vld [vmem:[%s1 + $0x4] sm:$0xf]
  %v31 = vld [vmem:[%s1 + $0x8] sm:$0xf]
  %v32 = vld [vmem:[%s1 + $0xc] sm:$0xf]
  %v35 = vunpack.c.l.b16 %v27
  %v36 = vunpack.c.l.b16 %v28
  %v37 = vpack.c.b16 %v36, %v35
  %v42 = vunpack.c.l.b16 %v29
  %v43 = vunpack.c.l.b16 %v30
  %v44 = vunpack.c.l.b16 %v31
  %v45 = vunpack.c.l.b16 %v32
  %v46 = vpack.c.b16 %v43, %v42
  %v47 = vpack.c.b16 %v45, %v44
  %vm50 = vcmask 261120
  %v52 = vsel %vm50, %v37, 0
  %54 = vmatprep.subr.bf16.mxu0 0
  %55 = vmatpush1.bf16.msra.mxu0 %v46
  %56 = vmatprep.subr.bf16.mxu0 0
  %57 = vmatpush1.bf16.msra.mxu0 %v47
  %58 = vmatprep.subr.bf16.mxu0 0
  %59 = vmatpush1.bf16.msra.mxu0 0
  %60 = vmatprep.subr.bf16.mxu0 0
  %61 = vmatpush1.bf16.msra.mxu0 0
  %62 = vmatprep.subr.bf16.mxu0 0
  %63 = vmatpush1.bf16.msra.mxu0 0
  %64 = vmatprep.subr.bf16.mxu0 0
  %65 = vmatpush1.bf16.msra.mxu0 0
  %66 = vmatprep.subr.bf16.mxu0 0
  %67 = vmatpush1.bf16.msra.mxu0 0
  %68 = vmatprep.subr.bf16.mxu0 0
  %69 = vmatpush1.bf16.msra.mxu0 0
  %70 = vmatprep.subr.bf16.mxu0 0
  %71 = vmatpush1.bf16.msra.mxu0 0
  %72 = vmatprep.subr.bf16.mxu0 0
  %73 = vmatpush1.bf16.msra.mxu0 0
  %74 = vmatprep.subr.bf16.mxu0 0
  %75 = vmatpush1.bf16.msra.mxu0 0
  %76 = vmatprep.subr.bf16.mxu0 0
  %77 = vmatpush1.bf16.msra.mxu0 0
  %78 = vmatprep.subr.bf16.mxu0 0
  %79 = vmatpush1.bf16.msra.mxu0 0
  %80 = vmatprep.subr.bf16.mxu0 0
  %81 = vmatpush1.bf16.msra.mxu0 0
  %82 = vmatprep.subr.bf16.mxu0 0
  %83 = vmatpush1.bf16.msra.mxu0 0
  %84 = vmatprep.subr.bf16.mxu0 0
  %85 = vmatpush1.bf16.msra.mxu0 0
  %86 = vmatprep.mubr.bf16.mxu0 0
  %87 = vmatmul.mubr.bf16.gmra.mrb[0].mxu0 %v52
  %v88 = vpop.f32.mrb[0].mxu0
  %v89 = vadd.f32 0.0, %v88
  %v90 = vpop.f32.mrb[0].mxu0
  %v91 = vpop.f32.mrb[0].mxu0
  %v92 = vadd.f32 0.0, %v91
  %v93 = vpop.f32.mrb[0].mxu0
  %94 = vdwg.mxu0
  %v95 = vadd.f32 %v25, %v89
  %v96 = vadd.f32 %v26, %v92
  %97 = vst.msk [vmem:[#allocation2] sm:$0xff] %vm50, %v95
  %98 = vst.msk [vmem:[#allocation2 + $0x8] sm:$0xff] %vm50, %v96
  // Predicated region
  $region22: #{decoder_forward.19} parent=0 // pred_check
    %p99 = pneg %p18
  $region23: #{decoder_forward.19} parent=0 // pred_check_branch
    %101 = sbr.rel (%p99) target = $region25
  $region24: #{decoder_forward.19} parent=0 // pred_region
    %v102 = vld [vmem:[#allocation2] sm:$0xff]
    %v103 = vld [vmem:[#allocation2 + $0x8] sm:$0xff]
    %v104 = vld [vmem:[%s2] sm:$0x1]
    %v106 = vlaneseq
    %v107 = vshrl.u32 %v106, 7
    %v108 = vsub.s32 0, %v107
    %v109 = vrot.slane %v104, %v108
    %v111 = vadd.f32 %v102, %v109
    %v112 = vadd.f32 %v103, %v109
    %v113 = vld [vmem:[%s3] sm:$0xff]
    %v114 = vld [vmem:[%s3 + $0x8] sm:$0xff]
    %v115 = vadd.f32 %v111, %v113
    %v116 = vadd.f32 %v112, %v114
    %117 = vst.msk [vmem:[%s4] sm:$0xff] %vm50, %v115
    %118 = vst.msk [vmem:[%s4 + $0x8] sm:$0xff] %vm50, %v116
  $region25: #{decoder_forward.19} parent=0 // pred_fallthru
    _
  // Predicated region
  $region26: #{decoder_forward.19} parent=0 // pred_check
    _
  $region27: #{decoder_forward.19} parent=0 // pred_check_branch
    %120 = sbr.rel (0) target = $region29
  $region28: #{decoder_forward.19} parent=0 // pred_region
    _
  $region29: #{decoder_forward.19} parent=0 // pred_fallthru
    _
  // Predicated region
  $region30: #{decoder_forward.19} parent=0 // pred_check
    _
  $region31: #{decoder_forward.19} parent=0 // pred_check_branch
    %122 = sbr.rel (0) target = $region33
  $region32: #{decoder_forward.19} parent=0 // pred_region
    _
  $region33: #{decoder_forward.19} parent=0 // pred_fallthru
    _

// kernel: decoder_forward.17
$region0: #{decoder_forward.17}
  #allocation0 [shape = 'u32[]', space=smem, size = 0x4, offset = 0x4, fixed_abs, tag = 'smem constant byte address 0x4 - core index']
  #allocation1 [shape = 'u32[144,128]{1,0:T(1,128)}', space=vmem, size = 0x12000, scoped, tag = 'internal scratch']
  %s0 = inlined_call_operand.vmem [shape: f32[16,32], index: 0, kind: input, shape index: {}]
  %s1 = inlined_call_operand.vmem [shape: f32[1,32], index: 1, kind: input, shape index: {}]
  %s2 = inlined_call_operand.vmem [shape: f32[1,32], index: 2, kind: input, shape index: {}]
  %s3 = inlined_call_operand.vmem [shape: bf16[32,96], index: 3, kind: input, shape index: {}]
  %s4 = inlined_call_operand.vmem [shape: f32[1,96], index: 4, kind: input, shape index: {}]
  %s5 = inlined_call_operand.vmem [shape: bf16[16,96], index: 5, kind: output, shape index: {}]
  %s6 = sld [smem:[#allocation0]]
  $region30: #{decoder_forward.17} parent=0
    _
  %s8 = ssub.s32 1, %s6
  %s9 = scalar_select 0, %s8, %s6
  // Predicated region
  $region2: #{decoder_forward.17} parent=0 // pred_check
    _
  $region3: #{decoder_forward.17} parent=0 // pred_check_branch
    %11 = sbr.rel (0) target = $region5
  $region4: #{decoder_forward.17} parent=0 // pred_region
    _
  $region5: #{decoder_forward.17} parent=0 // pred_fallthru
    _
  // Predicated region
  $region6: #{decoder_forward.17} parent=0 // pred_check
    _
  $region7: #{decoder_forward.17} parent=0 // pred_check_branch
    %13 = sbr.rel (0) target = $region9
  $region8: #{decoder_forward.17} parent=0 // pred_region
    _
  $region9: #{decoder_forward.17} parent=0 // pred_fallthru
    _
  // Predicated region
  $region10: #{decoder_forward.17} parent=0 // pred_check
    _
  $region11: #{decoder_forward.17} parent=0 // pred_check_branch
    %15 = sbr.rel (0) target = $region13
  $region12: #{decoder_forward.17} parent=0 // pred_region
    _
  $region13: #{decoder_forward.17} parent=0 // pred_fallthru
    _
  // Predicated region
  $region14: #{decoder_forward.17} parent=0 // pred_check
    _
  $region15: #{decoder_forward.17} parent=0 // pred_check_branch
    %17 = sbr.rel (0) target = $region17
  $region16: #{decoder_forward.17} parent=0 // pred_region
    _
  $region17: #{decoder_forward.17} parent=0 // pred_fallthru
    _
  // Predicated region
  $region18: #{decoder_forward.17} parent=0 // pred_check
    _
  $region19: #{decoder_forward.17} parent=0 // pred_check_branch
    %19 = sbr.rel (0) target = $region21
  $region20: #{decoder_forward.17} parent=0 // pred_region
    _
  $region21: #{decoder_forward.17} parent=0 // pred_fallthru
    _
  %v21 = vld [vmem:[%s0] sm:$0xff]
  %v22 = vld [vmem:[%s0 + $0x8] sm:$0xff]
  %v23 = vld [vmem:[%s1] sm:$0x1]
  %v24 = vld [vmem:[%s2] sm:$0x1]
  %vm25 = vcmask 261120
  %v26 = vsel %vm25, %v21, 0.0
  %27 = vadd.xlane.f32.xlu0 %v26
  %v28 = vpop.xlane.xlu0 %27
  %v29 = vsel %vm25, %v22, 0.0
  %30 = vadd.xlane.f32.xlu0 %v29
  %v31 = vpop.xlane.xlu0 %30
  %v32 = vrcp.pop 32.0
  %v33 = vmul.f32 %v28, %v32
  %v34 = vmul.f32 %v31, %v32
  %v35 = vsub.f32 %v21, %v33
  %v36 = vsub.f32 %v22, %v34
  %v37 = vmul.f32 %v35, %v35
  %v38 = vmul.f32 %v36, %v36
  %v39 = vsel %vm25, %v37, 0.0
  %40 = vadd.xlane.f32.xlu0 %v39
  %v41 = vpop.xlane.xlu0 %40
  %v42 = vsel %vm25, %v38, 0.0
  %43 = vadd.xlane.f32.xlu0 %v42
  %v44 = vpop.xlane.xlu0 %43
  %v45 = vmul.f32 %v41, %v32
  %v46 = vmul.f32 %v44, %v32
  %v47 = vadd.f32 %v45, 1e-06
  %v48 = vadd.f32 %v46, 1e-06
  %v49 = vrsqrt.pop %v47
  %v50 = vrsqrt.pop %v48
  %v51 = vmul.f32 %v35, %v49
  %v52 = vmul.f32 %v36, %v50
  %v54 = vlaneseq
  %v55 = vshrl.u32 %v54, 7
  %v56 = vsub.s32 0, %v55
  %v57 = vrot.slane %v23, %v56
  %v59 = vmul.f32 %v51, %v57
  %v60 = vmul.f32 %v52, %v57
  %v62 = vlaneseq
  %v63 = vshrl.u32 %v62, 7
  %v64 = vsub.s32 0, %v63
  %v65 = vrot.slane %v24, %v64
  %v67 = vadd.f32 %v59, %v65
  %v68 = vadd.f32 %v60, %v65
  %v69 = vpack.c.bf16 %v68, %v67
  %v70 = vld [vmem:[%s3] sm:$0xf]
  %v71 = vld [vmem:[%s3 + $0x4] sm:$0xf]
  %v72 = vld [vmem:[%s3 + $0x8] sm:$0xf]
  %v73 = vld [vmem:[%s3 + $0xc] sm:$0xf]
  %v74 = vld [vmem:[%s4] sm:$0x1]
  %v76 = vlaneseq
  %v77 = vshrl.u32 %v76, 7
  %v78 = vsub.s32 0, %v77
  %v79 = vrot.slane %v74, %v78
  %v85 = vunpack.c.l.b16 %v70
  %v86 = vunpack.c.l.b16 %v71
  %v87 = vunpack.c.l.b16 %v72
  %v88 = vunpack.c.l.b16 %v73
  %v89 = vpack.c.b16 %v86, %v85
  %v90 = vpack.c.b16 %v88, %v87
  %v94 = vsel %vm25, %v69, 0
  %96 = vmatprep.subr.bf16.mxu0 0
  %97 = vmatpush1.bf16.msra.mxu0 %v89
  %98 = vmatprep.subr.bf16.mxu0 0
  %99 = vmatpush1.bf16.msra.mxu0 %v90
  %100 = vmatprep.subr.bf16.mxu0 0
  %101 = vmatpush1.bf16.msra.mxu0 0
  %102 = vmatprep.subr.bf16.mxu0 0
  %103 = vmatpush1.bf16.msra.mxu0 0
  %104 = vmatprep.subr.bf16.mxu0 0
  %105 = vmatpush1.bf16.msra.mxu0 0
  %106 = vmatprep.subr.bf16.mxu0 0
  %107 = vmatpush1.bf16.msra.mxu0 0
  %108 = vmatprep.subr.bf16.mxu0 0
  %109 = vmatpush1.bf16.msra.mxu0 0
  %110 = vmatprep.subr.bf16.mxu0 0
  %111 = vmatpush1.bf16.msra.mxu0 0
  %112 = vmatprep.subr.bf16.mxu0 0
  %113 = vmatpush1.bf16.msra.mxu0 0
  %114 = vmatprep.subr.bf16.mxu0 0
  %115 = vmatpush1.bf16.msra.mxu0 0
  %116 = vmatprep.subr.bf16.mxu0 0
  %117 = vmatpush1.bf16.msra.mxu0 0
  %118 = vmatprep.subr.bf16.mxu0 0
  %119 = vmatpush1.bf16.msra.mxu0 0
  %120 = vmatprep.subr.bf16.mxu0 0
  %121 = vmatpush1.bf16.msra.mxu0 0
  %122 = vmatprep.subr.bf16.mxu0 0
  %123 = vmatpush1.bf16.msra.mxu0 0
  %124 = vmatprep.subr.bf16.mxu0 0
  %125 = vmatpush1.bf16.msra.mxu0 0
  %126 = vmatprep.subr.bf16.mxu0 0
  %127 = vmatpush1.bf16.msra.mxu0 0
  %128 = vmatprep.mubr.bf16.mxu0 0
  %129 = vmatmul.mubr.bf16.gmra.mrb[0].mxu0 %v94
  %v130 = vpop.f32.mrb[0].mxu0
  %v131 = vadd.f32 %v79, %v130
  %v132 = vpop.f32.mrb[0].mxu0
  %v133 = vpop.f32.mrb[0].mxu0
  %v134 = vadd.f32 %v79, %v133
  %v135 = vpop.f32.mrb[0].mxu0
  %136 = vdwg.mxu0
  %v137 = vpack.c.bf16 %v134, %v131
  %v139 = vunpack.c.l.b16 %v137
  %v140 = vunpack.c.h.b16 %v137
  %v141 = vpack.c.b16 %v139, %v139
  %v142 = vpack.c.b16 %v140, %v140
  %vm145 = vcmask 781312
  %146 = vst.msk [vmem:[%s5] sm:$0xf] %vm145, %v141
  %147 = vst.msk [vmem:[%s5 + $0x4] sm:$0xf] %vm145, %v142
  // Predicated region
  $region22: #{decoder_forward.17} parent=0 // pred_check
    _
  $region23: #{decoder_forward.17} parent=0 // pred_check_branch
    %149 = sbr.rel (0) target = $region25
  $region24: #{decoder_forward.17} parent=0 // pred_region
    _
  $region25: #{decoder_forward.17} parent=0 // pred_fallthru
    _
  // Predicated region
  $region26: #{decoder_forward.17} parent=0 // pred_check
    _
  $region27: #{decoder_forward.17} parent=0 // pred_check_branch
    %151 = sbr.rel (0) target = $region29
  $region28: #{decoder_forward.17} parent=0 // pred_region
    _
  $region29: #{decoder_forward.17} parent=0 // pred_fallthru
    _

// kernel: decoder_forward.18
$region0: #{decoder_forward.18}
  #allocation0 [shape = 'u32[]', space=smem, size = 0x4, offset = 0x4, fixed_abs, tag = 'smem constant byte address 0x4 - core index']
  #allocation1 [shape = 'u32[144,128]{1,0:T(1,128)}', space=vmem, size = 0x12000, scoped, tag = 'internal scratch']
  %s0 = inlined_call_operand.vmem [shape: bf16[2,8,96], index: 0, kind: input, shape index: {}]
  %s1 = inlined_call_operand.vmem [shape: f32[2,8,8], index: 1, kind: input, shape index: {}]
  %s2 = inlined_call_operand.vmem [shape: bf16[2,8,32], index: 2, kind: output, shape index: {}]
  %s3 = sld [smem:[#allocation0]]
  $region41: #{decoder_forward.18} parent=0
    _
  %s5 = ssub.s32 1, %s3
  %s6 = scalar_select 0, %s5, %s3
  loop: start=0, step=1, limit=4
  $region2: #{decoder_forward.18} parent=0 // loop_pre_header
    _
  $region3: #{decoder_forward.18} parent=0 // loop_header
    %s8 = sphi 0, %s12
    %p9 = scmp.ge.s32.totalorder %s8, 4
    %s18 = sphi 0, %s20
    %s21 = sphi 0, %s18
    %s22 = sphi 0, %s21
    %s38 = sphi 0, %s22
    %s44 = sphi 0, %s46
    %s47 = sphi 0, %s44
    %s48 = sphi 0, %s47
    %s64 = sphi 0, %s48
    %s70 = sphi 0, %s72
    %s73 = sphi 0, %s70
    %s74 = sphi 0, %s73
    %s90 = sphi 0, %s74
  $region4: #{decoder_forward.18} parent=0 // loop_header_branch
    %11 = sbr.rel (%p9) target = $region8
  $region5: #{decoder_forward.18} parent=0 // loop_body
    %s13 = ssub.s32 %s8, 1
    %s14 = ssub.s32 %s8, 2
    %s15 = sadd.s32 %s8, 1
    %s16 = ssub.s32 %s8, %s15
    %p17 = scmp.eq.s32.totalorder %s16, 0
    %s19 = sadd.s32 %s18, 1
    %s20 = scalar_select %p17, %s18, %s19
    %p23 = pneg %p17
    %p24 = scmp.eq.s32.totalorder %s8, 1
    %p25 = por %p23, %p24
    %p26 = scmp.ne.s32.totalorder %s18, %s21
    %p27 = scmp.eq.s32.totalorder %s8, 0
    %p28 = por %p26, %p27
    %p29 = scmp.ne.s32.totalorder %s18, %s21
    %p30 = scmp.eq.s32.totalorder %s13, 1
    %p31 = por %p29, %p30
    %p32 = scmp.ne.s32.totalorder %s21, %s22
    %p33 = scmp.eq.s32.totalorder %s13, 0
    %p34 = por %p32, %p33
    %p35 = scmp.ne.s32.totalorder %s21, %s22
    %p36 = scmp.eq.s32.totalorder %s14, 1
    %p37 = por %p35, %p36
    %p39 = scmp.ne.s32.totalorder %s22, %s38
    %p40 = scmp.eq.s32.totalorder %s14, 0
    %p41 = por %p39, %p40
    %s42 = ssub.s32 %s8, %s15
    %p43 = scmp.eq.s32.totalorder %s42, 0
    %s45 = sadd.s32 %s44, 1
    %s46 = scalar_select %p43, %s44, %s45
    %p49 = pneg %p43
    %p50 = scmp.eq.s32.totalorder %s8, 1
    %p51 = por %p49, %p50
    %p52 = scmp.ne.s32.totalorder %s44, %s47
    %p53 = scmp.eq.s32.totalorder %s8, 0
    %p54 = por %p52, %p53
    %p55 = scmp.ne.s32.totalorder %s44, %s47
    %p56 = scmp.eq.s32.totalorder %s13, 1
    %p57 = por %p55, %p56
    %p58 = scmp.ne.s32.totalorder %s47, %s48
    %p59 = scmp.eq.s32.totalorder %s13, 0
    %p60 = por %p58, %p59
    %p61 = scmp.ne.s32.totalorder %s47, %s48
    %p62 = scmp.eq.s32.totalorder %s14, 1
    %p63 = por %p61, %p62
    %p65 = scmp.ne.s32.totalorder %s48, %s64
    %p66 = scmp.eq.s32.totalorder %s14, 0
    %p67 = por %p65, %p66
    %s68 = ssub.s32 %s8, %s15
    %p69 = scmp.eq.s32.totalorder %s68, 0
    %s71 = sadd.s32 %s70, 1
    %s72 = scalar_select %p69, %s70, %s71
    %p75 = pneg %p69
    %p76 = scmp.eq.s32.totalorder %s8, 1
    %p77 = por %p75, %p76
    %p78 = scmp.ne.s32.totalorder %s70, %s73
    %p79 = scmp.eq.s32.totalorder %s8, 0
    %p80 = por %p78, %p79
    %p81 = scmp.ne.s32.totalorder %s70, %s73
    %p82 = scmp.eq.s32.totalorder %s13, 1
    %p83 = por %p81, %p82
    %p84 = scmp.ne.s32.totalorder %s73, %s74
    %p85 = scmp.eq.s32.totalorder %s13, 0
    %p86 = por %p84, %p85
    %p87 = scmp.ne.s32.totalorder %s73, %s74
    %p88 = scmp.eq.s32.totalorder %s14, 1
    %p89 = por %p87, %p88
    %p91 = scmp.ne.s32.totalorder %s74, %s90
    %p92 = scmp.eq.s32.totalorder %s14, 0
    %p93 = por %p91, %p92
    %p94 = scmp.le.s32.totalorder 1, %s8
    %p95 = scmp.lt.s32.totalorder %s8, 3
    %p96 = pnand %p94, %p95
    %p97 = pneg %p96
    // Predicated region
    $region9: #{decoder_forward.18} parent=5 // pred_check
      _
    $region10: #{decoder_forward.18} parent=5 // pred_check_branch
      %99 = sbr.rel (%p96) target = $region12
    $region11: #{decoder_forward.18} parent=5 // pred_region
      %s100 = ssub.s32 %s8, 1
    $region12: #{decoder_forward.18} parent=5 // pred_fallthru
      _
    %p101 = scmp.lt.s32.totalorder %s8, 2
    // Predicated region
    $region13: #{decoder_forward.18} parent=5 // pred_check
      %p102 = pneg %p101
    $region14: #{decoder_forward.18} parent=5 // pred_check_branch
      %104 = sbr.rel (%p102) target = $region16
    $region15: #{decoder_forward.18} parent=5 // pred_region
      // Predicated region
      $region17: #{decoder_forward.18} parent=15 // pred_check
        %p105 = pneg %p28
      $region18: #{decoder_forward.18} parent=15 // pred_check_branch
        %107 = sbr.rel (%p105) target = $region20
      $region19: #{decoder_forward.18} parent=15 // pred_region
        %p108 = scmp.lt.s32.totalorder %s8, 1
        %s109 = scalar_select %p108, %s8, 1
        %s110 = smul.addr %s109, 4
        %s111 = scalar_lea.vmem %s0, %s110
      $region20: #{decoder_forward.18} parent=15 // pred_fallthru
        _
      // Predicated region
      $region21: #{decoder_forward.18} parent=15 // pred_check
        %p112 = pneg %p54
      $region22: #{decoder_forward.18} parent=15 // pred_check_branch
        %114 = sbr.rel (%p112) target = $region24
      $region23: #{decoder_forward.18} parent=15 // pred_region
        %p115 = scmp.lt.s32.totalorder %s8, 1
        %s116 = scalar_select %p115, %s8, 1
        %s117 = smul.addr %s116, 8
        %s118 = scalar_lea.vmem %s1, %s117
      $region24: #{decoder_forward.18} parent=15 // pred_fallthru
        _
    $region16: #{decoder_forward.18} parent=5 // pred_fallthru
      _
    %p119 = scmp.le.s32.totalorder 1, %s8
    %p120 = scmp.lt.s32.totalorder %s8, 3
    %p121 = pnand %p119, %p120
    %p122 = pneg %p121
    // Predicated region
    $region25: #{decoder_forward.18} parent=5 // pred_check
      _
    $region26: #{decoder_forward.18} parent=5 // pred_check_branch
      %124 = sbr.rel (%p121) target = $region28
    $region27: #{decoder_forward.18} parent=5 // pred_region
      %s125 = ssub.s32 %s8, 1
      %p126 = scmp.lt.s32.totalorder %s13, 1
      %s127 = scalar_select %p126, %s13, 1
      %s128 = smul.addr %s127, 4
      %s129 = scalar_lea.vmem %s0, %s128
      %p130 = pneg %p34
      %p131 = pneg %p31
      %p132 = scmp.lt.s32.totalorder %s13, 1
      %s133 = scalar_select %p132, %s13, 1
      %s134 = smul.addr %s133, 8
      %s135 = scalar_lea.vmem %s1, %s134
      %p136 = pneg %p60
      %p137 = pneg %p57
      %p138 = pneg %p86
      %p139 = pneg %p83
      %p140 = scmp.lt.s32.totalorder %s13, 1
      %s141 = scalar_select %p140, %s13, 1
      %s142 = smul.addr %s141, 4
      %s143 = scalar_lea.vmem %s2, %s142
      %p144 = scmp.lt.s32.totalorder %s13, 1
      %s145 = scalar_select %p144, %s13, 1
      %s146 = smul.addr %s145, 4
      %s147 = scalar_lea.vmem %s0, %s146
      %p148 = scmp.lt.s32.totalorder %s13, 1
      %s149 = scalar_select %p148, %s13, 1
      %s150 = smul.addr %s149, 8
      %s151 = scalar_lea.vmem %s1, %s150
      %p152 = scmp.lt.s32.totalorder %s13, 1
      %s153 = scalar_select %p152, %s13, 1
      %s154 = smul.addr %s153, 4
      %s155 = scalar_lea.vmem %s2, %s154
      %v157 = vld [vmem:[%s147] sm:$0xf]
      %v158 = vld [vmem:[%s151] sm:$0xff]
      %v159 = vunpack.c.l.bf16 %v157
      %v160 = vmul.f32 %v159, 0.35355338
      %v161 = vpack.c.bf16 %v160, %v160
      %v163 = vunpack.c.l.b16 %v157
      %v164 = vpack.c.b16 %v163, %v163
      %165 = vrot.lane.b32.xlu0 %v164, 96
      %v166 = vpop.permute.xlu0 %165
      %vm167 = vcmask 64512
      %v169 = vsel %vm167, %v161, 0
      %v172 = vsel %vm167, %v166, 0
      %174 = vmatprep.subr.bf16.mxu0 0
      %175 = vmatpush1.bf16.xpose.msra.mxu0 %v172
      %176 = vmatprep.subr.bf16.mxu0 0
      %177 = vmatpush1.bf16.xpose.msra.mxu0 0
      %178 = vmatprep.subr.bf16.mxu0 0
      %179 = vmatpush1.bf16.xpose.msra.mxu0 0
      %180 = vmatprep.subr.bf16.mxu0 0
      %181 = vmatpush1.bf16.xpose.msra.mxu0 0
      %182 = vmatprep.subr.bf16.mxu0 0
      %183 = vmatpush1.bf16.xpose.msra.mxu0 0
      %184 = vmatprep.subr.bf16.mxu0 0
      %185 = vmatpush1.bf16.xpose.msra.mxu0 0
      %186 = vmatprep.subr.bf16.mxu0 0
      %187 = vmatpush1.bf16.xpose.msra.mxu0 0
      %188 = vmatprep.subr.bf16.mxu0 0
      %189 = vmatpush1.bf16.xpose.msra.mxu0 0
      %190 = vmatprep.subr.bf16.mxu0 0
      %191 = vmatpush1.bf16.xpose.msra.mxu0 0
      %192 = vmatprep.subr.bf16.mxu0 0
      %193 = vmatpush1.bf16.xpose.msra.mxu0 0
      %194 = vmatprep.subr.bf16.mxu0 0
      %195 = vmatpush1.bf16.xpose.msra.mxu0 0
      %196 = vmatprep.subr.bf16.mxu0 0
      %197 = vmatpush1.bf16.xpose.msra.mxu0 0
      %198 = vmatprep.subr.bf16.mxu0 0
      %199 = vmatpush1.bf16.xpose.msra.mxu0 0
      %200 = vmatprep.subr.bf16.mxu0 0
      %201 = vmatpush1.bf16.xpose.msra.mxu0 0
      %202 = vmatprep.subr.bf16.mxu0 0
      %203 = vmatpush1.bf16.xpose.msra.mxu0 0
      %204 = vmatprep.subr.bf16.mxu0 0
      %205 = vmatpush1.bf16.xpose.msra.mxu0 0
      %206 = vmatprep.mubr.bf16.mxu0 0
      %207 = vmatmul.mubr.bf16.gmra.mrb[0].mxu0 %v169
      %v208 = vpop.f32.mrb[0].mxu0
      %v209 = vadd.f32 %v158, %v208
      %v210 = vpop.f32.mrb[0].mxu0
      %v211 = vpop.f32.mrb[0].mxu0
      %v212 = vpop.f32.mrb[0].mxu0
      %213 = vdwg.mxu0
      %v214 = vsel %vm167, %v209, -inf
      %215 = vmax.xlane.f32.xlu0 %v214
      %v216 = vpop.xlane.xlu0 %215
      %v217 = vsub.f32 %v209, %v216
      %v218 = vmul.f32 %v217, 1.442695
      %v219 = vpow.pop %v218
      %v220 = vsel %vm167, %v219, 0.0
      %221 = vadd.xlane.f32.xlu0 %v220
      %v222 = vpop.xlane.xlu0 %221
      %v223 = vrcp.pop %v222
      %v224 = vmul.f32 %v219, %v223
      %v225 = vpack.c.bf16 %v224, %v224
      %226 = vrot.lane.b32.xlu0 %v164, 64
      %v227 = vpop.permute.xlu0 %226
      %v229 = vsel %vm167, %v225, 0
      %vm231 = vcmask 1043456
      %v233 = vsel %vm231, %v227, 0
      %235 = vmatprep.subr.bf16.mxu0 0
      %236 = vmatpush1.bf16.msra.mxu0 %v233
      %237 = vmatprep.subr.bf16.mxu0 0
      %238 = vmatpush1.bf16.msra.mxu0 0
      %239 = vmatprep.subr.bf16.mxu0 0
      %240 = vmatpush1.bf16.msra.mxu0 0
      %241 = vmatprep.subr.bf16.mxu0 0
      %242 = vmatpush1.bf16.msra.mxu0 0
      %243 = vmatprep.subr.bf16.mxu0 0
      %244 = vmatpush1.bf16.msra.mxu0 0
      %245 = vmatprep.subr.bf16.mxu0 0
      %246 = vmatpush1.bf16.msra.mxu0 0
      %247 = vmatprep.subr.bf16.mxu0 0
      %248 = vmatpush1.bf16.msra.mxu0 0
      %249 = vmatprep.subr.bf16.mxu0 0
      %250 = vmatpush1.bf16.msra.mxu0 0
      %251 = vmatprep.subr.bf16.mxu0 0
      %252 = vmatpush1.bf16.msra.mxu0 0
      %253 = vmatprep.subr.bf16.mxu0 0
      %254 = vmatpush1.bf16.msra.mxu0 0
      %255 = vmatprep.subr.bf16.mxu0 0
      %256 = vmatpush1.bf16.msra.mxu0 0
      %257 = vmatprep.subr.bf16.mxu0 0
      %258 = vmatpush1.bf16.msra.mxu0 0
      %259 = vmatprep.subr.bf16.mxu0 0
      %260 = vmatpush1.bf16.msra.mxu0 0
      %261 = vmatprep.subr.bf16.mxu0 0
      %262 = vmatpush1.bf16.msra.mxu0 0
      %263 = vmatprep.subr.bf16.mxu0 0
      %264 = vmatpush1.bf16.msra.mxu0 0
      %265 = vmatprep.subr.bf16.mxu0 0
      %266 = vmatpush1.bf16.msra.mxu0 0
      %267 = vmatprep.mubr.bf16.mxu0 0
      %268 = vmatmul.mubr.bf16.gmra.mrb[0].mxu0 %v229
      %v269 = vpop.f32.mrb[0].mxu0
      %v270 = vadd.f32 0.0, %v269
      %v271 = vpop.f32.mrb[0].mxu0
      %v272 = vpop.f32.mrb[0].mxu0
      %v273 = vpop.f32.mrb[0].mxu0
      %274 = vdwg.mxu0
      %v275 = vpack.c.bf16 %v270, %v270
      %vm276 = vcmask 60416
      %277 = vst.msk [vmem:[%s155] sm:$0xf] %vm276, %v275
      %279 = vrot.lane.b32.xlu0 %v161, 120
      %v280 = vpop.permute.xlu0 %279
      %281 = vrot.lane.b32.xlu0 %v164, 88
      %v282 = vpop.permute.xlu0 %281
      %v284 = vsel %vm167, %v280, 0
      %v287 = vsel %vm167, %v282, 0
      %289 = vmatprep.subr.bf16.mxu0 0
      %290 = vmatpush1.bf16.xpose.msra.mxu0 %v287
      %291 = vmatprep.subr.bf16.mxu0 0
      %292 = vmatpush1.bf16.xpose.msra.mxu0 0
      %293 = vmatprep.subr.bf16.mxu0 0
      %294 = vmatpush1.bf16.xpose.msra.mxu0 0
      %295 = vmatprep.subr.bf16.mxu0 0
      %296 = vmatpush1.bf16.xpose.msra.mxu0 0
      %297 = vmatprep.subr.bf16.mxu0 0
      %298 = vmatpush1.bf16.xpose.msra.mxu0 0
      %299 = vmatprep.subr.bf16.mxu0 0
      %300 = vmatpush1.bf16.xpose.msra.mxu0 0
      %301 = vmatprep.subr.bf16.mxu0 0
      %302 = vmatpush1.bf16.xpose.msra.mxu0 0
      %303 = vmatprep.subr.bf16.mxu0 0
      %304 = vmatpush1.bf16.xpose.msra.mxu0 0
      %305 = vmatprep.subr.bf16.mxu0 0
      %306 = vmatpush1.bf16.xpose.msra.mxu0 0
      %307 = vmatprep.subr.bf16.mxu0 0
      %308 = vmatpush1.bf16.xpose.msra.mxu0 0
      %309 = vmatprep.subr.bf16.mxu0 0
      %310 = vmatpush1.bf16.xpose.msra.mxu0 0
      %311 = vmatprep.subr.bf16.mxu0 0
      %312 = vmatpush1.bf16.xpose.msra.mxu0 0
      %313 = vmatprep.subr.bf16.mxu0 0
      %314 = vmatpush1.bf16.xpose.msra.mxu0 0
      %315 = vmatprep.subr.bf16.mxu0 0
      %316 = vmatpush1.bf16.xpose.msra.mxu0 0
      %317 = vmatprep.subr.bf16.mxu0 0
      %318 = vmatpush1.bf16.xpose.msra.mxu0 0
      %319 = vmatprep.subr.bf16.mxu0 0
      %320 = vmatpush1.bf16.xpose.msra.mxu0 0
      %321 = vmatprep.mubr.bf16.mxu0 0
      %322 = vmatmul.mubr.bf16.gmra.mrb[0].mxu0 %v284
      %v323 = vpop.f32.mrb[0].mxu0
      %v324 = vadd.f32 %v158, %v323
      %v325 = vpop.f32.mrb[0].mxu0
      %v326 = vpop.f32.mrb[0].mxu0
      %v327 = vpop.f32.mrb[0].mxu0
      %328 = vdwg.mxu0
      %v329 = vsel %vm167, %v324, -inf
      %330 = vmax.xlane.f32.xlu0 %v329
      %v331 = vpop.xlane.xlu0 %330
      %v332 = vsub.f32 %v324, %v331
      %v333 = vmul.f32 %v332, 1.442695
      %v334 = vpow.pop %v333
      %v335 = vsel %vm167, %v334, 0.0
      %336 = vadd.xlane.f32.xlu0 %v335
      %v337 = vpop.xlane.xlu0 %336
      %v338 = vrcp.pop %v337
      %v339 = vmul.f32 %v334, %v338
      %v340 = vpack.c.bf16 %v339, %v339
      %341 = vrot.lane.b32.xlu0 %v164, 56
      %v342 = vpop.permute.xlu0 %341
      %v344 = vsel %vm167, %v340, 0
      %v347 = vsel %vm231, %v342, 0
      %349 = vmatprep.subr.bf16.mxu0 0
      %350 = vmatpush1.bf16.msra.mxu0 %v347
      %351 = vmatprep.subr.bf16.mxu0 0
      %352 = vmatpush1.bf16.msra.mxu0 0
      %353 = vmatprep.subr.bf16.mxu0 0
      %354 = vmatpush1.bf16.msra.mxu0 0
      %355 = vmatprep.subr.bf16.mxu0 0
      %356 = vmatpush1.bf16.msra.mxu0 0
      %357 = vmatprep.subr.bf16.mxu0 0
      %358 = vmatpush1.bf16.msra.mxu0 0
      %359 = vmatprep.subr.bf16.mxu0 0
      %360 = vmatpush1.bf16.msra.mxu0 0
      %361 = vmatprep.subr.bf16.mxu0 0
      %362 = vmatpush1.bf16.msra.mxu0 0
      %363 = vmatprep.subr.bf16.mxu0 0
      %364 = vmatpush1.bf16.msra.mxu0 0
      %365 = vmatprep.subr.bf16.mxu0 0
      %366 = vmatpush1.bf16.msra.mxu0 0
      %367 = vmatprep.subr.bf16.mxu0 0
      %368 = vmatpush1.bf16.msra.mxu0 0
      %369 = vmatprep.subr.bf16.mxu0 0
      %370 = vmatpush1.bf16.msra.mxu0 0
      %371 = vmatprep.subr.bf16.mxu0 0
      %372 = vmatpush1.bf16.msra.mxu0 0
      %373 = vmatprep.subr.bf16.mxu0 0
      %374 = vmatpush1.bf16.msra.mxu0 0
      %375 = vmatprep.subr.bf16.mxu0 0
      %376 = vmatpush1.bf16.msra.mxu0 0
      %377 = vmatprep.subr.bf16.mxu0 0
      %378 = vmatpush1.bf16.msra.mxu0 0
      %379 = vmatprep.subr.bf16.mxu0 0
      %380 = vmatpush1.bf16.msra.mxu0 0
      %381 = vmatprep.mubr.bf16.mxu0 0
      %382 = vmatmul.mubr.bf16.gmra.mrb[0].mxu0 %v344
      %v383 = vpop.f32.mrb[0].mxu0
      %v384 = vadd.f32 0.0, %v383
      %v385 = vpop.f32.mrb[0].mxu0
      %v386 = vpop.f32.mrb[0].mxu0
      %v387 = vpop.f32.mrb[0].mxu0
      %388 = vdwg.mxu0
      %v389 = vpack.c.bf16 %v384, %v384
      %v391 = vunpack.c.l.b16 %v389
      %v392 = vpack.c.b16 %v391, %v391
      %393 = vrot.lane.b32.xlu0 %v392, 8
      %v394 = vpop.permute.xlu0 %393
      %vm396 = vcmask 126016
      %397 = vst.msk [vmem:[%s155] sm:$0xf] %vm396, %v394
      %398 = vrot.lane.b32.xlu0 %v161, 112
      %v399 = vpop.permute.xlu0 %398
      %400 = vrot.lane.b32.xlu0 %v164, 80
      %v401 = vpop.permute.xlu0 %400
      %v403 = vsel %vm167, %v399, 0
      %v406 = vsel %vm167, %v401, 0
      %408 = vmatprep.subr.bf16.mxu0 0
      %409 = vmatpush1.bf16.xpose.msra.mxu0 %v406
      %410 = vmatprep.subr.bf16.mxu0 0
      %411 = vmatpush1.bf16.xpose.msra.mxu0 0
      %412 = vmatprep.subr.bf16.mxu0 0
      %413 = vmatpush1.bf16.xpose.msra.mxu0 0
      %414 = vmatprep.subr.bf16.mxu0 0
      %415 = vmatpush1.bf16.xpose.msra.mxu0 0
      %416 = vmatprep.subr.bf16.mxu0 0
      %417 = vmatpush1.bf16.xpose.msra.mxu0 0
      %418 = vmatprep.subr.bf16.mxu0 0
      %419 = vmatpush1.bf16.xpose.msra.mxu0 0
      %420 = vmatprep.subr.bf16.mxu0 0
      %421 = vmatpush1.bf16.xpose.msra.mxu0 0
      %422 = vmatprep.subr.bf16.mxu0 0
      %423 = vmatpush1.bf16.xpose.msra.mxu0 0
      %424 = vmatprep.subr.bf16.mxu0 0
      %425 = vmatpush1.bf16.xpose.msra.mxu0 0
      %426 = vmatprep.subr.bf16.mxu0 0
      %427 = vmatpush1.bf16.xpose.msra.mxu0 0
      %428 = vmatprep.subr.bf16.mxu0 0
      %429 = vmatpush1.bf16.xpose.msra.mxu0 0
      %430 = vmatprep.subr.bf16.mxu0 0
      %431 = vmatpush1.bf16.xpose.msra.mxu0 0
      %432 = vmatprep.subr.bf16.mxu0 0
      %433 = vmatpush1.bf16.xpose.msra.mxu0 0
      %434 = vmatprep.subr.bf16.mxu0 0
      %435 = vmatpush1.bf16.xpose.msra.mxu0 0
      %436 = vmatprep.subr.bf16.mxu0 0
      %437 = vmatpush1.bf16.xpose.msra.mxu0 0
      %438 = vmatprep.subr.bf16.mxu0 0
      %439 = vmatpush1.bf16.xpose.msra.mxu0 0
      %440 = vmatprep.mubr.bf16.mxu0 0
      %441 = vmatmul.mubr.bf16.gmra.mrb[0].mxu0 %v403
      %v442 = vpop.f32.mrb[0].mxu0
      %v443 = vadd.f32 %v158, %v442
      %v444 = vpop.f32.mrb[0].mxu0
      %v445 = vpop.f32.mrb[0].mxu0
      %v446 = vpop.f32.mrb[0].mxu0
      %447 = vdwg.mxu0
      %v448 = vsel %vm167, %v443, -inf
      %449 = vmax.xlane.f32.xlu0 %v448
      %v450 = vpop.xlane.xlu0 %449
      %v451 = vsub.f32 %v443, %v450
      %v452 = vmul.f32 %v451, 1.442695
      %v453 = vpow.pop %v452
      %v454 = vsel %vm167, %v453, 0.0
      %455 = vadd.xlane.f32.xlu0 %v454
      %v456 = vpop.xlane.xlu0 %455
      %v457 = vrcp.pop %v456
      %v458 = vmul.f32 %v453, %v457
      %v459 = vpack.c.bf16 %v458, %v458
      %460 = vrot.lane.b32.xlu0 %v164, 48
      %v461 = vpop.permute.xlu0 %460
      %v463 = vsel %vm167, %v459, 0
      %v466 = vsel %vm231, %v461, 0
      %468 = vmatprep.subr.bf16.mxu0 0
      %469 = vmatpush1.bf16.msra.mxu0 %v466
      %470 = vmatprep.subr.bf16.mxu0 0
      %471 = vmatpush1.bf16.msra.mxu0 0
      %472 = vmatprep.subr.bf16.mxu0 0
      %473 = vmatpush1.bf16.msra.mxu0 0
      %474 = vmatprep.subr.bf16.mxu0 0
      %475 = vmatpush1.bf16.msra.mxu0 0
      %476 = vmatprep.subr.bf16.mxu0 0
      %477 = vmatpush1.bf16.msra.mxu0 0
      %478 = vmatprep.subr.bf16.mxu0 0
      %479 = vmatpush1.bf16.msra.mxu0 0
      %480 = vmatprep.subr.bf16.mxu0 0
      %481 = vmatpush1.bf16.msra.mxu0 0
      %482 = vmatprep.subr.bf16.mxu0 0
      %483 = vmatpush1.bf16.msra.mxu0 0
      %484 = vmatprep.subr.bf16.mxu0 0
      %485 = vmatpush1.bf16.msra.mxu0 0
      %486 = vmatprep.subr.bf16.mxu0 0
      %487 = vmatpush1.bf16.msra.mxu0 0
      %488 = vmatprep.subr.bf16.mxu0 0
      %489 = vmatpush1.bf16.msra.mxu0 0
      %490 = vmatprep.subr.bf16.mxu0 0
      %491 = vmatpush1.bf16.msra.mxu0 0
      %492 = vmatprep.subr.bf16.mxu0 0
      %493 = vmatpush1.bf16.msra.mxu0 0
      %494 = vmatprep.subr.bf16.mxu0 0
      %495 = vmatpush1.bf16.msra.mxu0 0
      %496 = vmatprep.subr.bf16.mxu0 0
      %497 = vmatpush1.bf16.msra.mxu0 0
      %498 = vmatprep.subr.bf16.mxu0 0
      %499 = vmatpush1.bf16.msra.mxu0 0
      %500 = vmatprep.mubr.bf16.mxu0 0
      %501 = vmatmul.mubr.bf16.gmra.mrb[0].mxu0 %v463
      %v502 = vpop.f32.mrb[0].mxu0
      %v503 = vadd.f32 0.0, %v502
      %v504 = vpop.f32.mrb[0].mxu0
      %v505 = vpop.f32.mrb[0].mxu0
      %v506 = vpop.f32.mrb[0].mxu0
      %507 = vdwg.mxu0
      %v508 = vpack.c.bf16 %v503, %v503
      %v510 = vunpack.c.l.b16 %v508
      %v511 = vpack.c.b16 %v510, %v510
      %512 = vrot.lane.b32.xlu0 %v511, 16
      %v513 = vpop.permute.xlu0 %512
      %vm515 = vcmask 191616
      %516 = vst.msk [vmem:[%s155] sm:$0xf] %vm515, %v513
      %517 = vrot.lane.b32.xlu0 %v161, 104
      %v518 = vpop.permute.xlu0 %517
      %519 = vrot.lane.b32.xlu0 %v164, 72
      %v520 = vpop.permute.xlu0 %519
      %v522 = vsel %vm167, %v518, 0
      %v525 = vsel %vm167, %v520, 0
      %527 = vmatprep.subr.bf16.mxu0 0
      %528 = vmatpush1.bf16.xpose.msra.mxu0 %v525
      %529 = vmatprep.subr.bf16.mxu0 0
      %530 = vmatpush1.bf16.xpose.msra.mxu0 0
      %531 = vmatprep.subr.bf16.mxu0 0
      %532 = vmatpush1.bf16.xpose.msra.mxu0 0
      %533 = vmatprep.subr.bf16.mxu0 0
      %534 = vmatpush1.bf16.xpose.msra.mxu0 0
      %535 = vmatprep.subr.bf16.mxu0 0
      %536 = vmatpush1.bf16.xpose.msra.mxu0 0
      %537 = vmatprep.subr.bf16.mxu0 0
      %538 = vmatpush1.bf16.xpose.msra.mxu0 0
      %539 = vmatprep.subr.bf16.mxu0 0
      %540 = vmatpush1.bf16.xpose.msra.mxu0 0
      %541 = vmatprep.subr.bf16.mxu0 0
      %542 = vmatpush1.bf16.xpose.msra.mxu0 0
      %543 = vmatprep.subr.bf16.mxu0 0
      %544 = vmatpush1.bf16.xpose.msra.mxu0 0
      %545 = vmatprep.subr.bf16.mxu0 0
      %546 = vmatpush1.bf16.xpose.msra.mxu0 0
      %547 = vmatprep.subr.bf16.mxu0 0
      %548 = vmatpush1.bf16.xpose.msra.mxu0 0
      %549 = vmatprep.subr.bf16.mxu0 0
      %550 = vmatpush1.bf16.xpose.msra.mxu0 0
      %551 = vmatprep.subr.bf16.mxu0 0
      %552 = vmatpush1.bf16.xpose.msra.mxu0 0
      %553 = vmatprep.subr.bf16.mxu0 0
      %554 = vmatpush1.bf16.xpose.msra.mxu0 0
      %555 = vmatprep.subr.bf16.mxu0 0
      %556 = vmatpush1.bf16.xpose.msra.mxu0 0
      %557 = vmatprep.subr.bf16.mxu0 0
      %558 = vmatpush1.bf16.xpose.msra.mxu0 0
      %559 = vmatprep.mubr.bf16.mxu0 0
      %560 = vmatmul.mubr.bf16.gmra.mrb[0].mxu0 %v522
      %v561 = vpop.f32.mrb[0].mxu0
      %v562 = vadd.f32 %v158, %v561
      %v563 = vpop.f32.mrb[0].mxu0
      %v564 = vpop.f32.mrb[0].mxu0
      %v565 = vpop.f32.mrb[0].mxu0
      %566 = vdwg.mxu0
      %v567 = vsel %vm167, %v562, -inf
      %568 = vmax.xlane.f32.xlu0 %v567
      %v569 = vpop.xlane.xlu0 %568
      %v570 = vsub.f32 %v562, %v569
      %v571 = vmul.f32 %v570, 1.442695
      %v572 = vpow.pop %v571
      %v573 = vsel %vm167, %v572, 0.0
      %574 = vadd.xlane.f32.xlu0 %v573
      %v575 = vpop.xlane.xlu0 %574
      %v576 = vrcp.pop %v575
      %v577 = vmul.f32 %v572, %v576
      %v578 = vpack.c.bf16 %v577, %v577
      %579 = vrot.lane.b32.xlu0 %v164, 40
      %v580 = vpop.permute.xlu0 %579
      %v582 = vsel %vm167, %v578, 0
      %v585 = vsel %vm231, %v580, 0
      %587 = vmatprep.subr.bf16.mxu0 0
      %588 = vmatpush1.bf16.msra.mxu0 %v585
      %589 = vmatprep.subr.bf16.mxu0 0
      %590 = vmatpush1.bf16.msra.mxu0 0
      %591 = vmatprep.subr.bf16.mxu0 0
      %592 = vmatpush1.bf16.msra.mxu0 0
      %593 = vmatprep.subr.bf16.mxu0 0
      %594 = vmatpush1.bf16.msra.mxu0 0
      %595 = vmatprep.subr.bf16.mxu0 0
      %596 = vmatpush1.bf16.msra.mxu0 0
      %597 = vmatprep.subr.bf16.mxu0 0
      %598 = vmatpush1.bf16.msra.mxu0 0
      %599 = vmatprep.subr.bf16.mxu0 0
      %600 = vmatpush1.bf16.msra.mxu0 0
      %601 = vmatprep.subr.bf16.mxu0 0
      %602 = vmatpush1.bf16.msra.mxu0 0
      %603 = vmatprep.subr.bf16.mxu0 0
      %604 = vmatpush1.bf16.msra.mxu0 0
      %605 = vmatprep.subr.bf16.mxu0 0
      %606 = vmatpush1.bf16.msra.mxu0 0
      %607 = vmatprep.subr.bf16.mxu0 0
      %608 = vmatpush1.bf16.msra.mxu0 0
      %609 = vmatprep.subr.bf16.mxu0 0
      %610 = vmatpush1.bf16.msra.mxu0 0
      %611 = vmatprep.subr.bf16.mxu0 0
      %612 = vmatpush1.bf16.msra.mxu0 0
      %613 = vmatprep.subr.bf16.mxu0 0
      %614 = vmatpush1.bf16.msra.mxu0 0
      %615 = vmatprep.subr.bf16.mxu0 0
      %616 = vmatpush1.bf16.msra.mxu0 0
      %617 = vmatprep.subr.bf16.mxu0 0
      %618 = vmatpush1.bf16.msra.mxu0 0
      %619 = vmatprep.mubr.bf16.mxu0 0
      %620 = vmatmul.mubr.bf16.gmra.mrb[0].mxu0 %v582
      %v621 = vpop.f32.mrb[0].mxu0
      %v622 = vadd.f32 0.0, %v621
      %v623 = vpop.f32.mrb[0].mxu0
      %v624 = vpop.f32.mrb[0].mxu0
      %v625 = vpop.f32.mrb[0].mxu0
      %626 = vdwg.mxu0
      %v627 = vpack.c.bf16 %v622, %v622
      %v629 = vunpack.c.l.b16 %v627
      %v630 = vpack.c.b16 %v629, %v629
      %631 = vrot.lane.b32.xlu0 %v630, 24
      %v632 = vpop.permute.xlu0 %631
      %vm634 = vcmask 257216
      %635 = vst.msk [vmem:[%s155] sm:$0xf] %vm634, %v632
      %p636 = scmp.lt.s32.totalorder %s13, 1
      %s637 = scalar_select %p636, %s13, 1
      %s638 = smul.addr %s637, 4
      %s639 = scalar_lea.vmem %s2, %s638
      // Predicated region
      $region29: #{decoder_forward.18} parent=27 // pred_check
        %p640 = pneg %p83
      $region30: #{decoder_forward.18} parent=27 // pred_check_branch
        %642 = sbr.rel (%p640) target = $region32
      $region31: #{decoder_forward.18} parent=27 // pred_region
        _
      $region32: #{decoder_forward.18} parent=27 // pred_fallthru
        _
    $region28: #{decoder_forward.18} parent=5 // pred_fallthru
      _
    %p643 = scmp.le.s32.totalorder 2, %s8
    // Predicated region
    $region33: #{decoder_forward.18} parent=5 // pred_check
      %p644 = pneg %p643
    $region34: #{decoder_forward.18} parent=5 // pred_check_branch
      %646 = sbr.rel (%p644) target = $region36
    $region35: #{decoder_forward.18} parent=5 // pred_region
      %s647 = ssub.s32 %s8, 2
      // Predicated region
      $region37: #{decoder_forward.18} parent=35 // pred_check
        %p648 = pneg %p89
      $region38: #{decoder_forward.18} parent=35 // pred_check_branch
        %650 = sbr.rel (%p648) target = $region40
      $region39: #{decoder_forward.18} parent=35 // pred_region
        %p651 = scmp.lt.s32.totalorder %s14, 1
        %s652 = scalar_select %p651, %s14, 1
        %s653 = smul.addr %s652, 4
        %s654 = scalar_lea.vmem %s2, %s653
      $region40: #{decoder_forward.18} parent=35 // pred_fallthru
        _
    $region36: #{decoder_forward.18} parent=5 // pred_fallthru
      _
  $region6: #{decoder_forward.18} parent=0 // loop_footer
    %s12 = sadd.s32 1, %s8
  $region7: #{decoder_forward.18} parent=0 // loop_footer_branch
    %7 = sbr.rel target = $region3
  $region8: #{decoder_forward.18} parent=0 // loop_exit
    _

// kernel: decoder_forward.20
$region0: #{decoder_forward.20}
  #allocation0 [shape = 'u32[]', space=smem, size = 0x4, offset = 0x4, fixed_abs, tag = 'smem constant byte address 0x4 - core index']
  #allocation1 [shape = 'u32[144,128]{1,0:T(1,128)}', space=vmem, size = 0x12000, scoped, tag = 'internal scratch']
  %s0 = inlined_call_operand.vmem [shape: f32[16,32], index: 0, kind: input, shape index: {}]
  %s1 = inlined_call_operand.vmem [shape: f32[1,32], index: 1, kind: input, shape index: {}]
  %s2 = inlined_call_operand.vmem [shape: f32[1,32], index: 2, kind: input, shape index: {}]
  %s3 = inlined_call_operand.vmem [shape: bf16[32,32], index: 3, kind: input, shape index: {}]
  %s4 = inlined_call_operand.vmem [shape: f32[1,32], index: 4, kind: input, shape index: {}]
  %s5 = inlined_call_operand.vmem [shape: bf16[16,32], index: 5, kind: output, shape index: {}]
  %s6 = sld [smem:[#allocation0]]
  $region30: #{decoder_forward.20} parent=0
    _
  %s8 = ssub.s32 1, %s6
  %s9 = scalar_select 0, %s8, %s6
  // Predicated region
  $region2: #{decoder_forward.20} parent=0 // pred_check
    _
  $region3: #{decoder_forward.20} parent=0 // pred_check_branch
    %11 = sbr.rel (0) target = $region5
  $region4: #{decoder_forward.20} parent=0 // pred_region
    _
  $region5: #{decoder_forward.20} parent=0 // pred_fallthru
    _
  // Predicated region
  $region6: #{decoder_forward.20} parent=0 // pred_check
    _
  $region7: #{decoder_forward.20} parent=0 // pred_check_branch
    %13 = sbr.rel (0) target = $region9
  $region8: #{decoder_forward.20} parent=0 // pred_region
    _
  $region9: #{decoder_forward.20} parent=0 // pred_fallthru
    _
  // Predicated region
  $region10: #{decoder_forward.20} parent=0 // pred_check
    _
  $region11: #{decoder_forward.20} parent=0 // pred_check_branch
    %15 = sbr.rel (0) target = $region13
  $region12: #{decoder_forward.20} parent=0 // pred_region
    _
  $region13: #{decoder_forward.20} parent=0 // pred_fallthru
    _
  // Predicated region
  $region14: #{decoder_forward.20} parent=0 // pred_check
    _
  $region15: #{decoder_forward.20} parent=0 // pred_check_branch
    %17 = sbr.rel (0) target = $region17
  $region16: #{decoder_forward.20} parent=0 // pred_region
    _
  $region17: #{decoder_forward.20} parent=0 // pred_fallthru
    _
  // Predicated region
  $region18: #{decoder_forward.20} parent=0 // pred_check
    _
  $region19: #{decoder_forward.20} parent=0 // pred_check_branch
    %19 = sbr.rel (0) target = $region21
  $region20: #{decoder_forward.20} parent=0 // pred_region
    _
  $region21: #{decoder_forward.20} parent=0 // pred_fallthru
    _
  %v21 = vld [vmem:[%s0] sm:$0xff]
  %v22 = vld [vmem:[%s0 + $0x8] sm:$0xff]
  %v23 = vld [vmem:[%s1] sm:$0x1]
  %v24 = vld [vmem:[%s2] sm:$0x1]
  %vm25 = vcmask 261120
  %v26 = vsel %vm25, %v21, 0.0
  %27 = vadd.xlane.f32.xlu0 %v26
  %v28 = vpop.xlane.xlu0 %27
  %v29 = vsel %vm25, %v22, 0.0
  %30 = vadd.xlane.f32.xlu0 %v29
  %v31 = vpop.xlane.xlu0 %30
  %v32 = vrcp.pop 32.0
  %v33 = vmul.f32 %v28, %v32
  %v34 = vmul.f32 %v31, %v32
  %v35 = vsub.f32 %v21, %v33
  %v36 = vsub.f32 %v22, %v34
  %v37 = vmul.f32 %v35, %v35
  %v38 = vmul.f32 %v36, %v36
  %v39 = vsel %vm25, %v37, 0.0
  %40 = vadd.xlane.f32.xlu0 %v39
  %v41 = vpop.xlane.xlu0 %40
  %v42 = vsel %vm25, %v38, 0.0
  %43 = vadd.xlane.f32.xlu0 %v42
  %v44 = vpop.xlane.xlu0 %43
  %v45 = vmul.f32 %v41, %v32
  %v46 = vmul.f32 %v44, %v32
  %v47 = vadd.f32 %v45, 1e-06
  %v48 = vadd.f32 %v46, 1e-06
  %v49 = vrsqrt.pop %v47
  %v50 = vrsqrt.pop %v48
  %v51 = vmul.f32 %v35, %v49
  %v52 = vmul.f32 %v36, %v50
  %v54 = vlaneseq
  %v55 = vshrl.u32 %v54, 7
  %v56 = vsub.s32 0, %v55
  %v57 = vrot.slane %v23, %v56
  %v59 = vmul.f32 %v51, %v57
  %v60 = vmul.f32 %v52, %v57
  %v62 = vlaneseq
  %v63 = vshrl.u32 %v62, 7
  %v64 = vsub.s32 0, %v63
  %v65 = vrot.slane %v24, %v64
  %v67 = vadd.f32 %v59, %v65
  %v68 = vadd.f32 %v60, %v65
  %v69 = vpack.c.bf16 %v68, %v67
  %v70 = vld [vmem:[%s3] sm:$0xf]
  %v71 = vld [vmem:[%s3 + $0x4] sm:$0xf]
  %v72 = vld [vmem:[%s3 + $0x8] sm:$0xf]
  %v73 = vld [vmem:[%s3 + $0xc] sm:$0xf]
  %v74 = vld [vmem:[%s4] sm:$0x1]
  %v76 = vlaneseq
  %v77 = vshrl.u32 %v76, 7
  %v78 = vsub.s32 0, %v77
  %v79 = vrot.slane %v74, %v78
  %v85 = vunpack.c.l.b16 %v70
  %v86 = vunpack.c.l.b16 %v71
  %v87 = vunpack.c.l.b16 %v72
  %v88 = vunpack.c.l.b16 %v73
  %v89 = vpack.c.b16 %v86, %v85
  %v90 = vpack.c.b16 %v88, %v87
  %v94 = vsel %vm25, %v69, 0
  %96 = vmatprep.subr.bf16.mxu0 0
  %97 = vmatpush1.bf16.msra.mxu0 %v89
  %98 = vmatprep.subr.bf16.mxu0 0
  %99 = vmatpush1.bf16.msra.mxu0 %v90
  %100 = vmatprep.subr.bf16.mxu0 0
  %101 = vmatpush1.bf16.msra.mxu0 0
  %102 = vmatprep.subr.bf16.mxu0 0
  %103 = vmatpush1.bf16.msra.mxu0 0
  %104 = vmatprep.subr.bf16.mxu0 0
  %105 = vmatpush1.bf16.msra.mxu0 0
  %106 = vmatprep.subr.bf16.mxu0 0
  %107 = vmatpush1.bf16.msra.mxu0 0
  %108 = vmatprep.subr.bf16.mxu0 0
  %109 = vmatpush1.bf16.msra.mxu0 0
  %110 = vmatprep.subr.bf16.mxu0 0
  %111 = vmatpush1.bf16.msra.mxu0 0
  %112 = vmatprep.subr.bf16.mxu0 0
  %113 = vmatpush1.bf16.msra.mxu0 0
  %114 = vmatprep.subr.bf16.mxu0 0
  %115 = vmatpush1.bf16.msra.mxu0 0
  %116 = vmatprep.subr.bf16.mxu0 0
  %117 = vmatpush1.bf16.msra.mxu0 0
  %118 = vmatprep.subr.bf16.mxu0 0
  %119 = vmatpush1.bf16.msra.mxu0 0
  %120 = vmatprep.subr.bf16.mxu0 0
  %121 = vmatpush1.bf16.msra.mxu0 0
  %122 = vmatprep.subr.bf16.mxu0 0
  %123 = vmatpush1.bf16.msra.mxu0 0
  %124 = vmatprep.subr.bf16.mxu0 0
  %125 = vmatpush1.bf16.msra.mxu0 0
  %126 = vmatprep.subr.bf16.mxu0 0
  %127 = vmatpush1.bf16.msra.mxu0 0
  %128 = vmatprep.mubr.bf16.mxu0 0
  %129 = vmatmul.mubr.bf16.gmra.mrb[0].mxu0 %v94
  %v130 = vpop.f32.mrb[0].mxu0
  %v131 = vadd.f32 %v79, %v130
  %v132 = vpop.f32.mrb[0].mxu0
  %v133 = vpop.f32.mrb[0].mxu0
  %v134 = vadd.f32 %v79, %v133
  %v135 = vpop.f32.mrb[0].mxu0
  %136 = vdwg.mxu0
  %v137 = vpack.c.bf16 %v134, %v131
  %v139 = vunpack.c.l.b16 %v137
  %v140 = vunpack.c.h.b16 %v137
  %v141 = vpack.c.b16 %v139, %v139
  %v142 = vpack.c.b16 %v140, %v140
  %vm145 = vcmask 257024
  %146 = vst.msk [vmem:[%s5] sm:$0xf] %vm145, %v141
  %147 = vst.msk [vmem:[%s5 + $0x4] sm:$0xf] %vm145, %v142
  // Predicated region
  $region22: #{decoder_forward.20} parent=0 // pred_check
    _
  $region23: #{decoder_forward.20} parent=0 // pred_check_branch
    %149 = sbr.rel (0) target = $region25
  $region24: #{decoder_forward.20} parent=0 // pred_region
    _
  $region25: #{decoder_forward.20} parent=0 // pred_fallthru
    _
  // Predicated region
  $region26: #{decoder_forward.20} parent=0 // pred_check
    _
  $region27: #{decoder_forward.20} parent=0 // pred_check_branch
    %151 = sbr.rel (0) target = $region29
  $region28: #{decoder_forward.20} parent=0 // pred_region
    _
  $region29: #{decoder_forward.20} parent=0 // pred_fallthru
    _

// kernel: decoder_forward.21
$region0: #{decoder_forward.21}
  #allocation0 [shape = 'u32[]', space=smem, size = 0x4, offset = 0x4, fixed_abs, tag = 'smem constant byte address 0x4 - core index']
  #allocation1 [shape = 'u32[144,128]{1,0:T(1,128)}', space=vmem, size = 0x12000, scoped, tag = 'internal scratch']
  %s0 = inlined_call_operand.vmem [shape: f32[16,32], index: 0, kind: input, shape index: {}]
  %s1 = inlined_call_operand.vmem [shape: bf16[32,64], index: 1, kind: input, shape index: {}]
  %s2 = inlined_call_operand.vmem [shape: f32[1,64], index: 2, kind: input, shape index: {}]
  %s3 = inlined_call_operand.vmem [shape: bf16[16,64], index: 3, kind: output, shape index: {}]
  %s4 = sld [smem:[#allocation0]]
  $region22: #{decoder_forward.21} parent=0
    _
  %s6 = ssub.s32 1, %s4
  %s7 = scalar_select 0, %s6, %s4
  // Predicated region
  $region2: #{decoder_forward.21} parent=0 // pred_check
    _
  $region3: #{decoder_forward.21} parent=0 // pred_check_branch
    %9 = sbr.rel (0) target = $region5
  $region4: #{decoder_forward.21} parent=0 // pred_region
    _
  $region5: #{decoder_forward.21} parent=0 // pred_fallthru
    _
  // Predicated region
  $region6: #{decoder_forward.21} parent=0 // pred_check
    _
  $region7: #{decoder_forward.21} parent=0 // pred_check_branch
    %11 = sbr.rel (0) target = $region9
  $region8: #{decoder_forward.21} parent=0 // pred_region
    _
  $region9: #{decoder_forward.21} parent=0 // pred_fallthru
    _
  // Predicated region
  $region10: #{decoder_forward.21} parent=0 // pred_check
    _
  $region11: #{decoder_forward.21} parent=0 // pred_check_branch
    %13 = sbr.rel (0) target = $region13
  $region12: #{decoder_forward.21} parent=0 // pred_region
    _
  $region13: #{decoder_forward.21} parent=0 // pred_fallthru
    _
  %v15 = vld [vmem:[%s0] sm:$0xff]
  %v16 = vld [vmem:[%s0 + $0x8] sm:$0xff]
  %v17 = vpack.c.bf16 %v16, %v15
  %v18 = vld [vmem:[%s1] sm:$0xf]
  %v19 = vld [vmem:[%s1 + $0x4] sm:$0xf]
  %v20 = vld [vmem:[%s1 + $0x8] sm:$0xf]
  %v21 = vld [vmem:[%s1 + $0xc] sm:$0xf]
  %v22 = vld [vmem:[%s2] sm:$0x1]
  %v24 = vlaneseq
  %v25 = vshrl.u32 %v24, 7
  %v26 = vsub.s32 0, %v25
  %v27 = vrot.slane %v22, %v26
  %v33 = vunpack.c.l.b16 %v18
  %v34 = vunpack.c.l.b16 %v19
  %v35 = vunpack.c.l.b16 %v20
  %v36 = vunpack.c.l.b16 %v21
  %v37 = vpack.c.b16 %v34, %v33
  %v38 = vpack.c.b16 %v36, %v35
  %vm41 = vcmask 261120
  %v43 = vsel %vm41, %v17, 0
  %45 = vmatprep.subr.bf16.mxu0 0
  %46 = vmatpush1.bf16.msra.mxu0 %v37
  %47 = vmatprep.subr.bf16.mxu0 0
  %48 = vmatpush1.bf16.msra.mxu0 %v38
  %49 = vmatprep.subr.bf16.mxu0 0
  %50 = vmatpush1.bf16.msra.mxu0 0
  %51 = vmatprep.subr.bf16.mxu0 0
  %52 = vmatpush1.bf16.msra.mxu0 0
  %53 = vmatprep.subr.bf16.mxu0 0
  %54 = vmatpush1.bf16.msra.mxu0 0
  %55 = vmatprep.subr.bf16.mxu0 0
  %56 = vmatpush1.bf16.msra.mxu0 0
  %57 = vmatprep.subr.bf16.mxu0 0
  %58 = vmatpush1.bf16.msra.mxu0 0
  %59 = vmatprep.subr.bf16.mxu0 0
  %60 = vmatpush1.bf16.msra.mxu0 0
  %61 = vmatprep.subr.bf16.mxu0 0
  %62 = vmatpush1.bf16.msra.mxu0 0
  %63 = vmatprep.subr.bf16.mxu0 0
  %64 = vmatpush1.bf16.msra.mxu0 0
  %65 = vmatprep.subr.bf16.mxu0 0
  %66 = vmatpush1.bf16.msra.mxu0 0
  %67 = vmatprep.subr.bf16.mxu0 0
  %68 = vmatpush1.bf16.msra.mxu0 0
  %69 = vmatprep.subr.bf16.mxu0 0
  %70 = vmatpush1.bf16.msra.mxu0 0
  %71 = vmatprep.subr.bf16.mxu0 0
  %72 = vmatpush1.bf16.msra.mxu0 0
  %73 = vmatprep.subr.bf16.mxu0 0
  %74 = vmatpush1.bf16.msra.mxu0 0
  %75 = vmatprep.subr.bf16.mxu0 0
  %76 = vmatpush1.bf16.msra.mxu0 0
  %77 = vmatprep.mubr.bf16.mxu0 0
  %78 = vmatmul.mubr.bf16.gmra.mrb[0].mxu0 %v43
  %v79 = vpop.f32.mrb[0].mxu0
  %v80 = vadd.f32 %v27, %v79
  %v81 = vpop.f32.mrb[0].mxu0
  %v82 = vpop.f32.mrb[0].mxu0
  %v83 = vadd.f32 %v27, %v82
  %v84 = vpop.f32.mrb[0].mxu0
  %85 = vdwg.mxu0
  %v86 = vpack.c.bf16 %v83, %v80
  %v88 = vunpack.c.l.b16 %v86
  %v89 = vunpack.c.h.b16 %v86
  %v90 = vpack.c.b16 %v88, %v88
  %v91 = vpack.c.b16 %v89, %v89
  %vm94 = vcmask 519168
  %95 = vst.msk [vmem:[%s3] sm:$0xf] %vm94, %v90
  %96 = vst.msk [vmem:[%s3 + $0x4] sm:$0xf] %vm94, %v91
  // Predicated region
  $region14: #{decoder_forward.21} parent=0 // pred_check
    _
  $region15: #{decoder_forward.21} parent=0 // pred_check_branch
    %98 = sbr.rel (0) target = $region17
  $region16: #{decoder_forward.21} parent=0 // pred_region
    _
  $region17: #{decoder_forward.21} parent=0 // pred_fallthru
    _
  // Predicated region
  $region18: #{decoder_forward.21} parent=0 // pred_check
    _
  $region19: #{decoder_forward.21} parent=0 // pred_check_branch
    %100 = sbr.rel (0) target = $region21
  $region20: #{decoder_forward.21} parent=0 // pred_region
    _
  $region21: #{decoder_forward.21} parent=0 // pred_fallthru
    _

// kernel: decoder_forward.22
$region0: #{decoder_forward.22}
  #allocation0 [shape = 'u32[]', space=smem, size = 0x4, offset = 0x4, fixed_abs, tag = 'smem constant byte address 0x4 - core index']
  #allocation1 [shape = 'u32[144,128]{1,0:T(1,128)}', space=vmem, size = 0x12000, scoped, tag = 'internal scratch']
  %s0 = inlined_call_operand.vmem [shape: bf16[2,8,32], index: 0, kind: input, shape index: {}]
  %s1 = inlined_call_operand.vmem [shape: bf16[2,8,64], index: 1, kind: input, shape index: {}]
  %s2 = inlined_call_operand.vmem [shape: f32[2,8,8], index: 2, kind: input, shape index: {}]
  %s3 = inlined_call_operand.vmem [shape: bf16[2,8,32], index: 3, kind: output, shape index: {}]
  %s4 = sld [smem:[#allocation0]]
  $region45: #{decoder_forward.22} parent=0
    _
  %s6 = ssub.s32 1, %s4
  %s7 = scalar_select 0, %s6, %s4
  loop: start=0, step=1, limit=4
  $region2: #{decoder_forward.22} parent=0 // loop_pre_header
    _
  $region3: #{decoder_forward.22} parent=0 // loop_header
    %s9 = sphi 0, %s13
    %p10 = scmp.ge.s32.totalorder %s9, 4
    %s19 = sphi 0, %s21
    %s22 = sphi 0, %s19
    %s23 = sphi 0, %s22
    %s39 = sphi 0, %s23
    %s45 = sphi 0, %s47
    %s48 = sphi 0, %s45
    %s49 = sphi 0, %s48
    %s65 = sphi 0, %s49
    %s71 = sphi 0, %s73
    %s74 = sphi 0, %s71
    %s75 = sphi 0, %s74
    %s91 = sphi 0, %s75
    %s97 = sphi 0, %s99
    %s100 = sphi 0, %s97
    %s101 = sphi 0, %s100
    %s117 = sphi 0, %s101
  $region4: #{decoder_forward.22} parent=0 // loop_header_branch
    %12 = sbr.rel (%p10) target = $region8
  $region5: #{decoder_forward.22} parent=0 // loop_body
    %s14 = ssub.s32 %s9, 1
    %s15 = ssub.s32 %s9, 2
    %s16 = sadd.s32 %s9, 1
    %s17 = ssub.s32 %s9, %s16
    %p18 = scmp.eq.s32.totalorder %s17, 0
    %s20 = sadd.s32 %s19, 1
    %s21 = scalar_select %p18, %s19, %s20
    %p24 = pneg %p18
    %p25 = scmp.eq.s32.totalorder %s9, 1
    %p26 = por %p24, %p25
    %p27 = scmp.ne.s32.totalorder %s19, %s22
    %p28 = scmp.eq.s32.totalorder %s9, 0
    %p29 = por %p27, %p28
    %p30 = scmp.ne.s32.totalorder %s19, %s22
    %p31 = scmp.eq.s32.totalorder %s14, 1
    %p32 = por %p30, %p31
    %p33 = scmp.ne.s32.totalorder %s22, %s23
    %p34 = scmp.eq.s32.totalorder %s14, 0
    %p35 = por %p33, %p34
    %p36 = scmp.ne.s32.totalorder %s22, %s23
    %p37 = scmp.eq.s32.totalorder %s15, 1
    %p38 = por %p36, %p37
    %p40 = scmp.ne.s32.totalorder %s23, %s39
    %p41 = scmp.eq.s32.totalorder %s15, 0
    %p42 = por %p40, %p41
    %s43 = ssub.s32 %s9, %s16
    %p44 = scmp.eq.s32.totalorder %s43, 0
    %s46 = sadd.s32 %s45, 1
    %s47 = scalar_select %p44, %s45, %s46
    %p50 = pneg %p44
    %p51 = scmp.eq.s32.totalorder %s9, 1
    %p52 = por %p50, %p51
    %p53 = scmp.ne.s32.totalorder %s45, %s48
    %p54 = scmp.eq.s32.totalorder %s9, 0
    %p55 = por %p53, %p54
    %p56 = scmp.ne.s32.totalorder %s45, %s48
    %p57 = scmp.eq.s32.totalorder %s14, 1
    %p58 = por %p56, %p57
    %p59 = scmp.ne.s32.totalorder %s48, %s49
    %p60 = scmp.eq.s32.totalorder %s14, 0
    %p61 = por %p59, %p60
    %p62 = scmp.ne.s32.totalorder %s48, %s49
    %p63 = scmp.eq.s32.totalorder %s15, 1
    %p64 = por %p62, %p63
    %p66 = scmp.ne.s32.totalorder %s49, %s65
    %p67 = scmp.eq.s32.totalorder %s15, 0
    %p68 = por %p66, %p67
    %s69 = ssub.s32 %s9, %s16
    %p70 = scmp.eq.s32.totalorder %s69, 0
    %s72 = sadd.s32 %s71, 1
    %s73 = scalar_select %p70, %s71, %s72
    %p76 = pneg %p70
    %p77 = scmp.eq.s32.totalorder %s9, 1
    %p78 = por %p76, %p77
    %p79 = scmp.ne.s32.totalorder %s71, %s74
    %p80 = scmp.eq.s32.totalorder %s9, 0
    %p81 = por %p79, %p80
    %p82 = scmp.ne.s32.totalorder %s71, %s74
    %p83 = scmp.eq.s32.totalorder %s14, 1
    %p84 = por %p82, %p83
    %p85 = scmp.ne.s32.totalorder %s74, %s75
    %p86 = scmp.eq.s32.totalorder %s14, 0
    %p87 = por %p85, %p86
    %p88 = scmp.ne.s32.totalorder %s74, %s75
    %p89 = scmp.eq.s32.totalorder %s15, 1
    %p90 = por %p88, %p89
    %p92 = scmp.ne.s32.totalorder %s75, %s91
    %p93 = scmp.eq.s32.totalorder %s15, 0
    %p94 = por %p92, %p93
    %s95 = ssub.s32 %s9, %s16
    %p96 = scmp.eq.s32.totalorder %s95, 0
    %s98 = sadd.s32 %s97, 1
    %s99 = scalar_select %p96, %s97, %s98
    %p102 = pneg %p96
    %p103 = scmp.eq.s32.totalorder %s9, 1
    %p104 = por %p102, %p103
    %p105 = scmp.ne.s32.totalorder %s97, %s100
    %p106 = scmp.eq.s32.totalorder %s9, 0
    %p107 = por %p105, %p106
    %p108 = scmp.ne.s32.totalorder %s97, %s100
    %p109 = scmp.eq.s32.totalorder %s14, 1
    %p110 = por %p108, %p109
    %p111 = scmp.ne.s32.totalorder %s100, %s101
    %p112 = scmp.eq.s32.totalorder %s14, 0
    %p113 = por %p111, %p112
    %p114 = scmp.ne.s32.totalorder %s100, %s101
    %p115 = scmp.eq.s32.totalorder %s15, 1
    %p116 = por %p114, %p115
    %p118 = scmp.ne.s32.totalorder %s101, %s117
    %p119 = scmp.eq.s32.totalorder %s15, 0
    %p120 = por %p118, %p119
    %p121 = scmp.le.s32.totalorder 1, %s9
    %p122 = scmp.lt.s32.totalorder %s9, 3
    %p123 = pnand %p121, %p122
    %p124 = pneg %p123
    // Predicated region
    $region9: #{decoder_forward.22} parent=5 // pred_check
      _
    $region10: #{decoder_forward.22} parent=5 // pred_check_branch
      %126 = sbr.rel (%p123) target = $region12
    $region11: #{decoder_forward.22} parent=5 // pred_region
      %s127 = ssub.s32 %s9, 1
    $region12: #{decoder_forward.22} parent=5 // pred_fallthru
      _
    %p128 = scmp.lt.s32.totalorder %s9, 2
    // Predicated region
    $region13: #{decoder_forward.22} parent=5 // pred_check
      %p129 = pneg %p128
    $region14: #{decoder_forward.22} parent=5 // pred_check_branch
      %131 = sbr.rel (%p129) target = $region16
    $region15: #{decoder_forward.22} parent=5 // pred_region
      // Predicated region
      $region17: #{decoder_forward.22} parent=15 // pred_check
        %p132 = pneg %p29
      $region18: #{decoder_forward.22} parent=15 // pred_check_branch
        %134 = sbr.rel (%p132) target = $region20
      $region19: #{decoder_forward.22} parent=15 // pred_region
        %p135 = scmp.lt.s32.totalorder %s9, 1
        %s136 = scalar_select %p135, %s9, 1
        %s137 = smul.addr %s136, 4
        %s138 = scalar_lea.vmem %s0, %s137
      $region20: #{decoder_forward.22} parent=15 // pred_fallthru
        _
      // Predicated region
      $region21: #{decoder_forward.22} parent=15 // pred_check
        %p139 = pneg %p55
      $region22: #{decoder_forward.22} parent=15 // pred_check_branch
        %141 = sbr.rel (%p139) target = $region24
      $region23: #{decoder_forward.22} parent=15 // pred_region
        %p142 = scmp.lt.s32.totalorder %s9, 1
        %s143 = scalar_select %p142, %s9, 1
        %s144 = smul.addr %s143, 4
        %s145 = scalar_lea.vmem %s1, %s144
      $region24: #{decoder_forward.22} parent=15 // pred_fallthru
        _
      // Predicated region
      $region25: #{decoder_forward.22} parent=15 // pred_check
        %p146 = pneg %p81
      $region26: #{decoder_forward.22} parent=15 // pred_check_branch
        %148 = sbr.rel (%p146) target = $region28
      $region27: #{decoder_forward.22} parent=15 // pred_region
        %p149 = scmp.lt.s32.totalorder %s9, 1
        %s150 = scalar_select %p149, %s9, 1
        %s151 = smul.addr %s150, 8
        %s152 = scalar_lea.vmem %s2, %s151
      $region28: #{decoder_forward.22} parent=15 // pred_fallthru
        _
    $region16: #{decoder_forward.22} parent=5 // pred_fallthru
      _
    %p153 = scmp.le.s32.totalorder 1, %s9
    %p154 = scmp.lt.s32.totalorder %s9, 3
    %p155 = pnand %p153, %p154
    %p156 = pneg %p155
    // Predicated region
    $region29: #{decoder_forward.22} parent=5 // pred_check
      _
    $region30: #{decoder_forward.22} parent=5 // pred_check_branch
      %158 = sbr.rel (%p155) target = $region32
    $region31: #{decoder_forward.22} parent=5 // pred_region
      %s159 = ssub.s32 %s9, 1
      %p160 = scmp.lt.s32.totalorder %s14, 1
      %s161 = scalar_select %p160, %s14, 1
      %s162 = smul.addr %s161, 4
      %s163 = scalar_lea.vmem %s0, %s162
      %p164 = pneg %p35
      %p165 = pneg %p32
      %p166 = scmp.lt.s32.totalorder %s14, 1
      %s167 = scalar_select %p166, %s14, 1
      %s168 = smul.addr %s167, 4
      %s169 = scalar_lea.vmem %s1, %s168
      %p170 = pneg %p61
      %p171 = pneg %p58
      %p172 = scmp.lt.s32.totalorder %s14, 1
      %s173 = scalar_select %p172, %s14, 1
      %s174 = smul.addr %s173, 8
      %s175 = scalar_lea.vmem %s2, %s174
      %p176 = pneg %p87
      %p177 = pneg %p84
      %p178 = pneg %p113
      %p179 = pneg %p110
      %p180 = scmp.lt.s32.totalorder %s14, 1
      %s181 = scalar_select %p180, %s14, 1
      %s182 = smul.addr %s181, 4
      %s183 = scalar_lea.vmem %s3, %s182
      %p184 = scmp.lt.s32.totalorder %s14, 1
      %s185 = scalar_select %p184, %s14, 1
      %s186 = smul.addr %s185, 4
      %s187 = scalar_lea.vmem %s0, %s186
      %p188 = scmp.lt.s32.totalorder %s14, 1
      %s189 = scalar_select %p188, %s14, 1
      %s190 = smul.addr %s189, 4
      %s191 = scalar_lea.vmem %s1, %s190
      %p192 = scmp.lt.s32.totalorder %s14, 1
      %s193 = scalar_select %p192, %s14, 1
      %s194 = smul.addr %s193, 8
      %s195 = scalar_lea.vmem %s2, %s194
      %p196 = scmp.lt.s32.totalorder %s14, 1
      %s197 = scalar_select %p196, %s14, 1
      %s198 = smul.addr %s197, 4
      %s199 = scalar_lea.vmem %s3, %s198
      %v201 = vld [vmem:[%s191] sm:$0xf]
      %v202 = vld [vmem:[%s187] sm:$0xf]
      %v203 = vld [vmem:[%s195] sm:$0xff]
      %v204 = vunpack.c.l.bf16 %v202
      %v205 = vmul.f32 %v204, 0.35355338
      %v206 = vpack.c.bf16 %v205, %v205
      %vm207 = vcmask 64512
      %v209 = vsel %vm207, %v206, 0
      %v212 = vsel %vm207, %v201, 0
      %214 = vmatprep.subr.bf16.mxu0 0
      %215 = vmatpush1.bf16.xpose.msra.mxu0 %v212
      %216 = vmatprep.subr.bf16.mxu0 0
      %217 = vmatpush1.bf16.xpose.msra.mxu0 0
      %218 = vmatprep.subr.bf16.mxu0 0
      %219 = vmatpush1.bf16.xpose.msra.mxu0 0
      %220 = vmatprep.subr.bf16.mxu0 0
      %221 = vmatpush1.bf16.xpose.msra.mxu0 0
      %222 = vmatprep.subr.bf16.mxu0 0
      %223 = vmatpush1.bf16.xpose.msra.mxu0 0
      %224 = vmatprep.subr.bf16.mxu0 0
      %225 = vmatpush1.bf16.xpose.msra.mxu0 0
      %226 = vmatprep.subr.bf16.mxu0 0
      %227 = vmatpush1.bf16.xpose.msra.mxu0 0
      %228 = vmatprep.subr.bf16.mxu0 0
      %229 = vmatpush1.bf16.xpose.msra.mxu0 0
      %230 = vmatprep.subr.bf16.mxu0 0
      %231 = vmatpush1.bf16.xpose.msra.mxu0 0
      %232 = vmatprep.subr.bf16.mxu0 0
      %233 = vmatpush1.bf16.xpose.msra.mxu0 0
      %234 = vmatprep.subr.bf16.mxu0 0
      %235 = vmatpush1.bf16.xpose.msra.mxu0 0
      %236 = vmatprep.subr.bf16.mxu0 0
      %237 = vmatpush1.bf16.xpose.msra.mxu0 0
      %238 = vmatprep.subr.bf16.mxu0 0
      %239 = vmatpush1.bf16.xpose.msra.mxu0 0
      %240 = vmatprep.subr.bf16.mxu0 0
      %241 = vmatpush1.bf16.xpose.msra.mxu0 0
      %242 = vmatprep.subr.bf16.mxu0 0
      %243 = vmatpush1.bf16.xpose.msra.mxu0 0
      %244 = vmatprep.subr.bf16.mxu0 0
      %245 = vmatpush1.bf16.xpose.msra.mxu0 0
      %246 = vmatprep.mubr.bf16.mxu0 0
      %247 = vmatmul.mubr.bf16.gmra.mrb[0].mxu0 %v209
      %v248 = vpop.f32.mrb[0].mxu0
      %v249 = vadd.f32 %v203, %v248
      %v250 = vpop.f32.mrb[0].mxu0
      %v251 = vpop.f32.mrb[0].mxu0
      %v252 = vpop.f32.mrb[0].mxu0
      %253 = vdwg.mxu0
      %v254 = vsel %vm207, %v249, -inf
      %255 = vmax.xlane.f32.xlu0 %v254
      %v256 = vpop.xlane.xlu0 %255
      %v257 = vsub.f32 %v249, %v256
      %v258 = vmul.f32 %v257, 1.442695
      %v259 = vpow.pop %v258
      %v260 = vsel %vm207, %v259, 0.0
      %261 = vadd.xlane.f32.xlu0 %v260
      %v262 = vpop.xlane.xlu0 %261
      %v263 = vrcp.pop %v262
      %v264 = vmul.f32 %v259, %v263
      %v265 = vpack.c.bf16 %v264, %v264
      %v267 = vunpack.c.l.b16 %v201
      %v268 = vpack.c.b16 %v267, %v267
      %269 = vrot.lane.b32.xlu0 %v268, 96
      %v270 = vpop.permute.xlu0 %269
      %v272 = vsel %vm207, %v265, 0
      %vm274 = vcmask 1043456
      %v276 = vsel %vm274, %v270, 0
      %278 = vmatprep.subr.bf16.mxu0 0
      %279 = vmatpush1.bf16.msra.mxu0 %v276
      %280 = vmatprep.subr.bf16.mxu0 0
      %281 = vmatpush1.bf16.msra.mxu0 0
      %282 = vmatprep.subr.bf16.mxu0 0
      %283 = vmatpush1.bf16.msra.mxu0 0
      %284 = vmatprep.subr.bf16.mxu0 0
      %285 = vmatpush1.bf16.msra.mxu0 0
      %286 = vmatprep.subr.bf16.mxu0 0
      %287 = vmatpush1.bf16.msra.mxu0 0
      %288 = vmatprep.subr.bf16.mxu0 0
      %289 = vmatpush1.bf16.msra.mxu0 0
      %290 = vmatprep.subr.bf16.mxu0 0
      %291 = vmatpush1.bf16.msra.mxu0 0
      %292 = vmatprep.subr.bf16.mxu0 0
      %293 = vmatpush1.bf16.msra.mxu0 0
      %294 = vmatprep.subr.bf16.mxu0 0
      %295 = vmatpush1.bf16.msra.mxu0 0
      %296 = vmatprep.subr.bf16.mxu0 0
      %297 = vmatpush1.bf16.msra.mxu0 0
      %298 = vmatprep.subr.bf16.mxu0 0
      %299 = vmatpush1.bf16.msra.mxu0 0
      %300 = vmatprep.subr.bf16.mxu0 0
      %301 = vmatpush1.bf16.msra.mxu0 0
      %302 = vmatprep.subr.bf16.mxu0 0
      %303 = vmatpush1.bf16.msra.mxu0 0
      %304 = vmatprep.subr.bf16.mxu0 0
      %305 = vmatpush1.bf16.msra.mxu0 0
      %306 = vmatprep.subr.bf16.mxu0 0
      %307 = vmatpush1.bf16.msra.mxu0 0
      %308 = vmatprep.subr.bf16.mxu0 0
      %309 = vmatpush1.bf16.msra.mxu0 0
      %310 = vmatprep.mubr.bf16.mxu0 0
      %311 = vmatmul.mubr.bf16.gmra.mrb[0].mxu0 %v272
      %v312 = vpop.f32.mrb[0].mxu0
      %v313 = vadd.f32 0.0, %v312
      %v314 = vpop.f32.mrb[0].mxu0
      %v315 = vpop.f32.mrb[0].mxu0
      %v316 = vpop.f32.mrb[0].mxu0
      %317 = vdwg.mxu0
      %v318 = vpack.c.bf16 %v313, %v313
      %vm319 = vcmask 60416
      %320 = vst.msk [vmem:[%s199] sm:$0xf] %vm319, %v318
      %322 = vrot.lane.b32.xlu0 %v206, 120
      %v323 = vpop.permute.xlu0 %322
      %324 = vrot.lane.b32.xlu0 %v268, 120
      %v325 = vpop.permute.xlu0 %324
      %v327 = vsel %vm207, %v323, 0
      %v330 = vsel %vm207, %v325, 0
      %332 = vmatprep.subr.bf16.mxu0 0
      %333 = vmatpush1.bf16.xpose.msra.mxu0 %v330
      %334 = vmatprep.subr.bf16.mxu0 0
      %335 = vmatpush1.bf16.xpose.msra.mxu0 0
      %336 = vmatprep.subr.bf16.mxu0 0
      %337 = vmatpush1.bf16.xpose.msra.mxu0 0
      %338 = vmatprep.subr.bf16.mxu0 0
      %339 = vmatpush1.bf16.xpose.msra.mxu0 0
      %340 = vmatprep.subr.bf16.mxu0 0
      %341 = vmatpush1.bf16.xpose.msra.mxu0 0
      %342 = vmatprep.subr.bf16.mxu0 0
      %343 = vmatpush1.bf16.xpose.msra.mxu0 0
      %344 = vmatprep.subr.bf16.mxu0 0
      %345 = vmatpush1.bf16.xpose.msra.mxu0 0
      %346 = vmatprep.subr.bf16.mxu0 0
      %347 = vmatpush1.bf16.xpose.msra.mxu0 0
      %348 = vmatprep.subr.bf16.mxu0 0
      %349 = vmatpush1.bf16.xpose.msra.mxu0 0
      %350 = vmatprep.subr.bf16.mxu0 0
      %351 = vmatpush1.bf16.xpose.msra.mxu0 0
      %352 = vmatprep.subr.bf16.mxu0 0
      %353 = vmatpush1.bf16.xpose.msra.mxu0 0
      %354 = vmatprep.subr.bf16.mxu0 0
      %355 = vmatpush1.bf16.xpose.msra.mxu0 0
      %356 = vmatprep.subr.bf16.mxu0 0
      %357 = vmatpush1.bf16.xpose.msra.mxu0 0
      %358 = vmatprep.subr.bf16.mxu0 0
      %359 = vmatpush1.bf16.xpose.msra.mxu0 0
      %360 = vmatprep.subr.bf16.mxu0 0
      %361 = vmatpush1.bf16.xpose.msra.mxu0 0
      %362 = vmatprep.subr.bf16.mxu0 0
      %363 = vmatpush1.bf16.xpose.msra.mxu0 0
      %364 = vmatprep.mubr.bf16.mxu0 0
      %365 = vmatmul.mubr.bf16.gmra.mrb[0].mxu0 %v327
      %v366 = vpop.f32.mrb[0].mxu0
      %v367 = vadd.f32 %v203, %v366
      %v368 = vpop.f32.mrb[0].mxu0
      %v369 = vpop.f32.mrb[0].mxu0
      %v370 = vpop.f32.mrb[0].mxu0
      %371 = vdwg.mxu0
      %v372 = vsel %vm207, %v367, -inf
      %373 = vmax.xlane.f32.xlu0 %v372
      %v374 = vpop.xlane.xlu0 %373
      %v375 = vsub.f32 %v367, %v374
      %v376 = vmul.f32 %v375, 1.442695
      %v377 = vpow.pop %v376
      %v378 = vsel %vm207, %v377, 0.0
      %379 = vadd.xlane.f32.xlu0 %v378
      %v380 = vpop.xlane.xlu0 %379
      %v381 = vrcp.pop %v380
      %v382 = vmul.f32 %v377, %v381
      %v383 = vpack.c.bf16 %v382, %v382
      %384 = vrot.lane.b32.xlu0 %v268, 88
      %v385 = vpop.permute.xlu0 %384
      %v387 = vsel %vm207, %v383, 0
      %v390 = vsel %vm274, %v385, 0
      %392 = vmatprep.subr.bf16.mxu0 0
      %393 = vmatpush1.bf16.msra.mxu0 %v390
      %394 = vmatprep.subr.bf16.mxu0 0
      %395 = vmatpush1.bf16.msra.mxu0 0
      %396 = vmatprep.subr.bf16.mxu0 0
      %397 = vmatpush1.bf16.msra.mxu0 0
      %398 = vmatprep.subr.bf16.mxu0 0
      %399 = vmatpush1.bf16.msra.mxu0 0
      %400 = vmatprep.subr.bf16.mxu0 0
      %401 = vmatpush1.bf16.msra.mxu0 0
      %402 = vmatprep.subr.bf16.mxu0 0
      %403 = vmatpush1.bf16.msra.mxu0 0
      %404 = vmatprep.subr.bf16.mxu0 0
      %405 = vmatpush1.bf16.msra.mxu0 0
      %406 = vmatprep.subr.bf16.mxu0 0
      %407 = vmatpush1.bf16.msra.mxu0 0
      %408 = vmatprep.subr.bf16.mxu0 0
      %409 = vmatpush1.bf16.msra.mxu0 0
      %410 = vmatprep.subr.bf16.mxu0 0
      %411 = vmatpush1.bf16.msra.mxu0 0
      %412 = vmatprep.subr.bf16.mxu0 0
      %413 = vmatpush1.bf16.msra.mxu0 0
      %414 = vmatprep.subr.bf16.mxu0 0
      %415 = vmatpush1.bf16.msra.mxu0 0
      %416 = vmatprep.subr.bf16.mxu0 0
      %417 = vmatpush1.bf16.msra.mxu0 0
      %418 = vmatprep.subr.bf16.mxu0 0
      %419 = vmatpush1.bf16.msra.mxu0 0
      %420 = vmatprep.subr.bf16.mxu0 0
      %421 = vmatpush1.bf16.msra.mxu0 0
      %422 = vmatprep.subr.bf16.mxu0 0
      %423 = vmatpush1.bf16.msra.mxu0 0
      %424 = vmatprep.mubr.bf16.mxu0 0
      %425 = vmatmul.mubr.bf16.gmra.mrb[0].mxu0 %v387
      %v426 = vpop.f32.mrb[0].mxu0
      %v427 = vadd.f32 0.0, %v426
      %v428 = vpop.f32.mrb[0].mxu0
      %v429 = vpop.f32.mrb[0].mxu0
      %v430 = vpop.f32.mrb[0].mxu0
      %431 = vdwg.mxu0
      %v432 = vpack.c.bf16 %v427, %v427
      %v434 = vunpack.c.l.b16 %v432
      %v435 = vpack.c.b16 %v434, %v434
      %436 = vrot.lane.b32.xlu0 %v435, 8
      %v437 = vpop.permute.xlu0 %436
      %vm439 = vcmask 126016
      %440 = vst.msk [vmem:[%s199] sm:$0xf] %vm439, %v437
      %441 = vrot.lane.b32.xlu0 %v206, 112
      %v442 = vpop.permute.xlu0 %441
      %443 = vrot.lane.b32.xlu0 %v268, 112
      %v444 = vpop.permute.xlu0 %443
      %v446 = vsel %vm207, %v442, 0
      %v449 = vsel %vm207, %v444, 0
      %451 = vmatprep.subr.bf16.mxu0 0
      %452 = vmatpush1.bf16.xpose.msra.mxu0 %v449
      %453 = vmatprep.subr.bf16.mxu0 0
      %454 = vmatpush1.bf16.xpose.msra.mxu0 0
      %455 = vmatprep.subr.bf16.mxu0 0
      %456 = vmatpush1.bf16.xpose.msra.mxu0 0
      %457 = vmatprep.subr.bf16.mxu0 0
      %458 = vmatpush1.bf16.xpose.msra.mxu0 0
      %459 = vmatprep.subr.bf16.mxu0 0
      %460 = vmatpush1.bf16.xpose.msra.mxu0 0
      %461 = vmatprep.subr.bf16.mxu0 0
      %462 = vmatpush1.bf16.xpose.msra.mxu0 0
      %463 = vmatprep.subr.bf16.mxu0 0
      %464 = vmatpush1.bf16.xpose.msra.mxu0 0
      %465 = vmatprep.subr.bf16.mxu0 0
      %466 = vmatpush1.bf16.xpose.msra.mxu0 0
      %467 = vmatprep.subr.bf16.mxu0 0
      %468 = vmatpush1.bf16.xpose.msra.mxu0 0
      %469 = vmatprep.subr.bf16.mxu0 0
      %470 = vmatpush1.bf16.xpose.msra.mxu0 0
      %471 = vmatprep.subr.bf16.mxu0 0
      %472 = vmatpush1.bf16.xpose.msra.mxu0 0
      %473 = vmatprep.subr.bf16.mxu0 0
      %474 = vmatpush1.bf16.xpose.msra.mxu0 0
      %475 = vmatprep.subr.bf16.mxu0 0
      %476 = vmatpush1.bf16.xpose.msra.mxu0 0
      %477 = vmatprep.subr.bf16.mxu0 0
      %478 = vmatpush1.bf16.xpose.msra.mxu0 0
      %479 = vmatprep.subr.bf16.mxu0 0
      %480 = vmatpush1.bf16.xpose.msra.mxu0 0
      %481 = vmatprep.subr.bf16.mxu0 0
      %482 = vmatpush1.bf16.xpose.msra.mxu0 0
      %483 = vmatprep.mubr.bf16.mxu0 0
      %484 = vmatmul.mubr.bf16.gmra.mrb[0].mxu0 %v446
      %v485 = vpop.f32.mrb[0].mxu0
      %v486 = vadd.f32 %v203, %v485
      %v487 = vpop.f32.mrb[0].mxu0
      %v488 = vpop.f32.mrb[0].mxu0
      %v489 = vpop.f32.mrb[0].mxu0
      %490 = vdwg.mxu0
      %v491 = vsel %vm207, %v486, -inf
      %492 = vmax.xlane.f32.xlu0 %v491
      %v493 = vpop.xlane.xlu0 %492
      %v494 = vsub.f32 %v486, %v493
      %v495 = vmul.f32 %v494, 1.442695
      %v496 = vpow.pop %v495
      %v497 = vsel %vm207, %v496, 0.0
      %498 = vadd.xlane.f32.xlu0 %v497
      %v499 = vpop.xlane.xlu0 %498
      %v500 = vrcp.pop %v499
      %v501 = vmul.f32 %v496, %v500
      %v502 = vpack.c.bf16 %v501, %v501
      %503 = vrot.lane.b32.xlu0 %v268, 80
      %v504 = vpop.permute.xlu0 %503
      %v506 = vsel %vm207, %v502, 0
      %v509 = vsel %vm274, %v504, 0
      %511 = vmatprep.subr.bf16.mxu0 0
      %512 = vmatpush1.bf16.msra.mxu0 %v509
      %513 = vmatprep.subr.bf16.mxu0 0
      %514 = vmatpush1.bf16.msra.mxu0 0
      %515 = vmatprep.subr.bf16.mxu0 0
      %516 = vmatpush1.bf16.msra.mxu0 0
      %517 = vmatprep.subr.bf16.mxu0 0
      %518 = vmatpush1.bf16.msra.mxu0 0
      %519 = vmatprep.subr.bf16.mxu0 0
      %520 = vmatpush1.bf16.msra.mxu0 0
      %521 = vmatprep.subr.bf16.mxu0 0
      %522 = vmatpush1.bf16.msra.mxu0 0
      %523 = vmatprep.subr.bf16.mxu0 0
      %524 = vmatpush1.bf16.msra.mxu0 0
      %525 = vmatprep.subr.bf16.mxu0 0
      %526 = vmatpush1.bf16.msra.mxu0 0
      %527 = vmatprep.subr.bf16.mxu0 0
      %528 = vmatpush1.bf16.msra.mxu0 0
      %529 = vmatprep.subr.bf16.mxu0 0
      %530 = vmatpush1.bf16.msra.mxu0 0
      %531 = vmatprep.subr.bf16.mxu0 0
      %532 = vmatpush1.bf16.msra.mxu0 0
      %533 = vmatprep.subr.bf16.mxu0 0
      %534 = vmatpush1.bf16.msra.mxu0 0
      %535 = vmatprep.subr.bf16.mxu0 0
      %536 = vmatpush1.bf16.msra.mxu0 0
      %537 = vmatprep.subr.bf16.mxu0 0
      %538 = vmatpush1.bf16.msra.mxu0 0
      %539 = vmatprep.subr.bf16.mxu0 0
      %540 = vmatpush1.bf16.msra.mxu0 0
      %541 = vmatprep.subr.bf16.mxu0 0
      %542 = vmatpush1.bf16.msra.mxu0 0
      %543 = vmatprep.mubr.bf16.mxu0 0
      %544 = vmatmul.mubr.bf16.gmra.mrb[0].mxu0 %v506
      %v545 = vpop.f32.mrb[0].mxu0
      %v546 = vadd.f32 0.0, %v545
      %v547 = vpop.f32.mrb[0].mxu0
      %v548 = vpop.f32.mrb[0].mxu0
      %v549 = vpop.f32.mrb[0].mxu0
      %550 = vdwg.mxu0
      %v551 = vpack.c.bf16 %v546, %v546
      %v553 = vunpack.c.l.b16 %v551
      %v554 = vpack.c.b16 %v553, %v553
      %555 = vrot.lane.b32.xlu0 %v554, 16
      %v556 = vpop.permute.xlu0 %555
      %vm558 = vcmask 191616
      %559 = vst.msk [vmem:[%s199] sm:$0xf] %vm558, %v556
      %560 = vrot.lane.b32.xlu0 %v206, 104
      %v561 = vpop.permute.xlu0 %560
      %562 = vrot.lane.b32.xlu0 %v268, 104
      %v563 = vpop.permute.xlu0 %562
      %v565 = vsel %vm207, %v561, 0
      %v568 = vsel %vm207, %v563, 0
      %570 = vmatprep.subr.bf16.mxu0 0
      %571 = vmatpush1.bf16.xpose.msra.mxu0 %v568
      %572 = vmatprep.subr.bf16.mxu0 0
      %573 = vmatpush1.bf16.xpose.msra.mxu0 0
      %574 = vmatprep.subr.bf16.mxu0 0
      %575 = vmatpush1.bf16.xpose.msra.mxu0 0
      %576 = vmatprep.subr.bf16.mxu0 0
      %577 = vmatpush1.bf16.xpose.msra.mxu0 0
      %578 = vmatprep.subr.bf16.mxu0 0
      %579 = vmatpush1.bf16.xpose.msra.mxu0 0
      %580 = vmatprep.subr.bf16.mxu0 0
      %581 = vmatpush1.bf16.xpose.msra.mxu0 0
      %582 = vmatprep.subr.bf16.mxu0 0
      %583 = vmatpush1.bf16.xpose.msra.mxu0 0
      %584 = vmatprep.subr.bf16.mxu0 0
      %585 = vmatpush1.bf16.xpose.msra.mxu0 0
      %586 = vmatprep.subr.bf16.mxu0 0
      %587 = vmatpush1.bf16.xpose.msra.mxu0 0
      %588 = vmatprep.subr.bf16.mxu0 0
      %589 = vmatpush1.bf16.xpose.msra.mxu0 0
      %590 = vmatprep.subr.bf16.mxu0 0
      %591 = vmatpush1.bf16.xpose.msra.mxu0 0
      %592 = vmatprep.subr.bf16.mxu0 0
      %593 = vmatpush1.bf16.xpose.msra.mxu0 0
      %594 = vmatprep.subr.bf16.mxu0 0
      %595 = vmatpush1.bf16.xpose.msra.mxu0 0
      %596 = vmatprep.subr.bf16.mxu0 0
      %597 = vmatpush1.bf16.xpose.msra.mxu0 0
      %598 = vmatprep.subr.bf16.mxu0 0
      %599 = vmatpush1.bf16.xpose.msra.mxu0 0
      %600 = vmatprep.subr.bf16.mxu0 0
      %601 = vmatpush1.bf16.xpose.msra.mxu0 0
      %602 = vmatprep.mubr.bf16.mxu0 0
      %603 = vmatmul.mubr.bf16.gmra.mrb[0].mxu0 %v565
      %v604 = vpop.f32.mrb[0].mxu0
      %v605 = vadd.f32 %v203, %v604
      %v606 = vpop.f32.mrb[0].mxu0
      %v607 = vpop.f32.mrb[0].mxu0
      %v608 = vpop.f32.mrb[0].mxu0
      %609 = vdwg.mxu0
      %v610 = vsel %vm207, %v605, -inf
      %611 = vmax.xlane.f32.xlu0 %v610
      %v612 = vpop.xlane.xlu0 %611
      %v613 = vsub.f32 %v605, %v612
      %v614 = vmul.f32 %v613, 1.442695
      %v615 = vpow.pop %v614
      %v616 = vsel %vm207, %v615, 0.0
      %617 = vadd.xlane.f32.xlu0 %v616
      %v618 = vpop.xlane.xlu0 %617
      %v619 = vrcp.pop %v618
      %v620 = vmul.f32 %v615, %v619
      %v621 = vpack.c.bf16 %v620, %v620
      %622 = vrot.lane.b32.xlu0 %v268, 72
      %v623 = vpop.permute.xlu0 %622
      %v625 = vsel %vm207, %v621, 0
      %v628 = vsel %vm274, %v623, 0
      %630 = vmatprep.subr.bf16.mxu0 0
      %631 = vmatpush1.bf16.msra.mxu0 %v628
      %632 = vmatprep.subr.bf16.mxu0 0
      %633 = vmatpush1.bf16.msra.mxu0 0
      %634 = vmatprep.subr.bf16.mxu0 0
      %635 = vmatpush1.bf16.msra.mxu0 0
      %636 = vmatprep.subr.bf16.mxu0 0
      %637 = vmatpush1.bf16.msra.mxu0 0
      %638 = vmatprep.subr.bf16.mxu0 0
      %639 = vmatpush1.bf16.msra.mxu0 0
      %640 = vmatprep.subr.bf16.mxu0 0
      %641 = vmatpush1.bf16.msra.mxu0 0
      %642 = vmatprep.subr.bf16.mxu0 0
      %643 = vmatpush1.bf16.msra.mxu0 0
      %644 = vmatprep.subr.bf16.mxu0 0
      %645 = vmatpush1.bf16.msra.mxu0 0
      %646 = vmatprep.subr.bf16.mxu0 0
      %647 = vmatpush1.bf16.msra.mxu0 0
      %648 = vmatprep.subr.bf16.mxu0 0
      %649 = vmatpush1.bf16.msra.mxu0 0
      %650 = vmatprep.subr.bf16.mxu0 0
      %651 = vmatpush1.bf16.msra.mxu0 0
      %652 = vmatprep.subr.bf16.mxu0 0
      %653 = vmatpush1.bf16.msra.mxu0 0
      %654 = vmatprep.subr.bf16.mxu0 0
      %655 = vmatpush1.bf16.msra.mxu0 0
      %656 = vmatprep.subr.bf16.mxu0 0
      %657 = vmatpush1.bf16.msra.mxu0 0
      %658 = vmatprep.subr.bf16.mxu0 0
      %659 = vmatpush1.bf16.msra.mxu0 0
      %660 = vmatprep.subr.bf16.mxu0 0
      %661 = vmatpush1.bf16.msra.mxu0 0
      %662 = vmatprep.mubr.bf16.mxu0 0
      %663 = vmatmul.mubr.bf16.gmra.mrb[0].mxu0 %v625
      %v664 = vpop.f32.mrb[0].mxu0
      %v665 = vadd.f32 0.0, %v664
      %v666 = vpop.f32.mrb[0].mxu0
      %v667 = vpop.f32.mrb[0].mxu0
      %v668 = vpop.f32.mrb[0].mxu0
      %669 = vdwg.mxu0
      %v670 = vpack.c.bf16 %v665, %v665
      %v672 = vunpack.c.l.b16 %v670
      %v673 = vpack.c.b16 %v672, %v672
      %674 = vrot.lane.b32.xlu0 %v673, 24
      %v675 = vpop.permute.xlu0 %674
      %vm677 = vcmask 257216
      %678 = vst.msk [vmem:[%s199] sm:$0xf] %vm677, %v675
      %p679 = scmp.lt.s32.totalorder %s14, 1
      %s680 = scalar_select %p679, %s14, 1
      %s681 = smul.addr %s680, 4
      %s682 = scalar_lea.vmem %s3, %s681
      // Predicated region
      $region33: #{decoder_forward.22} parent=31 // pred_check
        %p683 = pneg %p110
      $region34: #{decoder_forward.22} parent=31 // pred_check_branch
        %685 = sbr.rel (%p683) target = $region36
      $region35: #{decoder_forward.22} parent=31 // pred_region
        _
      $region36: #{decoder_forward.22} parent=31 // pred_fallthru
        _
    $region32: #{decoder_forward.22} parent=5 // pred_fallthru
      _
    %p686 = scmp.le.s32.totalorder 2, %s9
    // Predicated region
    $region37: #{decoder_forward.22} parent=5 // pred_check
      %p687 = pneg %p686
    $region38: #{decoder_forward.22} parent=5 // pred_check_branch
      %689 = sbr.rel (%p687) target = $region40
    $region39: #{decoder_forward.22} parent=5 // pred_region
      %s690 = ssub.s32 %s9, 2
      // Predicated region
      $region41: #{decoder_forward.22} parent=39 // pred_check
        %p691 = pneg %p116
      $region42: #{decoder_forward.22} parent=39 // pred_check_branch
        %693 = sbr.rel (%p691) target = $region44
      $region43: #{decoder_forward.22} parent=39 // pred_region
        %p694 = scmp.lt.s32.totalorder %s15, 1
        %s695 = scalar_select %p694, %s15, 1
        %s696 = smul.addr %s695, 4
        %s697 = scalar_lea.vmem %s3, %s696
      $region44: #{decoder_forward.22} parent=39 // pred_fallthru
        _
    $region40: #{decoder_forward.22} parent=5 // pred_fallthru
      _
  $region6: #{decoder_forward.22} parent=0 // loop_footer
    %s13 = sadd.s32 1, %s9
  $region7: #{decoder_forward.22} parent=0 // loop_footer_branch
    %8 = sbr.rel target = $region3
  $region8: #{decoder_forward.22} parent=0 // loop_exit
    _

// kernel: decoder_forward.24
$region0: #{decoder_forward.24}
  #allocation0 [shape = 'u32[]', space=smem, size = 0x4, offset = 0x4, fixed_abs, tag = 'smem constant byte address 0x4 - core index']
  #allocation1 [shape = 'u32[144,128]{1,0:T(1,128)}', space=vmem, size = 0x12000, scoped, tag = 'internal scratch']
  #allocation2 [shape = 'bf16[16,32]{1,0:T(16,128)(2,1)}', space=vmem, size = 0x1000, scoped, tag = 'scratch operand']
  #allocation3 [shape = 'f32[16,32]{1,0:T(8,128)}', space=vmem, size = 0x2000, scoped, tag = 'scratch operand']
  %s0 = inlined_call_operand.vmem [shape: f32[16,32], index: 0, kind: input, shape index: {}, may-alias: {0,7}]
  %s1 = inlined_call_operand.vmem [shape: f32[1,32], index: 1, kind: input, shape index: {}]
  %s2 = inlined_call_operand.vmem [shape: f32[1,32], index: 2, kind: input, shape index: {}]
  %s3 = inlined_call_operand.vmem [shape: bf16[32,64], index: 3, kind: input, shape index: {}]
  %s4 = inlined_call_operand.vmem [shape: f32[1,64], index: 4, kind: input, shape index: {}]
  %s5 = inlined_call_operand.vmem [shape: bf16[64,32], index: 5, kind: input, shape index: {}]
  %s6 = inlined_call_operand.vmem [shape: f32[1,32], index: 6, kind: input, shape index: {}]
  %s7 = inlined_call_operand.vmem [shape: f32[16,32], index: 7, kind: output, shape index: {}, may-alias: {0,7}]
  %s8 = sld [smem:[#allocation0]]
  $region46: #{decoder_forward.24} parent=0
    _
  %s10 = ssub.s32 1, %s8
  %s11 = scalar_select 0, %s10, %s8
  // Predicated region
  $region2: #{decoder_forward.24} parent=0 // pred_check
    _
  $region3: #{decoder_forward.24} parent=0 // pred_check_branch
    %13 = sbr.rel (0) target = $region5
  $region4: #{decoder_forward.24} parent=0 // pred_region
    _
  $region5: #{decoder_forward.24} parent=0 // pred_fallthru
    _
  // Predicated region
  $region6: #{decoder_forward.24} parent=0 // pred_check
    _
  $region7: #{decoder_forward.24} parent=0 // pred_check_branch
    %15 = sbr.rel (0) target = $region9
  $region8: #{decoder_forward.24} parent=0 // pred_region
    _
  $region9: #{decoder_forward.24} parent=0 // pred_fallthru
    _
  // Predicated region
  $region10: #{decoder_forward.24} parent=0 // pred_check
    _
  $region11: #{decoder_forward.24} parent=0 // pred_check_branch
    %17 = sbr.rel (0) target = $region13
  $region12: #{decoder_forward.24} parent=0 // pred_region
    _
  $region13: #{decoder_forward.24} parent=0 // pred_fallthru
    _
  // Predicated region
  $region14: #{decoder_forward.24} parent=0 // pred_check
    _
  $region15: #{decoder_forward.24} parent=0 // pred_check_branch
    %19 = sbr.rel (0) target = $region17
  $region16: #{decoder_forward.24} parent=0 // pred_region
    _
  $region17: #{decoder_forward.24} parent=0 // pred_fallthru
    _
  // Predicated region
  $region18: #{decoder_forward.24} parent=0 // pred_check
    _
  $region19: #{decoder_forward.24} parent=0 // pred_check_branch
    %21 = sbr.rel (0) target = $region21
  $region20: #{decoder_forward.24} parent=0 // pred_region
    _
  $region21: #{decoder_forward.24} parent=0 // pred_fallthru
    _
  // Predicated region
  $region22: #{decoder_forward.24} parent=0 // pred_check
    _
  $region23: #{decoder_forward.24} parent=0 // pred_check_branch
    %23 = sbr.rel (0) target = $region25
  $region24: #{decoder_forward.24} parent=0 // pred_region
    _
  $region25: #{decoder_forward.24} parent=0 // pred_fallthru
    _
  // Predicated region
  $region26: #{decoder_forward.24} parent=0 // pred_check
    _
  $region27: #{decoder_forward.24} parent=0 // pred_check_branch
    %25 = sbr.rel (0) target = $region29
  $region28: #{decoder_forward.24} parent=0 // pred_region
    _
  $region29: #{decoder_forward.24} parent=0 // pred_fallthru
    _
  %p27 = scmp.eq.s32.totalorder 0, 0
  // Predicated region
  $region30: #{decoder_forward.24} parent=0 // pred_check
    %p28 = pneg %p27
  $region31: #{decoder_forward.24} parent=0 // pred_check_branch
    %30 = sbr.rel (%p28) target = $region33
  $region32: #{decoder_forward.24} parent=0 // pred_region
    %v31 = vld [vmem:[%s0] sm:$0xff]
    %v32 = vld [vmem:[%s0 + $0x8] sm:$0xff]
    %v33 = vld [vmem:[%s1] sm:$0x1]
    %v34 = vld [vmem:[%s2] sm:$0x1]
    %vm35 = vcmask 261120
    %v36 = vsel %vm35, %v31, 0.0
    %37 = vadd.xlane.f32.xlu0 %v36
    %v38 = vpop.xlane.xlu0 %37
    %v39 = vsel %vm35, %v32, 0.0
    %40 = vadd.xlane.f32.xlu0 %v39
    %v41 = vpop.xlane.xlu0 %40
    %v42 = vrcp.pop 32.0
    %v43 = vmul.f32 %v38, %v42
    %v44 = vmul.f32 %v41, %v42
    %v45 = vsub.f32 %v31, %v43
    %v46 = vsub.f32 %v32, %v44
    %v47 = vmul.f32 %v45, %v45
    %v48 = vmul.f32 %v46, %v46
    %v49 = vsel %vm35, %v47, 0.0
    %50 = vadd.xlane.f32.xlu0 %v49
    %v51 = vpop.xlane.xlu0 %50
    %v52 = vsel %vm35, %v48, 0.0
    %53 = vadd.xlane.f32.xlu0 %v52
    %v54 = vpop.xlane.xlu0 %53
    %v55 = vmul.f32 %v51, %v42
    %v56 = vmul.f32 %v54, %v42
    %v57 = vadd.f32 %v55, 1e-06
    %v58 = vadd.f32 %v56, 1e-06
    %v59 = vrsqrt.pop %v57
    %v60 = vrsqrt.pop %v58
    %v61 = vmul.f32 %v45, %v59
    %v62 = vmul.f32 %v46, %v60
    %v64 = vlaneseq
    %v65 = vshrl.u32 %v64, 7
    %v66 = vsub.s32 0, %v65
    %v67 = vrot.slane %v33, %v66
    %v69 = vmul.f32 %v61, %v67
    %v70 = vmul.f32 %v62, %v67
    %v72 = vlaneseq
    %v73 = vshrl.u32 %v72, 7
    %v74 = vsub.s32 0, %v73
    %v75 = vrot.slane %v34, %v74
    %v77 = vadd.f32 %v69, %v75
    %v78 = vadd.f32 %v70, %v75
    %v79 = vpack.c.bf16 %v78, %v77
    %80 = vst.msk [vmem:[#allocation2] sm:$0xff] %vm35, %v79
    %81 = vst.msk [vmem:[#allocation3] sm:$0xff] %vm35, 0.0
    %82 = vst.msk [vmem:[#allocation3 + $0x8] sm:$0xff] %vm35, 0.0
  $region33: #{decoder_forward.24} parent=0 // pred_fallthru
    _
  %v83 = vld [vmem:[#allocation2] sm:$0xff]
  %v84 = vld [vmem:[%s3] sm:$0xf]
  %v85 = vld [vmem:[%s3 + $0x4] sm:$0xf]
  %v86 = vld [vmem:[%s3 + $0x8] sm:$0xf]
  %v87 = vld [vmem:[%s3 + $0xc] sm:$0xf]
  %v88 = vld [vmem:[%s4] sm:$0x1]
  %v90 = vlaneseq
  %v91 = vshrl.u32 %v90, 7
  %v92 = vsub.s32 0, %v91
  %v93 = vrot.slane %v88, %v92
  %v99 = vunpack.c.l.b16 %v84
  %v100 = vunpack.c.l.b16 %v85
  %v101 = vunpack.c.l.b16 %v86
  %v102 = vunpack.c.l.b16 %v87
  %v103 = vpack.c.b16 %v100, %v99
  %v104 = vpack.c.b16 %v102, %v101
  %vm107 = vcmask 261120
  %v109 = vsel %vm107, %v83, 0
  %111 = vmatprep.subr.bf16.mxu0 0
  %112 = vmatpush1.bf16.msra.mxu0 %v103
  %113 = vmatprep.subr.bf16.mxu0 0
  %114 = vmatpush1.bf16.msra.mxu0 %v104
  %115 = vmatprep.subr.bf16.mxu0 0
  %116 = vmatpush1.bf16.msra.mxu0 0
  %117 = vmatprep.subr.bf16.mxu0 0
  %118 = vmatpush1.bf16.msra.mxu0 0
  %119 = vmatprep.subr.bf16.mxu0 0
  %120 = vmatpush1.bf16.msra.mxu0 0
  %121 = vmatprep.subr.bf16.mxu0 0
  %122 = vmatpush1.bf16.msra.mxu0 0
  %123 = vmatprep.subr.bf16.mxu0 0
  %124 = vmatpush1.bf16.msra.mxu0 0
  %125 = vmatprep.subr.bf16.mxu0 0
  %126 = vmatpush1.bf16.msra.mxu0 0
  %127 = vmatprep.subr.bf16.mxu0 0
  %128 = vmatpush1.bf16.msra.mxu0 0
  %129 = vmatprep.subr.bf16.mxu0 0
  %130 = vmatpush1.bf16.msra.mxu0 0
  %131 = vmatprep.subr.bf16.mxu0 0
  %132 = vmatpush1.bf16.msra.mxu0 0
  %133 = vmatprep.subr.bf16.mxu0 0
  %134 = vmatpush1.bf16.msra.mxu0 0
  %135 = vmatprep.subr.bf16.mxu0 0
  %136 = vmatpush1.bf16.msra.mxu0 0
  %137 = vmatprep.subr.bf16.mxu0 0
  %138 = vmatpush1.bf16.msra.mxu0 0
  %139 = vmatprep.subr.bf16.mxu0 0
  %140 = vmatpush1.bf16.msra.mxu0 0
  %141 = vmatprep.subr.bf16.mxu0 0
  %142 = vmatpush1.bf16.msra.mxu0 0
  %143 = vmatprep.mubr.bf16.mxu0 0
  %144 = vmatmul.mubr.bf16.gmra.mrb[0].mxu0 %v109
  %v145 = vpop.f32.mrb[0].mxu0
  %v146 = vadd.f32 %v93, %v145
  %v147 = vpop.f32.mrb[0].mxu0
  %v148 = vpop.f32.mrb[0].mxu0
  %v149 = vadd.f32 %v93, %v148
  %v150 = vpop.f32.mrb[0].mxu0
  %151 = vdwg.mxu0
  %v152 = vmax.f32 %v146, 0.0
  %v153 = vmax.f32 %v149, 0.0
  %v154 = vpack.c.bf16 %v153, %v152
  %v155 = vld [vmem:[#allocation3] sm:$0xff]
  %v156 = vld [vmem:[#allocation3 + $0x8] sm:$0xff]
  %v157 = vld [vmem:[%s5] sm:$0xf]
  %v158 = vld [vmem:[%s5 + $0x4] sm:$0xf]
  %v159 = vld [vmem:[%s5 + $0x8] sm:$0xf]
  %v160 = vld [vmem:[%s5 + $0xc] sm:$0xf]
  %v161 = vld [vmem:[%s5 + $0x10] sm:$0xf]
  %v162 = vld [vmem:[%s5 + $0x14] sm:$0xf]
  %v163 = vld [vmem:[%s5 + $0x18] sm:$0xf]
  %v164 = vld [vmem:[%s5 + $0x1c] sm:$0xf]
  %v173 = vunpack.c.l.b16 %v157
  %v174 = vunpack.c.l.b16 %v158
  %v175 = vunpack.c.l.b16 %v159
  %v176 = vunpack.c.l.b16 %v160
  %v177 = vunpack.c.l.b16 %v161
  %v178 = vunpack.c.l.b16 %v162
  %v179 = vunpack.c.l.b16 %v163
  %v180 = vunpack.c.l.b16 %v164
  %v181 = vpack.c.b16 %v174, %v173
  %v182 = vpack.c.b16 %v176, %v175
  %v183 = vpack.c.b16 %v178, %v177
  %v184 = vpack.c.b16 %v180, %v179
  %vm189 = vcmask 523264
  %v191 = vsel %vm189, %v154, 0
  %193 = vmatprep.subr.bf16.mxu0 0
  %194 = vmatpush1.bf16.msra.mxu0 %v181
  %195 = vmatprep.subr.bf16.mxu0 0
  %196 = vmatpush1.bf16.msra.mxu0 %v182
  %197 = vmatprep.subr.bf16.mxu0 0
  %198 = vmatpush1.bf16.msra.mxu0 %v183
  %199 = vmatprep.subr.bf16.mxu0 0
  %200 = vmatpush1.bf16.msra.mxu0 %v184
  %201 = vmatprep.subr.bf16.mxu0 0
  %202 = vmatpush1.bf16.msra.mxu0 0
  %203 = vmatprep.subr.bf16.mxu0 0
  %204 = vmatpush1.bf16.msra.mxu0 0
  %205 = vmatprep.subr.bf16.mxu0 0
  %206 = vmatpush1.bf16.msra.mxu0 0
  %207 = vmatprep.subr.bf16.mxu0 0
  %208 = vmatpush1.bf16.msra.mxu0 0
  %209 = vmatprep.subr.bf16.mxu0 0
  %210 = vmatpush1.bf16.msra.mxu0 0
  %211 = vmatprep.subr.bf16.mxu0 0
  %212 = vmatpush1.bf16.msra.mxu0 0
  %213 = vmatprep.subr.bf16.mxu0 0
  %214 = vmatpush1.bf16.msra.mxu0 0
  %215 = vmatprep.subr.bf16.mxu0 0
  %216 = vmatpush1.bf16.msra.mxu0 0
  %217 = vmatprep.subr.bf16.mxu0 0
  %218 = vmatpush1.bf16.msra.mxu0 0
  %219 = vmatprep.subr.bf16.mxu0 0
  %220 = vmatpush1.bf16.msra.mxu0 0
  %221 = vmatprep.subr.bf16.mxu0 0
  %222 = vmatpush1.bf16.msra.mxu0 0
  %223 = vmatprep.subr.bf16.mxu0 0
  %224 = vmatpush1.bf16.msra.mxu0 0
  %225 = vmatprep.mubr.bf16.mxu0 0
  %226 = vmatmul.mubr.bf16.gmra.mrb[0].mxu0 %v191
  %v227 = vpop.f32.mrb[0].mxu0
  %v228 = vadd.f32 0.0, %v227
  %v229 = vpop.f32.mrb[0].mxu0
  %v230 = vpop.f32.mrb[0].mxu0
  %v231 = vadd.f32 0.0, %v230
  %v232 = vpop.f32.mrb[0].mxu0
  %233 = vdwg.mxu0
  %v234 = vadd.f32 %v155, %v228
  %v235 = vadd.f32 %v156, %v231
  %236 = vst.msk [vmem:[#allocation3] sm:$0xff] %vm107, %v234
  %237 = vst.msk [vmem:[#allocation3 + $0x8] sm:$0xff] %vm107, %v235
  // Predicated region
  $region34: #{decoder_forward.24} parent=0 // pred_check
    %p238 = pneg %p27
  $region35: #{decoder_forward.24} parent=0 // pred_check_branch
    %240 = sbr.rel (%p238) target = $region37
  $region36: #{decoder_forward.24} parent=0 // pred_region
    %v241 = vld [vmem:[#allocation3] sm:$0xff]
    %v242 = vld [vmem:[#allocation3 + $0x8] sm:$0xff]
    %v243 = vld [vmem:[%s6] sm:$0x1]
    %v245 = vlaneseq
    %v246 = vshrl.u32 %v245, 7
    %v247 = vsub.s32 0, %v246
    %v248 = vrot.slane %v243, %v247
    %v250 = vadd.f32 %v241, %v248
    %v251 = vadd.f32 %v242, %v248
    %v252 = vld [vmem:[%s0] sm:$0xff]
    %v253 = vld [vmem:[%s0 + $0x8] sm:$0xff]
    %v254 = vadd.f32 %v250, %v252
    %v255 = vadd.f32 %v251, %v253
    %256 = vst.msk [vmem:[%s7] sm:$0xff] %vm107, %v254
    %257 = vst.msk [vmem:[%s7 + $0x8] sm:$0xff] %vm107, %v255
  $region37: #{decoder_forward.24} parent=0 // pred_fallthru
    _
  // Predicated region
  $region38: #{decoder_forward.24} parent=0 // pred_check
    _
  $region39: #{decoder_forward.24} parent=0 // pred_check_branch
    %259 = sbr.rel (0) target = $region41
  $region40: #{decoder_forward.24} parent=0 // pred_region
    _
  $region41: #{decoder_forward.24} parent=0 // pred_fallthru
    _
  // Predicated region
  $region42: #{decoder_forward.24} parent=0 // pred_check
    _
  $region43: #{decoder_forward.24} parent=0 // pred_check_branch
    %261 = sbr.rel (0) target = $region45
  $region44: #{decoder_forward.24} parent=0 // pred_region
    _
  $region45: #{decoder_forward.24} parent=0 // pred_fallthru
    _

// kernel: decoder_forward.33
$region0: #{decoder_forward.33}
  #allocation0 [shape = 'u32[]', space=smem, size = 0x4, offset = 0x4, fixed_abs, tag = 'smem constant byte address 0x4 - core index']
  #allocation1 [shape = 'u32[144,128]{1,0:T(1,128)}', space=vmem, size = 0x12000, scoped, tag = 'internal scratch']
  %s0 = inlined_call_operand.vmem [shape: f32[16,32], index: 0, kind: input, shape index: {}]
  %s1 = inlined_call_operand.vmem [shape: f32[1,32], index: 1, kind: input, shape index: {}]
  %s2 = inlined_call_operand.vmem [shape: f32[1,32], index: 2, kind: input, shape index: {}]
  %s3 = inlined_call_operand.hbm [shape: f32[16,32], index: 3, kind: output, shape index: {}]
  %s4 = sld [smem:[#allocation0]]
  $region22: #{decoder_forward.33} parent=0
    _
  %s6 = ssub.s32 1, %s4
  %s7 = scalar_select 0, %s6, %s4
  $region1: #{decoder_forward.33} parent=0
    #allocation2 [shape = 'u8[8192]{0}', space=vmem, size = 0x2000, scoped, tag = 'output window, operand 0, single buffered']
    #allocation3 [shape = 's32[1]{0}', space=sflag, size = 0x4, scoped, tag = 'scoped memory for decoder_forward.33']
    %8 = vsyncpa [#allocation3], 0
    // Predicated region
    $region2: #{decoder_forward.33} parent=1 // pred_check
      _
    $region3: #{decoder_forward.33} parent=1 // pred_check_branch
      %10 = sbr.rel (0) target = $region5
    $region4: #{decoder_forward.33} parent=1 // pred_region
      _
    $region5: #{decoder_forward.33} parent=1 // pred_fallthru
      _
    // Predicated region
    $region6: #{decoder_forward.33} parent=1 // pred_check
      _
    $region7: #{decoder_forward.33} parent=1 // pred_check_branch
      %12 = sbr.rel (0) target = $region9
    $region8: #{decoder_forward.33} parent=1 // pred_region
      _
    $region9: #{decoder_forward.33} parent=1 // pred_fallthru
      _
    // Predicated region
    $region10: #{decoder_forward.33} parent=1 // pred_check
      _
    $region11: #{decoder_forward.33} parent=1 // pred_check_branch
      %14 = sbr.rel (0) target = $region13
    $region12: #{decoder_forward.33} parent=1 // pred_region
      _
    $region13: #{decoder_forward.33} parent=1 // pred_fallthru
      _
    %v15 = vld [vmem:[%s0] sm:$0xff]
    %v16 = vld [vmem:[%s0 + $0x8] sm:$0xff]
    %v17 = vld [vmem:[%s1] sm:$0x1]
    %v18 = vld [vmem:[%s2] sm:$0x1]
    %vm19 = vcmask 261120
    %v20 = vsel %vm19, %v15, 0.0
    %21 = vadd.xlane.f32.xlu0 %v20
    %v22 = vpop.xlane.xlu0 %21
    %v23 = vsel %vm19, %v16, 0.0
    %24 = vadd.xlane.f32.xlu0 %v23
    %v25 = vpop.xlane.xlu0 %24
    %v26 = vrcp.pop 32.0
    %v27 = vmul.f32 %v22, %v26
    %v28 = vmul.f32 %v25, %v26
    %v29 = vsub.f32 %v15, %v27
    %v30 = vsub.f32 %v16, %v28
    %v31 = vmul.f32 %v29, %v29
    %v32 = vmul.f32 %v30, %v30
    %v33 = vsel %vm19, %v31, 0.0
    %34 = vadd.xlane.f32.xlu0 %v33
    %v35 = vpop.xlane.xlu0 %34
    %v36 = vsel %vm19, %v32, 0.0
    %37 = vadd.xlane.f32.xlu0 %v36
    %v38 = vpop.xlane.xlu0 %37
    %v39 = vmul.f32 %v35, %v26
    %v40 = vmul.f32 %v38, %v26
    %v41 = vadd.f32 %v39, 1e-06
    %v42 = vadd.f32 %v40, 1e-06
    %v43 = vrsqrt.pop %v41
    %v44 = vrsqrt.pop %v42
    %v45 = vmul.f32 %v29, %v43
    %v46 = vmul.f32 %v30, %v44
    %v48 = vlaneseq
    %v49 = vshrl.u32 %v48, 7
    %v50 = vsub.s32 0, %v49
    %v51 = vrot.slane %v17, %v50
    %v53 = vmul.f32 %v45, %v51
    %v54 = vmul.f32 %v46, %v51
    %v56 = vlaneseq
    %v57 = vshrl.u32 %v56, 7
    %v58 = vsub.s32 0, %v57
    %v59 = vrot.slane %v18, %v58
    %v61 = vadd.f32 %v53, %v59
    %v62 = vadd.f32 %v54, %v59
    %63 = vst.msk [vmem:[#allocation2] sm:$0xff] %vm19, %v61
    %64 = vst.msk [vmem:[#allocation2 + $0x8] sm:$0xff] %vm19, %v62
    // Predicated region
    $region14: #{decoder_forward.33} parent=1 // pred_check
      _
    $region15: #{decoder_forward.33} parent=1 // pred_check_branch
      %66 = sbr.rel (0) target = $region17
    $region16: #{decoder_forward.33} parent=1 // pred_region
      %s68 = ssub.s32 256, 256
      %69 = vsyncadd [#allocation3], %s68
      %s70 = sshll.u32 [#allocation2], 4
      %s71 = int_to_ptr.vmem [resolvable:$true] %s70
      %76 = dma.vmem_to_hbm [thread:$0]  %s71, 256, %s3, [#allocation3], 128, 128, 8
    $region17: #{decoder_forward.33} parent=1 // pred_fallthru
      _
    // Predicated region
    $region18: #{decoder_forward.33} parent=1 // pred_check
      _
    $region19: #{decoder_forward.33} parent=1 // pred_check_branch
      %78 = sbr.rel (0) target = $region21
    $region20: #{decoder_forward.33} parent=1 // pred_region
      %79 = dma.done [#allocation3], 256
    $region21: #{decoder_forward.33} parent=1 // pred_fallthru
      _
    %80 = vsyncpa [#allocation3], 1

</llo_original>
